<compile_context>
chip_gen: v5e
topology: v5e:2x2
jax: 0.10.0
libtpu: 0.0.40
codegen_flags: <defaults>
</compile_context>

<pallas_src>
import jax
import jax.numpy as jnp
from jax import lax
from jax.experimental import pallas as pl
from jax.experimental.pallas import tpu as pltpu

# ----- small synthetic configuration (tiny CLIP ViT) --------------------------
B, C, IMG, PATCH = 2, 3, 16, 8           # batch, channels, image size, patch size
D, HEADS, MLP, PROJ = 32, 4, 128, 16     # width, heads, mlp width, output proj dim
LAYERS = 12                              # module builds 12 resblocks
HP = IMG // PATCH
NPATCH = HP * HP
S = NPATCH + 1                           # +1 class token
HEAD_DIM = D // HEADS
CPP = C * PATCH * PATCH                  # patchified feature size
EPS = 1e-5                               # torch.nn.LayerNorm default
ATTN_SCALE = 1.0 / float(HEAD_DIM) ** 0.5


# ----------------------------- fused Pallas kernel ----------------------------
def _ln(x, g, b):
    """Row-wise LayerNorm over the last dim (fp32 statistics)."""
    mu = jnp.mean(x, axis=-1, keepdims=True)
    xc = x - mu
    var = jnp.mean(xc * xc, axis=-1, keepdims=True)
    return xc * lax.rsqrt(var + EPS) * g + b


def _encoder_kernel(
    # constant (DMA'd once) inputs
    patches_ref, conv_w_ref, cls_ref, pos_ref, lnpre_g_ref, lnpre_b_ref,
    # per-layer (streamed over the grid) inputs
    ln1g_ref, ln1b_ref, wqkv_ref, bqkv_ref, wo_ref, bo_ref,
    ln2g_ref, ln2b_ref, w1_ref, b1_ref, w2_ref, b2_ref,
    # constant tail inputs
    lnpost_g_ref, lnpost_b_ref, proj_ref,
    # output + resident activation scratch
    out_ref, h_ref):
    layer = pl.program_id(0)

    # ---- layer 0 only: conv1 patch embed (bias-free), cls token, pos, ln_pre --
    @pl.when(layer == 0)
    def _embed():
        emb = jnp.dot(patches_ref[...], conv_w_ref[...],
                      preferred_element_type=jnp.float32)            # (B*NPATCH, D)
        pos = pos_ref[...]                                           # (S, D)
        cls_tok = cls_ref[...] + pos[0:1, :]                         # (1, D)
        for b in range(B):
            h_ref[b, pl.ds(0, 1), :] = cls_tok
            h_ref[b, pl.ds(1, NPATCH), :] = (
                emb[b * NPATCH:(b + 1) * NPATCH, :] + pos[1:S, :])
        # patch_dropout (prob=0) is the identity at inference; nothing to do.
        for b in range(B):
            h_ref[b] = _ln(h_ref[b], lnpre_g_ref[...], lnpre_b_ref[...])

    # ---- current layer's weights (stacked-layer axis squeezed off) ------------
    ln1g, ln1b = ln1g_ref[0], ln1b_ref[0]
    wqkv, bqkv = wqkv_ref[0], bqkv_ref[0]
    wo, bo = wo_ref[0], bo_ref[0]
    ln2g, ln2b = ln2g_ref[0], ln2b_ref[0]
    w1, b1 = w1_ref[0], b1_ref[0]
    w2, b2 = w2_ref[0], b2_ref[0]

    finals = []
    for b in range(B):                     # static batch loop (no grid over B)
        x = h_ref[b]                                               # (S, D)

        # ---- LN1 + multi-head self attention ----
        hn = _ln(x, ln1g, ln1b)
        qkv = jnp.dot(hn, wqkv, preferred_element_type=jnp.float32) + bqkv  # (S, 3D)
        ctx_parts = []
        for hh in range(HEADS):            # static head loop
            lo = hh * HEAD_DIM
            q = qkv[:, lo:lo + HEAD_DIM]
            k = qkv[:, D + lo:D + lo + HEAD_DIM]
            v = qkv[:, 2 * D + lo:2 * D + lo + HEAD_DIM]
            s = lax.dot_general(q, k, (((1,), (1,)), ((), ())),
                                preferred_element_type=jnp.float32) * ATTN_SCALE
            s = s - jnp.max(s, axis=-1, keepdims=True)
            p = jnp.exp(s)
            # softmax denominator on the EUP (approx reciprocal), not a VPU divide
            p = p * pl.reciprocal(jnp.sum(p, axis=-1, keepdims=True), approx=True)
            ctx_parts.append(jnp.dot(p, v, preferred_element_type=jnp.float32))
        ctx = jnp.concatenate(ctx_parts, axis=-1)                  # (S, D)
        # concat-then-project: ONE (S,D)@(D,D) output projection for all heads
        x = x + jnp.dot(ctx, wo, preferred_element_type=jnp.float32) + bo

        # ---- LN2 + MLP (QuickGELU, OpenAI CLIP default) ----
        hn2 = _ln(x, ln2g, ln2b)
        hm = jnp.dot(hn2, w1, preferred_element_type=jnp.float32) + b1
        hm = hm * jax.nn.sigmoid(1.702 * hm)                       # QuickGELU
        x = x + jnp.dot(hm, w2, preferred_element_type=jnp.float32) + b2

        h_ref[b] = x
        finals.append(x)

    # ---- last layer only: ln_post, CLS pool, bias-free projection -------------
    # LayerNorm is row-wise, so ln_post(h)[0] == ln_post(h[0]); only the pooled
    # CLS row is needed for the module's forward() output.
    @pl.when(layer == LAYERS - 1)
    def _head():
        gp = lnpost_g_ref[...]
        bp = lnpost_b_ref[...]
        for b in range(B):
            cls_out = _ln(finals[b][0:1, :], gp, bp)               # (1, D)
            out_ref[pl.ds(b, 1), :] = jnp.dot(
                cls_out, proj_ref[...], preferred_element_type=jnp.float32)


# ------------------------------ forward wrapper --------------------------------
def encode_image(images, params):
    # conv1 has stride == kernel == PATCH and no bias: patchify (pure layout op,
    # done by XLA) then a single bias-free matmul inside the fused kernel.
    x = images.reshape(B, C, HP, PATCH, HP, PATCH)
    patches = x.transpose(0, 2, 4, 1, 3, 5).reshape(B * NPATCH, CPP)

    def rep(a):                      # fetched once: constant block index
        nd = a.ndim
        return pl.BlockSpec(a.shape, lambda l, _nd=nd: (0,) * _nd)

    def per_layer(a):                # streamed: one layer slice per grid step
        nd = a.ndim
        return pl.BlockSpec((1,) + a.shape[1:],
                            lambda l, _nd=nd: (l,) + (0,) * (_nd - 1))

    rep_args = (patches, params["conv_w"], params["class_emb"], params["pos_emb"],
                params["ln_pre_g"], params["ln_pre_b"])
    layer_args = (params["ln1_g"], params["ln1_b"],
                  params["w_qkv"], params["b_qkv"],
                  params["w_out"], params["b_out"],
                  params["ln2_g"], params["ln2_b"],
                  params["w_fc1"], params["b_fc1"],
                  params["w_fc2"], params["b_fc2"])
    tail_args = (params["ln_post_g"], params["ln_post_b"], params["proj"])

    in_specs = ([rep(a) for a in rep_args]
                + [per_layer(a) for a in layer_args]
                + [rep(a) for a in tail_args])

    grid_spec = pltpu.PrefetchScalarGridSpec(
        num_scalar_prefetch=0,
        grid=(LAYERS,),
        in_specs=in_specs,
        out_specs=pl.BlockSpec((B, PROJ), lambda l: (0, 0)),
        scratch_shapes=[pltpu.VMEM((B, S, D), jnp.float32)],   # resident h
    )
    return pl.pallas_call(
        _encoder_kernel,
        out_shape=jax.ShapeDtypeStruct((B, PROJ), jnp.float32),
        grid_spec=grid_spec,
        compiler_params=pltpu.CompilerParams(
            dimension_semantics=("arbitrary",)),               # sequential over depth
    )(*rep_args, *layer_args, *tail_args)


# ------------------------------ parameter init ---------------------------------
def init_params(key):
    def nrm(k, shape, scale=0.02):
        return scale * jax.random.normal(k, shape, dtype=jnp.float32)

    keys = iter(jax.random.split(key, 16))
    return {
        "conv_w": nrm(next(keys), (CPP, D)),
        "class_emb": nrm(next(keys), (1, D)),
        "pos_emb": nrm(next(keys), (S, D)),
        "ln_pre_g": jnp.ones((1, D), jnp.float32),
        "ln_pre_b": jnp.zeros((1, D), jnp.float32),
        # per-layer weights stacked over the LAYERS axis
        "ln1_g": jnp.ones((LAYERS, 1, D), jnp.float32),
        "ln1_b": jnp.zeros((LAYERS, 1, D), jnp.float32),
        "w_qkv": nrm(next(keys), (LAYERS, D, 3 * D)),
        "b_qkv": nrm(next(keys), (LAYERS, 1, 3 * D)),
        "w_out": nrm(next(keys), (LAYERS, D, D)),
        "b_out": nrm(next(keys), (LAYERS, 1, D)),
        "ln2_g": jnp.ones((LAYERS, 1, D), jnp.float32),
        "ln2_b": jnp.zeros((LAYERS, 1, D), jnp.float32),
        "w_fc1": nrm(next(keys), (LAYERS, D, MLP)),
        "b_fc1": nrm(next(keys), (LAYERS, 1, MLP)),
        "w_fc2": nrm(next(keys), (LAYERS, MLP, D)),
        "b_fc2": nrm(next(keys), (LAYERS, 1, D)),
        "ln_post_g": jnp.ones((1, D), jnp.float32),
        "ln_post_b": jnp.zeros((1, D), jnp.float32),
        "proj": nrm(next(keys), (D, PROJ)),
    }


if __name__ == "__main__":
    root = jax.random.PRNGKey(0)
    k_img, k_par = jax.random.split(root)
    images = jax.random.normal(k_img, (B, C, IMG, IMG), dtype=jnp.float32)
    params = init_params(k_par)

    # TODO(synk): open_clip pretrained-weight loading and train/val preprocess
    # transforms have no kernel equivalent; weights here are synthetic.
    pooled = jax.jit(encode_image)(images, params)
    pooled = jax.block_until_ready(pooled)

    assert pooled.shape == (B, PROJ)
    assert bool(jnp.all(jnp.isfinite(pooled)))
    print("KERNEL_OK")
</pallas_src>

<mosaic_0001>
module attributes {stable_mosaic.version = 11 : i64} {
  func.func @_encoder_kernel(%arg0: i32, %arg1: memref<8x192xf32, #tpu.memory_space<vmem>>, %arg2: memref<192x32xf32, #tpu.memory_space<vmem>>, %arg3: memref<1x32xf32, #tpu.memory_space<vmem>>, %arg4: memref<5x32xf32, #tpu.memory_space<vmem>>, %arg5: memref<1x32xf32, #tpu.memory_space<vmem>>, %arg6: memref<1x32xf32, #tpu.memory_space<vmem>>, %arg7: memref<1x1x32xf32, #tpu.memory_space<vmem>>, %arg8: memref<1x1x32xf32, #tpu.memory_space<vmem>>, %arg9: memref<1x32x96xf32, #tpu.memory_space<vmem>>, %arg10: memref<1x1x96xf32, #tpu.memory_space<vmem>>, %arg11: memref<1x32x32xf32, #tpu.memory_space<vmem>>, %arg12: memref<1x1x32xf32, #tpu.memory_space<vmem>>, %arg13: memref<1x1x32xf32, #tpu.memory_space<vmem>>, %arg14: memref<1x1x32xf32, #tpu.memory_space<vmem>>, %arg15: memref<1x32x128xf32, #tpu.memory_space<vmem>>, %arg16: memref<1x1x128xf32, #tpu.memory_space<vmem>>, %arg17: memref<1x128x32xf32, #tpu.memory_space<vmem>>, %arg18: memref<1x1x32xf32, #tpu.memory_space<vmem>>, %arg19: memref<1x32xf32, #tpu.memory_space<vmem>>, %arg20: memref<1x32xf32, #tpu.memory_space<vmem>>, %arg21: memref<32x16xf32, #tpu.memory_space<vmem>>, %arg22: memref<2x16xf32, #tpu.memory_space<vmem>>, %arg23: memref<2x5x32xf32, #tpu.memory_space<vmem>>) attributes {dimension_semantics = [#tpu.dimension_semantics<arbitrary>], iteration_bounds = array<i64: 12>, scalar_prefetch = 0 : i64, scratch_operands = 1 : i64, tpu.core_type = #tpu.core_type<tc>, window_params = [{pipeline_mode = #tpu.pipeline_mode<synchronous>, transform_indices = @transform_0, window_bounds = array<i64: 8, 192>}, {pipeline_mode = #tpu.pipeline_mode<synchronous>, transform_indices = @transform_1, window_bounds = array<i64: 192, 32>}, {pipeline_mode = #tpu.pipeline_mode<synchronous>, transform_indices = @transform_2, window_bounds = array<i64: 1, 32>}, {pipeline_mode = #tpu.pipeline_mode<synchronous>, transform_indices = @transform_3, window_bounds = array<i64: 5, 32>}, {pipeline_mode = #tpu.pipeline_mode<synchronous>, transform_indices = @transform_4, window_bounds = array<i64: 1, 32>}, {pipeline_mode = #tpu.pipeline_mode<synchronous>, transform_indices = @transform_5, window_bounds = array<i64: 1, 32>}, {transform_indices = @transform_6, window_bounds = array<i64: 1, 1, 32>}, {transform_indices = @transform_7, window_bounds = array<i64: 1, 1, 32>}, {transform_indices = @transform_8, window_bounds = array<i64: 1, 32, 96>}, {transform_indices = @transform_9, window_bounds = array<i64: 1, 1, 96>}, {transform_indices = @transform_10, window_bounds = array<i64: 1, 32, 32>}, {transform_indices = @transform_11, window_bounds = array<i64: 1, 1, 32>}, {transform_indices = @transform_12, window_bounds = array<i64: 1, 1, 32>}, {transform_indices = @transform_13, window_bounds = array<i64: 1, 1, 32>}, {transform_indices = @transform_14, window_bounds = array<i64: 1, 32, 128>}, {transform_indices = @transform_15, window_bounds = array<i64: 1, 1, 128>}, {transform_indices = @transform_16, window_bounds = array<i64: 1, 128, 32>}, {transform_indices = @transform_17, window_bounds = array<i64: 1, 1, 32>}, {pipeline_mode = #tpu.pipeline_mode<synchronous>, transform_indices = @transform_18, window_bounds = array<i64: 1, 32>}, {pipeline_mode = #tpu.pipeline_mode<synchronous>, transform_indices = @transform_19, window_bounds = array<i64: 1, 32>}, {pipeline_mode = #tpu.pipeline_mode<synchronous>, transform_indices = @transform_20, window_bounds = array<i64: 32, 16>}, {pipeline_mode = #tpu.pipeline_mode<synchronous>, transform_indices = @transform_21, window_bounds = array<i64: 2, 16>}]} {
    %c0_i32 = arith.constant 0 : i32
    %0 = arith.cmpi eq, %arg0, %c0_i32 : i32
    %1 = arith.extui %0 : i1 to i32
    %c0_i32_0 = arith.constant 0 : i32
    %2 = arith.cmpi ne, %1, %c0_i32_0 : i32
    scf.if %2 {
      %c0_119 = arith.constant 0 : index
      %c0_120 = arith.constant 0 : index
      %302 = vector.load %arg1[%c0_119, %c0_120] : memref<8x192xf32, #tpu.memory_space<vmem>>, vector<8x192xf32>
      %c0_121 = arith.constant 0 : index
      %c0_122 = arith.constant 0 : index
      %303 = vector.load %arg2[%c0_121, %c0_122] : memref<192x32xf32, #tpu.memory_space<vmem>>, vector<192x32xf32>
      %cst_123 = arith.constant dense<0.000000e+00> : vector<8x32xf32>
      %304 = tpu.matmul %302, %303, %cst_123 {dimension_numbers = #tpu.dot_dimension_numbers<[1], [0], [0], [1], [0, 0, 1, 1], [], []>} : vector<8x192xf32>, vector<192x32xf32>, vector<8x32xf32> -> vector<8x32xf32>
      %c0_124 = arith.constant 0 : index
      %c0_125 = arith.constant 0 : index
      %305 = vector.load %arg4[%c0_124, %c0_125] : memref<5x32xf32, #tpu.memory_space<vmem>>, vector<5x32xf32>
      %c0_126 = arith.constant 0 : index
      %c0_127 = arith.constant 0 : index
      %306 = vector.load %arg3[%c0_126, %c0_127] : memref<1x32xf32, #tpu.memory_space<vmem>>, vector<1x32xf32>
      %307 = vector.extract_strided_slice %305 {offsets = [0, 0], sizes = [1, 32], strides = [1, 1]} : vector<5x32xf32> to vector<1x32xf32>
      %308 = arith.addf %306, %307 : vector<1x32xf32>
      %c0_128 = arith.constant 0 : index
      %c0_129 = arith.constant 0 : index
      %c0_130 = arith.constant 0 : index
      %309 = vector.load %arg23[%c0_128, %c0_129, %c0_130] : memref<2x5x32xf32, #tpu.memory_space<vmem>>, vector<1x1x32xf32>
      %310 = vector.shape_cast %309 : vector<1x1x32xf32> to vector<1x32xf32>
      %311 = vector.shape_cast %308 : vector<1x32xf32> to vector<1x1x32xf32>
      tpu.vector_store %arg23[%c0_128, %c0_129, %c0_130], %311 {strides = array<i32>} : memref<2x5x32xf32, #tpu.memory_space<vmem>>, vector<1x1x32xf32>,
      %312 = vector.extract_strided_slice %304 {offsets = [0, 0], sizes = [4, 32], strides = [1, 1]} : vector<8x32xf32> to vector<4x32xf32>
      %313 = vector.extract_strided_slice %305 {offsets = [1, 0], sizes = [4, 32], strides = [1, 1]} : vector<5x32xf32> to vector<4x32xf32>
      %314 = arith.addf %312, %313 : vector<4x32xf32>
      %c0_131 = arith.constant 0 : index
      %c1_132 = arith.constant 1 : index
      %c0_133 = arith.constant 0 : index
      %315 = vector.load %arg23[%c0_131, %c1_132, %c0_133] : memref<2x5x32xf32, #tpu.memory_space<vmem>>, vector<1x4x32xf32>
      %316 = vector.shape_cast %315 : vector<1x4x32xf32> to vector<4x32xf32>
      %317 = vector.shape_cast %314 : vector<4x32xf32> to vector<1x4x32xf32>
      tpu.vector_store %arg23[%c0_131, %c1_132, %c0_133], %317 {strides = array<i32>} : memref<2x5x32xf32, #tpu.memory_space<vmem>>, vector<1x4x32xf32>,
      %c1_134 = arith.constant 1 : index
      %c0_135 = arith.constant 0 : index
      %c0_136 = arith.constant 0 : index
      %318 = vector.load %arg23[%c1_134, %c0_135, %c0_136] : memref<2x5x32xf32, #tpu.memory_space<vmem>>, vector<1x1x32xf32>
      %319 = vector.shape_cast %318 : vector<1x1x32xf32> to vector<1x32xf32>
      %320 = vector.shape_cast %308 : vector<1x32xf32> to vector<1x1x32xf32>
      tpu.vector_store %arg23[%c1_134, %c0_135, %c0_136], %320 {strides = array<i32>} : memref<2x5x32xf32, #tpu.memory_space<vmem>>, vector<1x1x32xf32>,
      %321 = vector.extract_strided_slice %304 {offsets = [4, 0], sizes = [4, 32], strides = [1, 1]} : vector<8x32xf32> to vector<4x32xf32>
      %322 = vector.extract_strided_slice %305 {offsets = [1, 0], sizes = [4, 32], strides = [1, 1]} : vector<5x32xf32> to vector<4x32xf32>
      %323 = arith.addf %321, %322 : vector<4x32xf32>
      %c1_137 = arith.constant 1 : index
      %c1_138 = arith.constant 1 : index
      %c0_139 = arith.constant 0 : index
      %324 = vector.load %arg23[%c1_137, %c1_138, %c0_139] : memref<2x5x32xf32, #tpu.memory_space<vmem>>, vector<1x4x32xf32>
      %325 = vector.shape_cast %324 : vector<1x4x32xf32> to vector<4x32xf32>
      %326 = vector.shape_cast %323 : vector<4x32xf32> to vector<1x4x32xf32>
      tpu.vector_store %arg23[%c1_137, %c1_138, %c0_139], %326 {strides = array<i32>} : memref<2x5x32xf32, #tpu.memory_space<vmem>>, vector<1x4x32xf32>,
      %c0_140 = arith.constant 0 : index
      %c0_141 = arith.constant 0 : index
      %c0_142 = arith.constant 0 : index
      %327 = vector.load %arg23[%c0_140, %c0_141, %c0_142] : memref<2x5x32xf32, #tpu.memory_space<vmem>>, vector<1x5x32xf32>
      %328 = vector.shape_cast %327 : vector<1x5x32xf32> to vector<5x32xf32>
      %c0_143 = arith.constant 0 : index
      %c0_144 = arith.constant 0 : index
      %329 = vector.load %arg5[%c0_143, %c0_144] : memref<1x32xf32, #tpu.memory_space<vmem>>, vector<1x32xf32>
      %c0_145 = arith.constant 0 : index
      %c0_146 = arith.constant 0 : index
      %330 = vector.load %arg6[%c0_145, %c0_146] : memref<1x32xf32, #tpu.memory_space<vmem>>, vector<1x32xf32>
      %cst_147 = arith.constant dense<0.000000e+00> : vector<5xf32>
      %331 = vector.multi_reduction <add>, %328, %cst_147 [1] : vector<5x32xf32> to vector<5xf32>
      %332 = vector.shape_cast %331 : vector<5xf32> to vector<5x1xf32>
      %cst_148 = arith.constant 3.200000e+01 : f32
      %333 = vector.broadcast %cst_148 : f32 to vector<5x1xf32>
      %334 = arith.divf %332, %333 : vector<5x1xf32>
      %335 = vector.broadcast %334 : vector<5x1xf32> to vector<5x32xf32>
      %336 = arith.subf %328, %335 : vector<5x32xf32>
      %337 = arith.mulf %336, %336 : vector<5x32xf32>
      %cst_149 = arith.constant dense<0.000000e+00> : vector<5xf32>
      %338 = vector.multi_reduction <add>, %337, %cst_149 [1] : vector<5x32xf32> to vector<5xf32>
      %339 = vector.shape_cast %338 : vector<5xf32> to vector<5x1xf32>
      %cst_150 = arith.constant 3.200000e+01 : f32
      %340 = vector.broadcast %cst_150 : f32 to vector<5x1xf32>
      %341 = arith.divf %339, %340 : vector<5x1xf32>
      %cst_151 = arith.constant 9.99999974E-6 : f32
      %342 = vector.broadcast %cst_151 : f32 to vector<5x1xf32>
      %343 = arith.addf %341, %342 : vector<5x1xf32>
      %344 = math.rsqrt %343 : vector<5x1xf32>
      %345 = vector.broadcast %344 : vector<5x1xf32> to vector<5x32xf32>
      %346 = arith.mulf %336, %345 : vector<5x32xf32>
      %347 = vector.broadcast %329 : vector<1x32xf32> to vector<5x32xf32>
      %348 = arith.mulf %346, %347 : vector<5x32xf32>
      %349 = vector.broadcast %330 : vector<1x32xf32> to vector<5x32xf32>
      %350 = arith.addf %348, %349 : vector<5x32xf32>
      %c0_152 = arith.constant 0 : index
      %c0_153 = arith.constant 0 : index
      %c0_154 = arith.constant 0 : index
      %351 = vector.load %arg23[%c0_152, %c0_153, %c0_154] : memref<2x5x32xf32, #tpu.memory_space<vmem>>, vector<1x5x32xf32>
      %352 = vector.shape_cast %351 : vector<1x5x32xf32> to vector<5x32xf32>
      %353 = vector.shape_cast %350 : vector<5x32xf32> to vector<1x5x32xf32>
      tpu.vector_store %arg23[%c0_152, %c0_153, %c0_154], %353 {strides = array<i32>} : memref<2x5x32xf32, #tpu.memory_space<vmem>>, vector<1x5x32xf32>,
      %c1_155 = arith.constant 1 : index
      %c0_156 = arith.constant 0 : index
      %c0_157 = arith.constant 0 : index
      %354 = vector.load %arg23[%c1_155, %c0_156, %c0_157] : memref<2x5x32xf32, #tpu.memory_space<vmem>>, vector<1x5x32xf32>
      %355 = vector.shape_cast %354 : vector<1x5x32xf32> to vector<5x32xf32>
      %c0_158 = arith.constant 0 : index
      %c0_159 = arith.constant 0 : index
      %356 = vector.load %arg5[%c0_158, %c0_159] : memref<1x32xf32, #tpu.memory_space<vmem>>, vector<1x32xf32>
      %c0_160 = arith.constant 0 : index
      %c0_161 = arith.constant 0 : index
      %357 = vector.load %arg6[%c0_160, %c0_161] : memref<1x32xf32, #tpu.memory_space<vmem>>, vector<1x32xf32>
      %cst_162 = arith.constant dense<0.000000e+00> : vector<5xf32>
      %358 = vector.multi_reduction <add>, %355, %cst_162 [1] : vector<5x32xf32> to vector<5xf32>
      %359 = vector.shape_cast %358 : vector<5xf32> to vector<5x1xf32>
      %cst_163 = arith.constant 3.200000e+01 : f32
      %360 = vector.broadcast %cst_163 : f32 to vector<5x1xf32>
      %361 = arith.divf %359, %360 : vector<5x1xf32>
      %362 = vector.broadcast %361 : vector<5x1xf32> to vector<5x32xf32>
      %363 = arith.subf %355, %362 : vector<5x32xf32>
      %364 = arith.mulf %363, %363 : vector<5x32xf32>
      %cst_164 = arith.constant dense<0.000000e+00> : vector<5xf32>
      %365 = vector.multi_reduction <add>, %364, %cst_164 [1] : vector<5x32xf32> to vector<5xf32>
      %366 = vector.shape_cast %365 : vector<5xf32> to vector<5x1xf32>
      %cst_165 = arith.constant 3.200000e+01 : f32
      %367 = vector.broadcast %cst_165 : f32 to vector<5x1xf32>
      %368 = arith.divf %366, %367 : vector<5x1xf32>
      %cst_166 = arith.constant 9.99999974E-6 : f32
      %369 = vector.broadcast %cst_166 : f32 to vector<5x1xf32>
      %370 = arith.addf %368, %369 : vector<5x1xf32>
      %371 = math.rsqrt %370 : vector<5x1xf32>
      %372 = vector.broadcast %371 : vector<5x1xf32> to vector<5x32xf32>
      %373 = arith.mulf %363, %372 : vector<5x32xf32>
      %374 = vector.broadcast %356 : vector<1x32xf32> to vector<5x32xf32>
      %375 = arith.mulf %373, %374 : vector<5x32xf32>
      %376 = vector.broadcast %357 : vector<1x32xf32> to vector<5x32xf32>
      %377 = arith.addf %375, %376 : vector<5x32xf32>
      %c1_167 = arith.constant 1 : index
      %c0_168 = arith.constant 0 : index
      %c0_169 = arith.constant 0 : index
      %378 = vector.load %arg23[%c1_167, %c0_168, %c0_169] : memref<2x5x32xf32, #tpu.memory_space<vmem>>, vector<1x5x32xf32>
      %379 = vector.shape_cast %378 : vector<1x5x32xf32> to vector<5x32xf32>
      %380 = vector.shape_cast %377 : vector<5x32xf32> to vector<1x5x32xf32>
      tpu.vector_store %arg23[%c1_167, %c0_168, %c0_169], %380 {strides = array<i32>} : memref<2x5x32xf32, #tpu.memory_space<vmem>>, vector<1x5x32xf32>,
    } else {
    }
    %c0 = arith.constant 0 : index
    %c0_1 = arith.constant 0 : index
    %c0_2 = arith.constant 0 : index
    %3 = vector.load %arg7[%c0, %c0_1, %c0_2] : memref<1x1x32xf32, #tpu.memory_space<vmem>>, vector<1x1x32xf32>
    %4 = vector.shape_cast %3 : vector<1x1x32xf32> to vector<1x32xf32>
    %c0_3 = arith.constant 0 : index
    %c0_4 = arith.constant 0 : index
    %c0_5 = arith.constant 0 : index
    %5 = vector.load %arg8[%c0_3, %c0_4, %c0_5] : memref<1x1x32xf32, #tpu.memory_space<vmem>>, vector<1x1x32xf32>
    %6 = vector.shape_cast %5 : vector<1x1x32xf32> to vector<1x32xf32>
    %c0_6 = arith.constant 0 : index
    %c0_7 = arith.constant 0 : index
    %c0_8 = arith.constant 0 : index
    %7 = vector.load %arg9[%c0_6, %c0_7, %c0_8] : memref<1x32x96xf32, #tpu.memory_space<vmem>>, vector<1x32x96xf32>
    %8 = vector.shape_cast %7 : vector<1x32x96xf32> to vector<32x96xf32>
    %c0_9 = arith.constant 0 : index
    %c0_10 = arith.constant 0 : index
    %c0_11 = arith.constant 0 : index
    %9 = vector.load %arg10[%c0_9, %c0_10, %c0_11] : memref<1x1x96xf32, #tpu.memory_space<vmem>>, vector<1x1x96xf32>
    %10 = vector.shape_cast %9 : vector<1x1x96xf32> to vector<1x96xf32>
    %c0_12 = arith.constant 0 : index
    %c0_13 = arith.constant 0 : index
    %c0_14 = arith.constant 0 : index
    %11 = vector.load %arg11[%c0_12, %c0_13, %c0_14] : memref<1x32x32xf32, #tpu.memory_space<vmem>>, vector<1x32x32xf32>
    %12 = vector.shape_cast %11 : vector<1x32x32xf32> to vector<32x32xf32>
    %c0_15 = arith.constant 0 : index
    %c0_16 = arith.constant 0 : index
    %c0_17 = arith.constant 0 : index
    %13 = vector.load %arg12[%c0_15, %c0_16, %c0_17] : memref<1x1x32xf32, #tpu.memory_space<vmem>>, vector<1x1x32xf32>
    %14 = vector.shape_cast %13 : vector<1x1x32xf32> to vector<1x32xf32>
    %c0_18 = arith.constant 0 : index
    %c0_19 = arith.constant 0 : index
    %c0_20 = arith.constant 0 : index
    %15 = vector.load %arg13[%c0_18, %c0_19, %c0_20] : memref<1x1x32xf32, #tpu.memory_space<vmem>>, vector<1x1x32xf32>
    %16 = vector.shape_cast %15 : vector<1x1x32xf32> to vector<1x32xf32>
    %c0_21 = arith.constant 0 : index
    %c0_22 = arith.constant 0 : index
    %c0_23 = arith.constant 0 : index
    %17 = vector.load %arg14[%c0_21, %c0_22, %c0_23] : memref<1x1x32xf32, #tpu.memory_space<vmem>>, vector<1x1x32xf32>
    %18 = vector.shape_cast %17 : vector<1x1x32xf32> to vector<1x32xf32>
    %c0_24 = arith.constant 0 : index
    %c0_25 = arith.constant 0 : index
    %c0_26 = arith.constant 0 : index
    %19 = vector.load %arg15[%c0_24, %c0_25, %c0_26] : memref<1x32x128xf32, #tpu.memory_space<vmem>>, vector<1x32x128xf32>
    %20 = vector.shape_cast %19 : vector<1x32x128xf32> to vector<32x128xf32>
    %c0_27 = arith.constant 0 : index
    %c0_28 = arith.constant 0 : index
    %c0_29 = arith.constant 0 : index
    %21 = vector.load %arg16[%c0_27, %c0_28, %c0_29] : memref<1x1x128xf32, #tpu.memory_space<vmem>>, vector<1x1x128xf32>
    %22 = vector.shape_cast %21 : vector<1x1x128xf32> to vector<1x128xf32>
    %c0_30 = arith.constant 0 : index
    %c0_31 = arith.constant 0 : index
    %c0_32 = arith.constant 0 : index
    %23 = vector.load %arg17[%c0_30, %c0_31, %c0_32] : memref<1x128x32xf32, #tpu.memory_space<vmem>>, vector<1x128x32xf32>
    %24 = vector.shape_cast %23 : vector<1x128x32xf32> to vector<128x32xf32>
    %c0_33 = arith.constant 0 : index
    %c0_34 = arith.constant 0 : index
    %c0_35 = arith.constant 0 : index
    %25 = vector.load %arg18[%c0_33, %c0_34, %c0_35] : memref<1x1x32xf32, #tpu.memory_space<vmem>>, vector<1x1x32xf32>
    %26 = vector.shape_cast %25 : vector<1x1x32xf32> to vector<1x32xf32>
    %c0_36 = arith.constant 0 : index
    %c0_37 = arith.constant 0 : index
    %c0_38 = arith.constant 0 : index
    %27 = vector.load %arg23[%c0_36, %c0_37, %c0_38] : memref<2x5x32xf32, #tpu.memory_space<vmem>>, vector<1x5x32xf32>
    %28 = vector.shape_cast %27 : vector<1x5x32xf32> to vector<5x32xf32>
    %cst = arith.constant dense<0.000000e+00> : vector<5xf32>
    %29 = vector.multi_reduction <add>, %28, %cst [1] : vector<5x32xf32> to vector<5xf32>
    %30 = vector.shape_cast %29 : vector<5xf32> to vector<5x1xf32>
    %cst_39 = arith.constant 3.200000e+01 : f32
    %31 = vector.broadcast %cst_39 : f32 to vector<5x1xf32>
    %32 = arith.divf %30, %31 : vector<5x1xf32>
    %33 = vector.broadcast %32 : vector<5x1xf32> to vector<5x32xf32>
    %34 = arith.subf %28, %33 : vector<5x32xf32>
    %35 = arith.mulf %34, %34 : vector<5x32xf32>
    %cst_40 = arith.constant dense<0.000000e+00> : vector<5xf32>
    %36 = vector.multi_reduction <add>, %35, %cst_40 [1] : vector<5x32xf32> to vector<5xf32>
    %37 = vector.shape_cast %36 : vector<5xf32> to vector<5x1xf32>
    %cst_41 = arith.constant 3.200000e+01 : f32
    %38 = vector.broadcast %cst_41 : f32 to vector<5x1xf32>
    %39 = arith.divf %37, %38 : vector<5x1xf32>
    %cst_42 = arith.constant 9.99999974E-6 : f32
    %40 = vector.broadcast %cst_42 : f32 to vector<5x1xf32>
    %41 = arith.addf %39, %40 : vector<5x1xf32>
    %42 = math.rsqrt %41 : vector<5x1xf32>
    %43 = vector.broadcast %42 : vector<5x1xf32> to vector<5x32xf32>
    %44 = arith.mulf %34, %43 : vector<5x32xf32>
    %45 = vector.broadcast %4 : vector<1x32xf32> to vector<5x32xf32>
    %46 = arith.mulf %44, %45 : vector<5x32xf32>
    %47 = vector.broadcast %6 : vector<1x32xf32> to vector<5x32xf32>
    %48 = arith.addf %46, %47 : vector<5x32xf32>
    %cst_43 = arith.constant dense<0.000000e+00> : vector<5x96xf32>
    %49 = tpu.matmul %48, %8, %cst_43 {dimension_numbers = #tpu.dot_dimension_numbers<[1], [0], [0], [1], [0, 0, 1, 1], [], []>} : vector<5x32xf32>, vector<32x96xf32>, vector<5x96xf32> -> vector<5x96xf32>
    %50 = vector.broadcast %10 : vector<1x96xf32> to vector<5x96xf32>
    %51 = arith.addf %49, %50 : vector<5x96xf32>
    %52 = vector.extract_strided_slice %51 {offsets = [0, 0], sizes = [5, 8], strides = [1, 1]} : vector<5x96xf32> to vector<5x8xf32>
    %53 = vector.extract_strided_slice %51 {offsets = [0, 32], sizes = [5, 8], strides = [1, 1]} : vector<5x96xf32> to vector<5x8xf32>
    %54 = vector.extract_strided_slice %51 {offsets = [0, 64], sizes = [5, 8], strides = [1, 1]} : vector<5x96xf32> to vector<5x8xf32>
    %cst_44 = arith.constant dense<0.000000e+00> : vector<5x5xf32>
    %55 = tpu.matmul %52, %53, %cst_44 {dimension_numbers = #tpu.dot_dimension_numbers<[1], [1], [0], [0], [0, 0, 1, 0], [], []>} : vector<5x8xf32>, vector<5x8xf32>, vector<5x5xf32> -> vector<5x5xf32>
    %cst_45 = arith.constant 0.353553385 : f32
    %56 = vector.broadcast %cst_45 : f32 to vector<5x5xf32>
    %57 = arith.mulf %55, %56 : vector<5x5xf32>
    %cst_46 = arith.constant dense<0xFF800000> : vector<5xf32>
    %58 = vector.multi_reduction <maximumf>, %57, %cst_46 [1] : vector<5x5xf32> to vector<5xf32>
    %59 = vector.shape_cast %58 : vector<5xf32> to vector<5x1xf32>
    %60 = vector.broadcast %59 : vector<5x1xf32> to vector<5x5xf32>
    %61 = arith.subf %57, %60 : vector<5x5xf32>
    %62 = math.exp %61 : vector<5x5xf32>
    %cst_47 = arith.constant dense<0.000000e+00> : vector<5xf32>
    %63 = vector.multi_reduction <add>, %62, %cst_47 [1] : vector<5x5xf32> to vector<5xf32>
    %64 = vector.shape_cast %63 : vector<5xf32> to vector<5x1xf32>
    %65 = tpu.reciprocal %64 {approx = true} : vector<5x1xf32> -> vector<5x1xf32>
    %66 = vector.broadcast %65 : vector<5x1xf32> to vector<5x5xf32>
    %67 = arith.mulf %62, %66 : vector<5x5xf32>
    %cst_48 = arith.constant dense<0.000000e+00> : vector<5x8xf32>
    %68 = tpu.matmul %67, %54, %cst_48 {dimension_numbers = #tpu.dot_dimension_numbers<[1], [0], [0], [1], [0, 0, 1, 1], [], []>} : vector<5x5xf32>, vector<5x8xf32>, vector<5x8xf32> -> vector<5x8xf32>
    %69 = vector.extract_strided_slice %51 {offsets = [0, 8], sizes = [5, 8], strides = [1, 1]} : vector<5x96xf32> to vector<5x8xf32>
    %70 = vector.extract_strided_slice %51 {offsets = [0, 40], sizes = [5, 8], strides = [1, 1]} : vector<5x96xf32> to vector<5x8xf32>
    %71 = vector.extract_strided_slice %51 {offsets = [0, 72], sizes = [5, 8], strides = [1, 1]} : vector<5x96xf32> to vector<5x8xf32>
    %cst_49 = arith.constant dense<0.000000e+00> : vector<5x5xf32>
    %72 = tpu.matmul %69, %70, %cst_49 {dimension_numbers = #tpu.dot_dimension_numbers<[1], [1], [0], [0], [0, 0, 1, 0], [], []>} : vector<5x8xf32>, vector<5x8xf32>, vector<5x5xf32> -> vector<5x5xf32>
    %cst_50 = arith.constant 0.353553385 : f32
    %73 = vector.broadcast %cst_50 : f32 to vector<5x5xf32>
    %74 = arith.mulf %72, %73 : vector<5x5xf32>
    %cst_51 = arith.constant dense<0xFF800000> : vector<5xf32>
    %75 = vector.multi_reduction <maximumf>, %74, %cst_51 [1] : vector<5x5xf32> to vector<5xf32>
    %76 = vector.shape_cast %75 : vector<5xf32> to vector<5x1xf32>
    %77 = vector.broadcast %76 : vector<5x1xf32> to vector<5x5xf32>
    %78 = arith.subf %74, %77 : vector<5x5xf32>
    %79 = math.exp %78 : vector<5x5xf32>
    %cst_52 = arith.constant dense<0.000000e+00> : vector<5xf32>
    %80 = vector.multi_reduction <add>, %79, %cst_52 [1] : vector<5x5xf32> to vector<5xf32>
    %81 = vector.shape_cast %80 : vector<5xf32> to vector<5x1xf32>
    %82 = tpu.reciprocal %81 {approx = true} : vector<5x1xf32> -> vector<5x1xf32>
    %83 = vector.broadcast %82 : vector<5x1xf32> to vector<5x5xf32>
    %84 = arith.mulf %79, %83 : vector<5x5xf32>
    %cst_53 = arith.constant dense<0.000000e+00> : vector<5x8xf32>
    %85 = tpu.matmul %84, %71, %cst_53 {dimension_numbers = #tpu.dot_dimension_numbers<[1], [0], [0], [1], [0, 0, 1, 1], [], []>} : vector<5x5xf32>, vector<5x8xf32>, vector<5x8xf32> -> vector<5x8xf32>
    %86 = vector.extract_strided_slice %51 {offsets = [0, 16], sizes = [5, 8], strides = [1, 1]} : vector<5x96xf32> to vector<5x8xf32>
    %87 = vector.extract_strided_slice %51 {offsets = [0, 48], sizes = [5, 8], strides = [1, 1]} : vector<5x96xf32> to vector<5x8xf32>
    %88 = vector.extract_strided_slice %51 {offsets = [0, 80], sizes = [5, 8], strides = [1, 1]} : vector<5x96xf32> to vector<5x8xf32>
    %cst_54 = arith.constant dense<0.000000e+00> : vector<5x5xf32>
    %89 = tpu.matmul %86, %87, %cst_54 {dimension_numbers = #tpu.dot_dimension_numbers<[1], [1], [0], [0], [0, 0, 1, 0], [], []>} : vector<5x8xf32>, vector<5x8xf32>, vector<5x5xf32> -> vector<5x5xf32>
    %cst_55 = arith.constant 0.353553385 : f32
    %90 = vector.broadcast %cst_55 : f32 to vector<5x5xf32>
    %91 = arith.mulf %89, %90 : vector<5x5xf32>
    %cst_56 = arith.constant dense<0xFF800000> : vector<5xf32>
    %92 = vector.multi_reduction <maximumf>, %91, %cst_56 [1] : vector<5x5xf32> to vector<5xf32>
    %93 = vector.shape_cast %92 : vector<5xf32> to vector<5x1xf32>
    %94 = vector.broadcast %93 : vector<5x1xf32> to vector<5x5xf32>
    %95 = arith.subf %91, %94 : vector<5x5xf32>
    %96 = math.exp %95 : vector<5x5xf32>
    %cst_57 = arith.constant dense<0.000000e+00> : vector<5xf32>
    %97 = vector.multi_reduction <add>, %96, %cst_57 [1] : vector<5x5xf32> to vector<5xf32>
    %98 = vector.shape_cast %97 : vector<5xf32> to vector<5x1xf32>
    %99 = tpu.reciprocal %98 {approx = true} : vector<5x1xf32> -> vector<5x1xf32>
    %100 = vector.broadcast %99 : vector<5x1xf32> to vector<5x5xf32>
    %101 = arith.mulf %96, %100 : vector<5x5xf32>
    %cst_58 = arith.constant dense<0.000000e+00> : vector<5x8xf32>
    %102 = tpu.matmul %101, %88, %cst_58 {dimension_numbers = #tpu.dot_dimension_numbers<[1], [0], [0], [1], [0, 0, 1, 1], [], []>} : vector<5x5xf32>, vector<5x8xf32>, vector<5x8xf32> -> vector<5x8xf32>
    %103 = vector.extract_strided_slice %51 {offsets = [0, 24], sizes = [5, 8], strides = [1, 1]} : vector<5x96xf32> to vector<5x8xf32>
    %104 = vector.extract_strided_slice %51 {offsets = [0, 56], sizes = [5, 8], strides = [1, 1]} : vector<5x96xf32> to vector<5x8xf32>
    %105 = vector.extract_strided_slice %51 {offsets = [0, 88], sizes = [5, 8], strides = [1, 1]} : vector<5x96xf32> to vector<5x8xf32>
    %cst_59 = arith.constant dense<0.000000e+00> : vector<5x5xf32>
    %106 = tpu.matmul %103, %104, %cst_59 {dimension_numbers = #tpu.dot_dimension_numbers<[1], [1], [0], [0], [0, 0, 1, 0], [], []>} : vector<5x8xf32>, vector<5x8xf32>, vector<5x5xf32> -> vector<5x5xf32>
    %cst_60 = arith.constant 0.353553385 : f32
    %107 = vector.broadcast %cst_60 : f32 to vector<5x5xf32>
    %108 = arith.mulf %106, %107 : vector<5x5xf32>
    %cst_61 = arith.constant dense<0xFF800000> : vector<5xf32>
    %109 = vector.multi_reduction <maximumf>, %108, %cst_61 [1] : vector<5x5xf32> to vector<5xf32>
    %110 = vector.shape_cast %109 : vector<5xf32> to vector<5x1xf32>
    %111 = vector.broadcast %110 : vector<5x1xf32> to vector<5x5xf32>
    %112 = arith.subf %108, %111 : vector<5x5xf32>
    %113 = math.exp %112 : vector<5x5xf32>
    %cst_62 = arith.constant dense<0.000000e+00> : vector<5xf32>
    %114 = vector.multi_reduction <add>, %113, %cst_62 [1] : vector<5x5xf32> to vector<5xf32>
    %115 = vector.shape_cast %114 : vector<5xf32> to vector<5x1xf32>
    %116 = tpu.reciprocal %115 {approx = true} : vector<5x1xf32> -> vector<5x1xf32>
    %117 = vector.broadcast %116 : vector<5x1xf32> to vector<5x5xf32>
    %118 = arith.mulf %113, %117 : vector<5x5xf32>
    %cst_63 = arith.constant dense<0.000000e+00> : vector<5x8xf32>
    %119 = tpu.matmul %118, %105, %cst_63 {dimension_numbers = #tpu.dot_dimension_numbers<[1], [0], [0], [1], [0, 0, 1, 1], [], []>} : vector<5x5xf32>, vector<5x8xf32>, vector<5x8xf32> -> vector<5x8xf32>
    %120 = tpu.concatenate %68, %85, %102, %119 in 1 : vector<5x8xf32>, vector<5x8xf32>, vector<5x8xf32>, vector<5x8xf32> -> vector<5x32xf32>
    %cst_64 = arith.constant dense<0.000000e+00> : vector<5x32xf32>
    %121 = tpu.matmul %120, %12, %cst_64 {dimension_numbers = #tpu.dot_dimension_numbers<[1], [0], [0], [1], [0, 0, 1, 1], [], []>} : vector<5x32xf32>, vector<32x32xf32>, vector<5x32xf32> -> vector<5x32xf32>
    %122 = arith.addf %28, %121 : vector<5x32xf32>
    %123 = vector.broadcast %14 : vector<1x32xf32> to vector<5x32xf32>
    %124 = arith.addf %122, %123 : vector<5x32xf32>
    %cst_65 = arith.constant dense<0.000000e+00> : vector<5xf32>
    %125 = vector.multi_reduction <add>, %124, %cst_65 [1] : vector<5x32xf32> to vector<5xf32>
    %126 = vector.shape_cast %125 : vector<5xf32> to vector<5x1xf32>
    %cst_66 = arith.constant 3.200000e+01 : f32
    %127 = vector.broadcast %cst_66 : f32 to vector<5x1xf32>
    %128 = arith.divf %126, %127 : vector<5x1xf32>
    %129 = vector.broadcast %128 : vector<5x1xf32> to vector<5x32xf32>
    %130 = arith.subf %124, %129 : vector<5x32xf32>
    %131 = arith.mulf %130, %130 : vector<5x32xf32>
    %cst_67 = arith.constant dense<0.000000e+00> : vector<5xf32>
    %132 = vector.multi_reduction <add>, %131, %cst_67 [1] : vector<5x32xf32> to vector<5xf32>
    %133 = vector.shape_cast %132 : vector<5xf32> to vector<5x1xf32>
    %cst_68 = arith.constant 3.200000e+01 : f32
    %134 = vector.broadcast %cst_68 : f32 to vector<5x1xf32>
    %135 = arith.divf %133, %134 : vector<5x1xf32>
    %cst_69 = arith.constant 9.99999974E-6 : f32
    %136 = vector.broadcast %cst_69 : f32 to vector<5x1xf32>
    %137 = arith.addf %135, %136 : vector<5x1xf32>
    %138 = math.rsqrt %137 : vector<5x1xf32>
    %139 = vector.broadcast %138 : vector<5x1xf32> to vector<5x32xf32>
    %140 = arith.mulf %130, %139 : vector<5x32xf32>
    %141 = vector.broadcast %16 : vector<1x32xf32> to vector<5x32xf32>
    %142 = arith.mulf %140, %141 : vector<5x32xf32>
    %143 = vector.broadcast %18 : vector<1x32xf32> to vector<5x32xf32>
    %144 = arith.addf %142, %143 : vector<5x32xf32>
    %cst_70 = arith.constant dense<0.000000e+00> : vector<5x128xf32>
    %145 = tpu.matmul %144, %20, %cst_70 {dimension_numbers = #tpu.dot_dimension_numbers<[1], [0], [0], [1], [0, 0, 1, 1], [], []>} : vector<5x32xf32>, vector<32x128xf32>, vector<5x128xf32> -> vector<5x128xf32>
    %146 = vector.broadcast %22 : vector<1x128xf32> to vector<5x128xf32>
    %147 = arith.addf %145, %146 : vector<5x128xf32>
    %cst_71 = arith.constant 1.702000e+00 : f32
    %148 = vector.broadcast %cst_71 : f32 to vector<5x128xf32>
    %149 = arith.mulf %148, %147 : vector<5x128xf32>
    %150 = arith.negf %149 : vector<5x128xf32>
    %151 = math.exp %150 : vector<5x128xf32>
    %cst_72 = arith.constant 1.000000e+00 : f32
    %152 = vector.broadcast %cst_72 : f32 to vector<5x128xf32>
    %153 = arith.addf %152, %151 : vector<5x128xf32>
    %154 = arith.divf %152, %153 : vector<5x128xf32>
    %155 = arith.mulf %147, %154 : vector<5x128xf32>
    %cst_73 = arith.constant dense<0.000000e+00> : vector<5x32xf32>
    %156 = tpu.matmul %155, %24, %cst_73 {dimension_numbers = #tpu.dot_dimension_numbers<[1], [0], [0], [1], [0, 0, 1, 1], [], []>} : vector<5x128xf32>, vector<128x32xf32>, vector<5x32xf32> -> vector<5x32xf32>
    %157 = arith.addf %124, %156 : vector<5x32xf32>
    %158 = vector.broadcast %26 : vector<1x32xf32> to vector<5x32xf32>
    %159 = arith.addf %157, %158 : vector<5x32xf32>
    %c0_74 = arith.constant 0 : index
    %c0_75 = arith.constant 0 : index
    %c0_76 = arith.constant 0 : index
    %160 = vector.load %arg23[%c0_74, %c0_75, %c0_76] : memref<2x5x32xf32, #tpu.memory_space<vmem>>, vector<1x5x32xf32>
    %161 = vector.shape_cast %160 : vector<1x5x32xf32> to vector<5x32xf32>
    %162 = vector.shape_cast %159 : vector<5x32xf32> to vector<1x5x32xf32>
    tpu.vector_store %arg23[%c0_74, %c0_75, %c0_76], %162 {strides = array<i32>} : memref<2x5x32xf32, #tpu.memory_space<vmem>>, vector<1x5x32xf32>,
    %c1 = arith.constant 1 : index
    %c0_77 = arith.constant 0 : index
    %c0_78 = arith.constant 0 : index
    %163 = vector.load %arg23[%c1, %c0_77, %c0_78] : memref<2x5x32xf32, #tpu.memory_space<vmem>>, vector<1x5x32xf32>
    %164 = vector.shape_cast %163 : vector<1x5x32xf32> to vector<5x32xf32>
    %cst_79 = arith.constant dense<0.000000e+00> : vector<5xf32>
    %165 = vector.multi_reduction <add>, %164, %cst_79 [1] : vector<5x32xf32> to vector<5xf32>
    %166 = vector.shape_cast %165 : vector<5xf32> to vector<5x1xf32>
    %cst_80 = arith.constant 3.200000e+01 : f32
    %167 = vector.broadcast %cst_80 : f32 to vector<5x1xf32>
    %168 = arith.divf %166, %167 : vector<5x1xf32>
    %169 = vector.broadcast %168 : vector<5x1xf32> to vector<5x32xf32>
    %170 = arith.subf %164, %169 : vector<5x32xf32>
    %171 = arith.mulf %170, %170 : vector<5x32xf32>
    %cst_81 = arith.constant dense<0.000000e+00> : vector<5xf32>
    %172 = vector.multi_reduction <add>, %171, %cst_81 [1] : vector<5x32xf32> to vector<5xf32>
    %173 = vector.shape_cast %172 : vector<5xf32> to vector<5x1xf32>
    %cst_82 = arith.constant 3.200000e+01 : f32
    %174 = vector.broadcast %cst_82 : f32 to vector<5x1xf32>
    %175 = arith.divf %173, %174 : vector<5x1xf32>
    %cst_83 = arith.constant 9.99999974E-6 : f32
    %176 = vector.broadcast %cst_83 : f32 to vector<5x1xf32>
    %177 = arith.addf %175, %176 : vector<5x1xf32>
    %178 = math.rsqrt %177 : vector<5x1xf32>
    %179 = vector.broadcast %178 : vector<5x1xf32> to vector<5x32xf32>
    %180 = arith.mulf %170, %179 : vector<5x32xf32>
    %181 = vector.broadcast %4 : vector<1x32xf32> to vector<5x32xf32>
    %182 = arith.mulf %180, %181 : vector<5x32xf32>
    %183 = vector.broadcast %6 : vector<1x32xf32> to vector<5x32xf32>
    %184 = arith.addf %182, %183 : vector<5x32xf32>
    %cst_84 = arith.constant dense<0.000000e+00> : vector<5x96xf32>
    %185 = tpu.matmul %184, %8, %cst_84 {dimension_numbers = #tpu.dot_dimension_numbers<[1], [0], [0], [1], [0, 0, 1, 1], [], []>} : vector<5x32xf32>, vector<32x96xf32>, vector<5x96xf32> -> vector<5x96xf32>
    %186 = vector.broadcast %10 : vector<1x96xf32> to vector<5x96xf32>
    %187 = arith.addf %185, %186 : vector<5x96xf32>
    %188 = vector.extract_strided_slice %187 {offsets = [0, 0], sizes = [5, 8], strides = [1, 1]} : vector<5x96xf32> to vector<5x8xf32>
    %189 = vector.extract_strided_slice %187 {offsets = [0, 32], sizes = [5, 8], strides = [1, 1]} : vector<5x96xf32> to vector<5x8xf32>
    %190 = vector.extract_strided_slice %187 {offsets = [0, 64], sizes = [5, 8], strides = [1, 1]} : vector<5x96xf32> to vector<5x8xf32>
    %cst_85 = arith.constant dense<0.000000e+00> : vector<5x5xf32>
    %191 = tpu.matmul %188, %189, %cst_85 {dimension_numbers = #tpu.dot_dimension_numbers<[1], [1], [0], [0], [0, 0, 1, 0], [], []>} : vector<5x8xf32>, vector<5x8xf32>, vector<5x5xf32> -> vector<5x5xf32>
    %cst_86 = arith.constant 0.353553385 : f32
    %192 = vector.broadcast %cst_86 : f32 to vector<5x5xf32>
    %193 = arith.mulf %191, %192 : vector<5x5xf32>
    %cst_87 = arith.constant dense<0xFF800000> : vector<5xf32>
    %194 = vector.multi_reduction <maximumf>, %193, %cst_87 [1] : vector<5x5xf32> to vector<5xf32>
    %195 = vector.shape_cast %194 : vector<5xf32> to vector<5x1xf32>
    %196 = vector.broadcast %195 : vector<5x1xf32> to vector<5x5xf32>
    %197 = arith.subf %193, %196 : vector<5x5xf32>
    %198 = math.exp %197 : vector<5x5xf32>
    %cst_88 = arith.constant dense<0.000000e+00> : vector<5xf32>
    %199 = vector.multi_reduction <add>, %198, %cst_88 [1] : vector<5x5xf32> to vector<5xf32>
    %200 = vector.shape_cast %199 : vector<5xf32> to vector<5x1xf32>
    %201 = tpu.reciprocal %200 {approx = true} : vector<5x1xf32> -> vector<5x1xf32>
    %202 = vector.broadcast %201 : vector<5x1xf32> to vector<5x5xf32>
    %203 = arith.mulf %198, %202 : vector<5x5xf32>
    %cst_89 = arith.constant dense<0.000000e+00> : vector<5x8xf32>
    %204 = tpu.matmul %203, %190, %cst_89 {dimension_numbers = #tpu.dot_dimension_numbers<[1], [0], [0], [1], [0, 0, 1, 1], [], []>} : vector<5x5xf32>, vector<5x8xf32>, vector<5x8xf32> -> vector<5x8xf32>
    %205 = vector.extract_strided_slice %187 {offsets = [0, 8], sizes = [5, 8], strides = [1, 1]} : vector<5x96xf32> to vector<5x8xf32>
    %206 = vector.extract_strided_slice %187 {offsets = [0, 40], sizes = [5, 8], strides = [1, 1]} : vector<5x96xf32> to vector<5x8xf32>
    %207 = vector.extract_strided_slice %187 {offsets = [0, 72], sizes = [5, 8], strides = [1, 1]} : vector<5x96xf32> to vector<5x8xf32>
    %cst_90 = arith.constant dense<0.000000e+00> : vector<5x5xf32>
    %208 = tpu.matmul %205, %206, %cst_90 {dimension_numbers = #tpu.dot_dimension_numbers<[1], [1], [0], [0], [0, 0, 1, 0], [], []>} : vector<5x8xf32>, vector<5x8xf32>, vector<5x5xf32> -> vector<5x5xf32>
    %cst_91 = arith.constant 0.353553385 : f32
    %209 = vector.broadcast %cst_91 : f32 to vector<5x5xf32>
    %210 = arith.mulf %208, %209 : vector<5x5xf32>
    %cst_92 = arith.constant dense<0xFF800000> : vector<5xf32>
    %211 = vector.multi_reduction <maximumf>, %210, %cst_92 [1] : vector<5x5xf32> to vector<5xf32>
    %212 = vector.shape_cast %211 : vector<5xf32> to vector<5x1xf32>
    %213 = vector.broadcast %212 : vector<5x1xf32> to vector<5x5xf32>
    %214 = arith.subf %210, %213 : vector<5x5xf32>
    %215 = math.exp %214 : vector<5x5xf32>
    %cst_93 = arith.constant dense<0.000000e+00> : vector<5xf32>
    %216 = vector.multi_reduction <add>, %215, %cst_93 [1] : vector<5x5xf32> to vector<5xf32>
    %217 = vector.shape_cast %216 : vector<5xf32> to vector<5x1xf32>
    %218 = tpu.reciprocal %217 {approx = true} : vector<5x1xf32> -> vector<5x1xf32>
    %219 = vector.broadcast %218 : vector<5x1xf32> to vector<5x5xf32>
    %220 = arith.mulf %215, %219 : vector<5x5xf32>
    %cst_94 = arith.constant dense<0.000000e+00> : vector<5x8xf32>
    %221 = tpu.matmul %220, %207, %cst_94 {dimension_numbers = #tpu.dot_dimension_numbers<[1], [0], [0], [1], [0, 0, 1, 1], [], []>} : vector<5x5xf32>, vector<5x8xf32>, vector<5x8xf32> -> vector<5x8xf32>
    %222 = vector.extract_strided_slice %187 {offsets = [0, 16], sizes = [5, 8], strides = [1, 1]} : vector<5x96xf32> to vector<5x8xf32>
    %223 = vector.extract_strided_slice %187 {offsets = [0, 48], sizes = [5, 8], strides = [1, 1]} : vector<5x96xf32> to vector<5x8xf32>
    %224 = vector.extract_strided_slice %187 {offsets = [0, 80], sizes = [5, 8], strides = [1, 1]} : vector<5x96xf32> to vector<5x8xf32>
    %cst_95 = arith.constant dense<0.000000e+00> : vector<5x5xf32>
    %225 = tpu.matmul %222, %223, %cst_95 {dimension_numbers = #tpu.dot_dimension_numbers<[1], [1], [0], [0], [0, 0, 1, 0], [], []>} : vector<5x8xf32>, vector<5x8xf32>, vector<5x5xf32> -> vector<5x5xf32>
    %cst_96 = arith.constant 0.353553385 : f32
    %226 = vector.broadcast %cst_96 : f32 to vector<5x5xf32>
    %227 = arith.mulf %225, %226 : vector<5x5xf32>
    %cst_97 = arith.constant dense<0xFF800000> : vector<5xf32>
    %228 = vector.multi_reduction <maximumf>, %227, %cst_97 [1] : vector<5x5xf32> to vector<5xf32>
    %229 = vector.shape_cast %228 : vector<5xf32> to vector<5x1xf32>
    %230 = vector.broadcast %229 : vector<5x1xf32> to vector<5x5xf32>
    %231 = arith.subf %227, %230 : vector<5x5xf32>
    %232 = math.exp %231 : vector<5x5xf32>
    %cst_98 = arith.constant dense<0.000000e+00> : vector<5xf32>
    %233 = vector.multi_reduction <add>, %232, %cst_98 [1] : vector<5x5xf32> to vector<5xf32>
    %234 = vector.shape_cast %233 : vector<5xf32> to vector<5x1xf32>
    %235 = tpu.reciprocal %234 {approx = true} : vector<5x1xf32> -> vector<5x1xf32>
    %236 = vector.broadcast %235 : vector<5x1xf32> to vector<5x5xf32>
    %237 = arith.mulf %232, %236 : vector<5x5xf32>
    %cst_99 = arith.constant dense<0.000000e+00> : vector<5x8xf32>
    %238 = tpu.matmul %237, %224, %cst_99 {dimension_numbers = #tpu.dot_dimension_numbers<[1], [0], [0], [1], [0, 0, 1, 1], [], []>} : vector<5x5xf32>, vector<5x8xf32>, vector<5x8xf32> -> vector<5x8xf32>
    %239 = vector.extract_strided_slice %187 {offsets = [0, 24], sizes = [5, 8], strides = [1, 1]} : vector<5x96xf32> to vector<5x8xf32>
    %240 = vector.extract_strided_slice %187 {offsets = [0, 56], sizes = [5, 8], strides = [1, 1]} : vector<5x96xf32> to vector<5x8xf32>
    %241 = vector.extract_strided_slice %187 {offsets = [0, 88], sizes = [5, 8], strides = [1, 1]} : vector<5x96xf32> to vector<5x8xf32>
    %cst_100 = arith.constant dense<0.000000e+00> : vector<5x5xf32>
    %242 = tpu.matmul %239, %240, %cst_100 {dimension_numbers = #tpu.dot_dimension_numbers<[1], [1], [0], [0], [0, 0, 1, 0], [], []>} : vector<5x8xf32>, vector<5x8xf32>, vector<5x5xf32> -> vector<5x5xf32>
    %cst_101 = arith.constant 0.353553385 : f32
    %243 = vector.broadcast %cst_101 : f32 to vector<5x5xf32>
    %244 = arith.mulf %242, %243 : vector<5x5xf32>
    %cst_102 = arith.constant dense<0xFF800000> : vector<5xf32>
    %245 = vector.multi_reduction <maximumf>, %244, %cst_102 [1] : vector<5x5xf32> to vector<5xf32>
    %246 = vector.shape_cast %245 : vector<5xf32> to vector<5x1xf32>
    %247 = vector.broadcast %246 : vector<5x1xf32> to vector<5x5xf32>
    %248 = arith.subf %244, %247 : vector<5x5xf32>
    %249 = math.exp %248 : vector<5x5xf32>
    %cst_103 = arith.constant dense<0.000000e+00> : vector<5xf32>
    %250 = vector.multi_reduction <add>, %249, %cst_103 [1] : vector<5x5xf32> to vector<5xf32>
    %251 = vector.shape_cast %250 : vector<5xf32> to vector<5x1xf32>
    %252 = tpu.reciprocal %251 {approx = true} : vector<5x1xf32> -> vector<5x1xf32>
    %253 = vector.broadcast %252 : vector<5x1xf32> to vector<5x5xf32>
    %254 = arith.mulf %249, %253 : vector<5x5xf32>
    %cst_104 = arith.constant dense<0.000000e+00> : vector<5x8xf32>
    %255 = tpu.matmul %254, %241, %cst_104 {dimension_numbers = #tpu.dot_dimension_numbers<[1], [0], [0], [1], [0, 0, 1, 1], [], []>} : vector<5x5xf32>, vector<5x8xf32>, vector<5x8xf32> -> vector<5x8xf32>
    %256 = tpu.concatenate %204, %221, %238, %255 in 1 : vector<5x8xf32>, vector<5x8xf32>, vector<5x8xf32>, vector<5x8xf32> -> vector<5x32xf32>
    %cst_105 = arith.constant dense<0.000000e+00> : vector<5x32xf32>
    %257 = tpu.matmul %256, %12, %cst_105 {dimension_numbers = #tpu.dot_dimension_numbers<[1], [0], [0], [1], [0, 0, 1, 1], [], []>} : vector<5x32xf32>, vector<32x32xf32>, vector<5x32xf32> -> vector<5x32xf32>
    %258 = arith.addf %164, %257 : vector<5x32xf32>
    %259 = vector.broadcast %14 : vector<1x32xf32> to vector<5x32xf32>
    %260 = arith.addf %258, %259 : vector<5x32xf32>
    %cst_106 = arith.constant dense<0.000000e+00> : vector<5xf32>
    %261 = vector.multi_reduction <add>, %260, %cst_106 [1] : vector<5x32xf32> to vector<5xf32>
    %262 = vector.shape_cast %261 : vector<5xf32> to vector<5x1xf32>
    %cst_107 = arith.constant 3.200000e+01 : f32
    %263 = vector.broadcast %cst_107 : f32 to vector<5x1xf32>
    %264 = arith.divf %262, %263 : vector<5x1xf32>
    %265 = vector.broadcast %264 : vector<5x1xf32> to vector<5x32xf32>
    %266 = arith.subf %260, %265 : vector<5x32xf32>
    %267 = arith.mulf %266, %266 : vector<5x32xf32>
    %cst_108 = arith.constant dense<0.000000e+00> : vector<5xf32>
    %268 = vector.multi_reduction <add>, %267, %cst_108 [1] : vector<5x32xf32> to vector<5xf32>
    %269 = vector.shape_cast %268 : vector<5xf32> to vector<5x1xf32>
    %cst_109 = arith.constant 3.200000e+01 : f32
    %270 = vector.broadcast %cst_109 : f32 to vector<5x1xf32>
    %271 = arith.divf %269, %270 : vector<5x1xf32>
    %cst_110 = arith.constant 9.99999974E-6 : f32
    %272 = vector.broadcast %cst_110 : f32 to vector<5x1xf32>
    %273 = arith.addf %271, %272 : vector<5x1xf32>
    %274 = math.rsqrt %273 : vector<5x1xf32>
    %275 = vector.broadcast %274 : vector<5x1xf32> to vector<5x32xf32>
    %276 = arith.mulf %266, %275 : vector<5x32xf32>
    %277 = vector.broadcast %16 : vector<1x32xf32> to vector<5x32xf32>
    %278 = arith.mulf %276, %277 : vector<5x32xf32>
    %279 = vector.broadcast %18 : vector<1x32xf32> to vector<5x32xf32>
    %280 = arith.addf %278, %279 : vector<5x32xf32>
    %cst_111 = arith.constant dense<0.000000e+00> : vector<5x128xf32>
    %281 = tpu.matmul %280, %20, %cst_111 {dimension_numbers = #tpu.dot_dimension_numbers<[1], [0], [0], [1], [0, 0, 1, 1], [], []>} : vector<5x32xf32>, vector<32x128xf32>, vector<5x128xf32> -> vector<5x128xf32>
    %282 = vector.broadcast %22 : vector<1x128xf32> to vector<5x128xf32>
    %283 = arith.addf %281, %282 : vector<5x128xf32>
    %cst_112 = arith.constant 1.702000e+00 : f32
    %284 = vector.broadcast %cst_112 : f32 to vector<5x128xf32>
    %285 = arith.mulf %284, %283 : vector<5x128xf32>
    %286 = arith.negf %285 : vector<5x128xf32>
    %287 = math.exp %286 : vector<5x128xf32>
    %cst_113 = arith.constant 1.000000e+00 : f32
    %288 = vector.broadcast %cst_113 : f32 to vector<5x128xf32>
    %289 = arith.addf %288, %287 : vector<5x128xf32>
    %290 = arith.divf %288, %289 : vector<5x128xf32>
    %291 = arith.mulf %283, %290 : vector<5x128xf32>
    %cst_114 = arith.constant dense<0.000000e+00> : vector<5x32xf32>
    %292 = tpu.matmul %291, %24, %cst_114 {dimension_numbers = #tpu.dot_dimension_numbers<[1], [0], [0], [1], [0, 0, 1, 1], [], []>} : vector<5x128xf32>, vector<128x32xf32>, vector<5x32xf32> -> vector<5x32xf32>
    %293 = arith.addf %260, %292 : vector<5x32xf32>
    %294 = vector.broadcast %26 : vector<1x32xf32> to vector<5x32xf32>
    %295 = arith.addf %293, %294 : vector<5x32xf32>
    %c1_115 = arith.constant 1 : index
    %c0_116 = arith.constant 0 : index
    %c0_117 = arith.constant 0 : index
    %296 = vector.load %arg23[%c1_115, %c0_116, %c0_117] : memref<2x5x32xf32, #tpu.memory_space<vmem>>, vector<1x5x32xf32>
    %297 = vector.shape_cast %296 : vector<1x5x32xf32> to vector<5x32xf32>
    %298 = vector.shape_cast %295 : vector<5x32xf32> to vector<1x5x32xf32>
    tpu.vector_store %arg23[%c1_115, %c0_116, %c0_117], %298 {strides = array<i32>} : memref<2x5x32xf32, #tpu.memory_space<vmem>>, vector<1x5x32xf32>,
    %c11_i32 = arith.constant 11 : i32
    %299 = arith.cmpi eq, %arg0, %c11_i32 : i32
    %300 = arith.extui %299 : i1 to i32
    %c0_i32_118 = arith.constant 0 : i32
    %301 = arith.cmpi ne, %300, %c0_i32_118 : i32
    scf.if %301 {
      %c0_119 = arith.constant 0 : index
      %c0_120 = arith.constant 0 : index
      %302 = vector.load %arg19[%c0_119, %c0_120] : memref<1x32xf32, #tpu.memory_space<vmem>>, vector<1x32xf32>
      %c0_121 = arith.constant 0 : index
      %c0_122 = arith.constant 0 : index
      %303 = vector.load %arg20[%c0_121, %c0_122] : memref<1x32xf32, #tpu.memory_space<vmem>>, vector<1x32xf32>
      %304 = vector.extract_strided_slice %159 {offsets = [0, 0], sizes = [1, 32], strides = [1, 1]} : vector<5x32xf32> to vector<1x32xf32>
      %cst_123 = arith.constant dense<0.000000e+00> : vector<1xf32>
      %305 = vector.multi_reduction <add>, %304, %cst_123 [1] : vector<1x32xf32> to vector<1xf32>
      %306 = vector.shape_cast %305 : vector<1xf32> to vector<1x1xf32>
      %cst_124 = arith.constant 3.200000e+01 : f32
      %307 = vector.broadcast %cst_124 : f32 to vector<1x1xf32>
      %308 = arith.divf %306, %307 : vector<1x1xf32>
      %309 = vector.broadcast %308 : vector<1x1xf32> to vector<1x32xf32>
      %310 = arith.subf %304, %309 : vector<1x32xf32>
      %311 = arith.mulf %310, %310 : vector<1x32xf32>
      %cst_125 = arith.constant dense<0.000000e+00> : vector<1xf32>
      %312 = vector.multi_reduction <add>, %311, %cst_125 [1] : vector<1x32xf32> to vector<1xf32>
      %313 = vector.shape_cast %312 : vector<1xf32> to vector<1x1xf32>
      %cst_126 = arith.constant 3.200000e+01 : f32
      %314 = vector.broadcast %cst_126 : f32 to vector<1x1xf32>
      %315 = arith.divf %313, %314 : vector<1x1xf32>
      %cst_127 = arith.constant 9.99999974E-6 : f32
      %316 = vector.broadcast %cst_127 : f32 to vector<1x1xf32>
      %317 = arith.addf %315, %316 : vector<1x1xf32>
      %318 = math.rsqrt %317 : vector<1x1xf32>
      %319 = vector.broadcast %318 : vector<1x1xf32> to vector<1x32xf32>
      %320 = arith.mulf %310, %319 : vector<1x32xf32>
      %321 = arith.mulf %320, %302 : vector<1x32xf32>
      %322 = arith.addf %321, %303 : vector<1x32xf32>
      %c0_128 = arith.constant 0 : index
      %c0_129 = arith.constant 0 : index
      %323 = vector.load %arg21[%c0_128, %c0_129] : memref<32x16xf32, #tpu.memory_space<vmem>>, vector<32x16xf32>
      %cst_130 = arith.constant dense<0.000000e+00> : vector<1x16xf32>
      %324 = tpu.matmul %322, %323, %cst_130 {dimension_numbers = #tpu.dot_dimension_numbers<[1], [0], [0], [1], [0, 0, 1, 1], [], []>} : vector<1x32xf32>, vector<32x16xf32>, vector<1x16xf32> -> vector<1x16xf32>
      %c0_131 = arith.constant 0 : index
      %c0_132 = arith.constant 0 : index
      %325 = vector.load %arg22[%c0_131, %c0_132] : memref<2x16xf32, #tpu.memory_space<vmem>>, vector<1x16xf32>
      tpu.vector_store %arg22[%c0_131, %c0_132], %324 {strides = array<i32>} : memref<2x16xf32, #tpu.memory_space<vmem>>, vector<1x16xf32>,
      %326 = vector.extract_strided_slice %295 {offsets = [0, 0], sizes = [1, 32], strides = [1, 1]} : vector<5x32xf32> to vector<1x32xf32>
      %cst_133 = arith.constant dense<0.000000e+00> : vector<1xf32>
      %327 = vector.multi_reduction <add>, %326, %cst_133 [1] : vector<1x32xf32> to vector<1xf32>
      %328 = vector.shape_cast %327 : vector<1xf32> to vector<1x1xf32>
      %cst_134 = arith.constant 3.200000e+01 : f32
      %329 = vector.broadcast %cst_134 : f32 to vector<1x1xf32>
      %330 = arith.divf %328, %329 : vector<1x1xf32>
      %331 = vector.broadcast %330 : vector<1x1xf32> to vector<1x32xf32>
      %332 = arith.subf %326, %331 : vector<1x32xf32>
      %333 = arith.mulf %332, %332 : vector<1x32xf32>
      %cst_135 = arith.constant dense<0.000000e+00> : vector<1xf32>
      %334 = vector.multi_reduction <add>, %333, %cst_135 [1] : vector<1x32xf32> to vector<1xf32>
      %335 = vector.shape_cast %334 : vector<1xf32> to vector<1x1xf32>
      %cst_136 = arith.constant 3.200000e+01 : f32
      %336 = vector.broadcast %cst_136 : f32 to vector<1x1xf32>
      %337 = arith.divf %335, %336 : vector<1x1xf32>
      %cst_137 = arith.constant 9.99999974E-6 : f32
      %338 = vector.broadcast %cst_137 : f32 to vector<1x1xf32>
      %339 = arith.addf %337, %338 : vector<1x1xf32>
      %340 = math.rsqrt %339 : vector<1x1xf32>
      %341 = vector.broadcast %340 : vector<1x1xf32> to vector<1x32xf32>
      %342 = arith.mulf %332, %341 : vector<1x32xf32>
      %343 = arith.mulf %342, %302 : vector<1x32xf32>
      %344 = arith.addf %343, %303 : vector<1x32xf32>
      %c0_138 = arith.constant 0 : index
      %c0_139 = arith.constant 0 : index
      %345 = vector.load %arg21[%c0_138, %c0_139] : memref<32x16xf32, #tpu.memory_space<vmem>>, vector<32x16xf32>
      %cst_140 = arith.constant dense<0.000000e+00> : vector<1x16xf32>
      %346 = tpu.matmul %344, %345, %cst_140 {dimension_numbers = #tpu.dot_dimension_numbers<[1], [0], [0], [1], [0, 0, 1, 1], [], []>} : vector<1x32xf32>, vector<32x16xf32>, vector<1x16xf32> -> vector<1x16xf32>
      %c1_141 = arith.constant 1 : index
      %c0_142 = arith.constant 0 : index
      %347 = vector.load %arg22[%c1_141, %c0_142] : memref<2x16xf32, #tpu.memory_space<vmem>>, vector<1x16xf32>
      tpu.vector_store %arg22[%c1_141, %c0_142], %346 {strides = array<i32>} : memref<2x16xf32, #tpu.memory_space<vmem>>, vector<1x16xf32>,
    } else {
    }
    return
  }
  func.func @transform_0(%arg0: i32) -> (i32, i32) {
    %c0_i32 = arith.constant 0 : i32
    %c0_i32_0 = arith.constant 0 : i32
    %c0_i32_1 = arith.constant 0 : i32
    return %c0_i32, %c0_i32_0 : i32, i32
  }
  func.func @transform_1(%arg0: i32) -> (i32, i32) {
    %c0_i32 = arith.constant 0 : i32
    %c0_i32_0 = arith.constant 0 : i32
    %c0_i32_1 = arith.constant 0 : i32
    return %c0_i32, %c0_i32_0 : i32, i32
  }
  func.func @transform_2(%arg0: i32) -> (i32, i32) {
    %c0_i32 = arith.constant 0 : i32
    %c0_i32_0 = arith.constant 0 : i32
    %c0_i32_1 = arith.constant 0 : i32
    return %c0_i32, %c0_i32_0 : i32, i32
  }
  func.func @transform_3(%arg0: i32) -> (i32, i32) {
    %c0_i32 = arith.constant 0 : i32
    %c0_i32_0 = arith.constant 0 : i32
    %c0_i32_1 = arith.constant 0 : i32
    return %c0_i32, %c0_i32_0 : i32, i32
  }
  func.func @transform_4(%arg0: i32) -> (i32, i32) {
    %c0_i32 = arith.constant 0 : i32
    %c0_i32_0 = arith.constant 0 : i32
    %c0_i32_1 = arith.constant 0 : i32
    return %c0_i32, %c0_i32_0 : i32, i32
  }
  func.func @transform_5(%arg0: i32) -> (i32, i32) {
    %c0_i32 = arith.constant 0 : i32
    %c0_i32_0 = arith.constant 0 : i32
    %c0_i32_1 = arith.constant 0 : i32
    return %c0_i32, %c0_i32_0 : i32, i32
  }
  func.func @transform_6(%arg0: i32) -> (i32, i32, i32) {
    %c0_i32 = arith.constant 0 : i32
    %c0_i32_0 = arith.constant 0 : i32
    %c0_i32_1 = arith.constant 0 : i32
    return %arg0, %c0_i32, %c0_i32_0 : i32, i32, i32
  }
  func.func @transform_7(%arg0: i32) -> (i32, i32, i32) {
    %c0_i32 = arith.constant 0 : i32
    %c0_i32_0 = arith.constant 0 : i32
    %c0_i32_1 = arith.constant 0 : i32
    return %arg0, %c0_i32, %c0_i32_0 : i32, i32, i32
  }
  func.func @transform_8(%arg0: i32) -> (i32, i32, i32) {
    %c0_i32 = arith.constant 0 : i32
    %c0_i32_0 = arith.constant 0 : i32
    %c0_i32_1 = arith.constant 0 : i32
    return %arg0, %c0_i32, %c0_i32_0 : i32, i32, i32
  }
  func.func @transform_9(%arg0: i32) -> (i32, i32, i32) {
    %c0_i32 = arith.constant 0 : i32
    %c0_i32_0 = arith.constant 0 : i32
    %c0_i32_1 = arith.constant 0 : i32
    return %arg0, %c0_i32, %c0_i32_0 : i32, i32, i32
  }
  func.func @transform_10(%arg0: i32) -> (i32, i32, i32) {
    %c0_i32 = arith.constant 0 : i32
    %c0_i32_0 = arith.constant 0 : i32
    %c0_i32_1 = arith.constant 0 : i32
    return %arg0, %c0_i32, %c0_i32_0 : i32, i32, i32
  }
  func.func @transform_11(%arg0: i32) -> (i32, i32, i32) {
    %c0_i32 = arith.constant 0 : i32
    %c0_i32_0 = arith.constant 0 : i32
    %c0_i32_1 = arith.constant 0 : i32
    return %arg0, %c0_i32, %c0_i32_0 : i32, i32, i32
  }
  func.func @transform_12(%arg0: i32) -> (i32, i32, i32) {
    %c0_i32 = arith.constant 0 : i32
    %c0_i32_0 = arith.constant 0 : i32
    %c0_i32_1 = arith.constant 0 : i32
    return %arg0, %c0_i32, %c0_i32_0 : i32, i32, i32
  }
  func.func @transform_13(%arg0: i32) -> (i32, i32, i32) {
    %c0_i32 = arith.constant 0 : i32
    %c0_i32_0 = arith.constant 0 : i32
    %c0_i32_1 = arith.constant 0 : i32
    return %arg0, %c0_i32, %c0_i32_0 : i32, i32, i32
  }
  func.func @transform_14(%arg0: i32) -> (i32, i32, i32) {
    %c0_i32 = arith.constant 0 : i32
    %c0_i32_0 = arith.constant 0 : i32
    %c0_i32_1 = arith.constant 0 : i32
    return %arg0, %c0_i32, %c0_i32_0 : i32, i32, i32
  }
  func.func @transform_15(%arg0: i32) -> (i32, i32, i32) {
    %c0_i32 = arith.constant 0 : i32
    %c0_i32_0 = arith.constant 0 : i32
    %c0_i32_1 = arith.constant 0 : i32
    return %arg0, %c0_i32, %c0_i32_0 : i32, i32, i32
  }
  func.func @transform_16(%arg0: i32) -> (i32, i32, i32) {
    %c0_i32 = arith.constant 0 : i32
    %c0_i32_0 = arith.constant 0 : i32
    %c0_i32_1 = arith.constant 0 : i32
    return %arg0, %c0_i32, %c0_i32_0 : i32, i32, i32
  }
  func.func @transform_17(%arg0: i32) -> (i32, i32, i32) {
    %c0_i32 = arith.constant 0 : i32
    %c0_i32_0 = arith.constant 0 : i32
    %c0_i32_1 = arith.constant 0 : i32
    return %arg0, %c0_i32, %c0_i32_0 : i32, i32, i32
  }
  func.func @transform_18(%arg0: i32) -> (i32, i32) {
    %c0_i32 = arith.constant 0 : i32
    %c0_i32_0 = arith.constant 0 : i32
    %c0_i32_1 = arith.constant 0 : i32
    return %c0_i32, %c0_i32_0 : i32, i32
  }
  func.func @transform_19(%arg0: i32) -> (i32, i32) {
    %c0_i32 = arith.constant 0 : i32
    %c0_i32_0 = arith.constant 0 : i32
    %c0_i32_1 = arith.constant 0 : i32
    return %c0_i32, %c0_i32_0 : i32, i32
  }
  func.func @transform_20(%arg0: i32) -> (i32, i32) {
    %c0_i32 = arith.constant 0 : i32
    %c0_i32_0 = arith.constant 0 : i32
    %c0_i32_1 = arith.constant 0 : i32
    return %c0_i32, %c0_i32_0 : i32, i32
  }
  func.func @transform_21(%arg0: i32) -> (i32, i32) {
    %c0_i32 = arith.constant 0 : i32
    %c0_i32_0 = arith.constant 0 : i32
    %c0_i32_1 = arith.constant 0 : i32
    return %c0_i32, %c0_i32_0 : i32, i32
  }
}

</mosaic_0001>

<llo_original>
// kernel: encode_image.1
$region0: #{encode_image.1}
  #allocation0 [shape = 'u32[]', space=smem, size = 0x4, offset = 0x4, fixed_abs, tag = 'smem constant byte address 0x4 - core index']
  #allocation1 [shape = 'u32[72,128]{1,0:T(1,128)}', space=vmem, size = 0x9000, scoped, tag = 'internal scratch']
  #allocation2 [shape = 'f32[2,5,32]{2,1,0:T(8,128)}', space=vmem, size = 0x2000, scoped, tag = 'scratch operand']
  %s0 = inlined_call_operand.vmem [shape: f32[8,192], index: 0, kind: input, shape index: {}]
  %s1 = inlined_call_operand.vmem [shape: f32[192,32], index: 1, kind: input, shape index: {}]
  %s2 = inlined_call_operand.vmem [shape: f32[1,32], index: 2, kind: input, shape index: {}]
  %s3 = inlined_call_operand.vmem [shape: f32[5,32], index: 3, kind: input, shape index: {}]
  %s4 = inlined_call_operand.vmem [shape: f32[1,32], index: 4, kind: input, shape index: {}]
  %s5 = inlined_call_operand.vmem [shape: f32[1,32], index: 5, kind: input, shape index: {}]
  %s6 = inlined_call_operand.vmem [shape: f32[12,1,32], index: 6, kind: input, shape index: {}]
  %s7 = inlined_call_operand.vmem [shape: f32[12,1,32], index: 7, kind: input, shape index: {}]
  %s8 = inlined_call_operand.vmem [shape: f32[12,32,96], index: 8, kind: input, shape index: {}]
  %s9 = inlined_call_operand.vmem [shape: f32[12,1,96], index: 9, kind: input, shape index: {}]
  %s10 = inlined_call_operand.vmem [shape: f32[12,32,32], index: 10, kind: input, shape index: {}]
  %s11 = inlined_call_operand.vmem [shape: f32[12,1,32], index: 11, kind: input, shape index: {}]
  %s12 = inlined_call_operand.vmem [shape: f32[12,1,32], index: 12, kind: input, shape index: {}]
  %s13 = inlined_call_operand.vmem [shape: f32[12,1,32], index: 13, kind: input, shape index: {}]
  %s14 = inlined_call_operand.vmem [shape: f32[12,32,128], index: 14, kind: input, shape index: {}]
  %s15 = inlined_call_operand.vmem [shape: f32[12,1,128], index: 15, kind: input, shape index: {}]
  %s16 = inlined_call_operand.vmem [shape: f32[12,128,32], index: 16, kind: input, shape index: {}]
  %s17 = inlined_call_operand.vmem [shape: f32[12,1,32], index: 17, kind: input, shape index: {}]
  %s18 = inlined_call_operand.vmem [shape: f32[1,32], index: 18, kind: input, shape index: {}]
  %s19 = inlined_call_operand.vmem [shape: f32[1,32], index: 19, kind: input, shape index: {}]
  %s20 = inlined_call_operand.vmem [shape: f32[32,16], index: 20, kind: input, shape index: {}]
  %s21 = inlined_call_operand.hbm [shape: f32[2,16], index: 21, kind: output, shape index: {}]
  %s22 = sld [smem:[#allocation0]]
  $region125: #{encode_image.1} parent=0
    _
  %s24 = ssub.s32 1, %s22
  %s25 = scalar_select 0, %s24, %s22
  $region1: #{encode_image.1} parent=0
    #allocation3 [shape = 'u8[1024]{0}', space=vmem, size = 0x400, scoped, tag = 'output window, operand 0, single buffered']
    #allocation4 [shape = 's32[2]{0}', space=sflag, size = 0x8, scoped, tag = 'scoped memory for encode_image.1']
    %26 = vsyncpa [#allocation4], 0
    loop: start=0, step=1, limit=14
    $region2: #{encode_image.1} parent=1 // loop_pre_header
      _
    $region3: #{encode_image.1} parent=1 // loop_header
      %s28 = sphi 0, %s32
      %p29 = scmp.ge.s32.totalorder %s28, 14
      %s36 = sphi 0, %s36
      %s38 = sphi 0, %s36
      %s39 = sphi 0, %s38
      %s53 = sphi 0, %s39
      %s57 = sphi 0, %s57
      %s59 = sphi 0, %s57
      %s60 = sphi 0, %s59
      %s74 = sphi 0, %s60
      %s78 = sphi 0, %s78
      %s80 = sphi 0, %s78
      %s81 = sphi 0, %s80
      %s95 = sphi 0, %s81
      %s99 = sphi 0, %s99
      %s101 = sphi 0, %s99
      %s102 = sphi 0, %s101
      %s116 = sphi 0, %s102
      %s120 = sphi 0, %s120
      %s122 = sphi 0, %s120
      %s123 = sphi 0, %s122
      %s137 = sphi 0, %s123
      %s141 = sphi 0, %s141
      %s143 = sphi 0, %s141
      %s144 = sphi 0, %s143
      %s158 = sphi 0, %s144
      %s164 = sphi 0, %s166
      %s167 = sphi 0, %s164
      %s168 = sphi 0, %s167
      %s184 = sphi 0, %s168
      %s190 = sphi 0, %s192
      %s193 = sphi 0, %s190
      %s194 = sphi 0, %s193
      %s210 = sphi 0, %s194
      %s216 = sphi 0, %s218
      %s219 = sphi 0, %s216
      %s220 = sphi 0, %s219
      %s236 = sphi 0, %s220
      %s242 = sphi 0, %s244
      %s245 = sphi 0, %s242
      %s246 = sphi 0, %s245
      %s262 = sphi 0, %s246
      %s268 = sphi 0, %s270
      %s271 = sphi 0, %s268
      %s272 = sphi 0, %s271
      %s288 = sphi 0, %s272
      %s294 = sphi 0, %s296
      %s297 = sphi 0, %s294
      %s298 = sphi 0, %s297
      %s314 = sphi 0, %s298
      %s320 = sphi 0, %s322
      %s323 = sphi 0, %s320
      %s324 = sphi 0, %s323
      %s340 = sphi 0, %s324
      %s346 = sphi 0, %s348
      %s349 = sphi 0, %s346
      %s350 = sphi 0, %s349
      %s366 = sphi 0, %s350
      %s372 = sphi 0, %s374
      %s375 = sphi 0, %s372
      %s376 = sphi 0, %s375
      %s392 = sphi 0, %s376
      %s398 = sphi 0, %s400
      %s401 = sphi 0, %s398
      %s402 = sphi 0, %s401
      %s418 = sphi 0, %s402
      %s424 = sphi 0, %s426
      %s427 = sphi 0, %s424
      %s428 = sphi 0, %s427
      %s444 = sphi 0, %s428
      %s450 = sphi 0, %s452
      %s453 = sphi 0, %s450
      %s454 = sphi 0, %s453
      %s470 = sphi 0, %s454
      %s474 = sphi 0, %s474
      %s476 = sphi 0, %s474
      %s477 = sphi 0, %s476
      %s491 = sphi 0, %s477
      %s495 = sphi 0, %s495
      %s497 = sphi 0, %s495
      %s498 = sphi 0, %s497
      %s512 = sphi 0, %s498
      %s516 = sphi 0, %s516
      %s518 = sphi 0, %s516
      %s519 = sphi 0, %s518
      %s533 = sphi 0, %s519
      %s537 = sphi 0, %s537
      %s539 = sphi 0, %s537
      %s540 = sphi 0, %s539
      %s554 = sphi 0, %s540
    $region4: #{encode_image.1} parent=1 // loop_header_branch
      %31 = sbr.rel (%p29) target = $region8
    $region5: #{encode_image.1} parent=1 // loop_body
      %s33 = ssub.s32 %s28, 1
      %s34 = ssub.s32 %s28, 2
      %s35 = sadd.s32 %s28, 1
      %s37 = sadd.s32 %s36, 1
      %p40 = scmp.eq.s32.totalorder %s28, 11
      %p41 = scmp.ne.s32.totalorder %s36, %s38
      %p42 = scmp.eq.s32.totalorder %s28, 0
      %p43 = por %p41, %p42
      %p44 = scmp.ne.s32.totalorder %s36, %s38
      %p45 = scmp.eq.s32.totalorder %s33, 11
      %p46 = por %p44, %p45
      %p47 = scmp.ne.s32.totalorder %s38, %s39
      %p48 = scmp.eq.s32.totalorder %s33, 0
      %p49 = por %p47, %p48
      %p50 = scmp.ne.s32.totalorder %s38, %s39
      %p51 = scmp.eq.s32.totalorder %s34, 11
      %p52 = por %p50, %p51
      %p54 = scmp.ne.s32.totalorder %s39, %s53
      %p55 = scmp.eq.s32.totalorder %s34, 0
      %p56 = por %p54, %p55
      %s58 = sadd.s32 %s57, 1
      %p61 = scmp.eq.s32.totalorder %s28, 11
      %p62 = scmp.ne.s32.totalorder %s57, %s59
      %p63 = scmp.eq.s32.totalorder %s28, 0
      %p64 = por %p62, %p63
      %p65 = scmp.ne.s32.totalorder %s57, %s59
      %p66 = scmp.eq.s32.totalorder %s33, 11
      %p67 = por %p65, %p66
      %p68 = scmp.ne.s32.totalorder %s59, %s60
      %p69 = scmp.eq.s32.totalorder %s33, 0
      %p70 = por %p68, %p69
      %p71 = scmp.ne.s32.totalorder %s59, %s60
      %p72 = scmp.eq.s32.totalorder %s34, 11
      %p73 = por %p71, %p72
      %p75 = scmp.ne.s32.totalorder %s60, %s74
      %p76 = scmp.eq.s32.totalorder %s34, 0
      %p77 = por %p75, %p76
      %s79 = sadd.s32 %s78, 1
      %p82 = scmp.eq.s32.totalorder %s28, 11
      %p83 = scmp.ne.s32.totalorder %s78, %s80
      %p84 = scmp.eq.s32.totalorder %s28, 0
      %p85 = por %p83, %p84
      %p86 = scmp.ne.s32.totalorder %s78, %s80
      %p87 = scmp.eq.s32.totalorder %s33, 11
      %p88 = por %p86, %p87
      %p89 = scmp.ne.s32.totalorder %s80, %s81
      %p90 = scmp.eq.s32.totalorder %s33, 0
      %p91 = por %p89, %p90
      %p92 = scmp.ne.s32.totalorder %s80, %s81
      %p93 = scmp.eq.s32.totalorder %s34, 11
      %p94 = por %p92, %p93
      %p96 = scmp.ne.s32.totalorder %s81, %s95
      %p97 = scmp.eq.s32.totalorder %s34, 0
      %p98 = por %p96, %p97
      %s100 = sadd.s32 %s99, 1
      %p103 = scmp.eq.s32.totalorder %s28, 11
      %p104 = scmp.ne.s32.totalorder %s99, %s101
      %p105 = scmp.eq.s32.totalorder %s28, 0
      %p106 = por %p104, %p105
      %p107 = scmp.ne.s32.totalorder %s99, %s101
      %p108 = scmp.eq.s32.totalorder %s33, 11
      %p109 = por %p107, %p108
      %p110 = scmp.ne.s32.totalorder %s101, %s102
      %p111 = scmp.eq.s32.totalorder %s33, 0
      %p112 = por %p110, %p111
      %p113 = scmp.ne.s32.totalorder %s101, %s102
      %p114 = scmp.eq.s32.totalorder %s34, 11
      %p115 = por %p113, %p114
      %p117 = scmp.ne.s32.totalorder %s102, %s116
      %p118 = scmp.eq.s32.totalorder %s34, 0
      %p119 = por %p117, %p118
      %s121 = sadd.s32 %s120, 1
      %p124 = scmp.eq.s32.totalorder %s28, 11
      %p125 = scmp.ne.s32.totalorder %s120, %s122
      %p126 = scmp.eq.s32.totalorder %s28, 0
      %p127 = por %p125, %p126
      %p128 = scmp.ne.s32.totalorder %s120, %s122
      %p129 = scmp.eq.s32.totalorder %s33, 11
      %p130 = por %p128, %p129
      %p131 = scmp.ne.s32.totalorder %s122, %s123
      %p132 = scmp.eq.s32.totalorder %s33, 0
      %p133 = por %p131, %p132
      %p134 = scmp.ne.s32.totalorder %s122, %s123
      %p135 = scmp.eq.s32.totalorder %s34, 11
      %p136 = por %p134, %p135
      %p138 = scmp.ne.s32.totalorder %s123, %s137
      %p139 = scmp.eq.s32.totalorder %s34, 0
      %p140 = por %p138, %p139
      %s142 = sadd.s32 %s141, 1
      %p145 = scmp.eq.s32.totalorder %s28, 11
      %p146 = scmp.ne.s32.totalorder %s141, %s143
      %p147 = scmp.eq.s32.totalorder %s28, 0
      %p148 = por %p146, %p147
      %p149 = scmp.ne.s32.totalorder %s141, %s143
      %p150 = scmp.eq.s32.totalorder %s33, 11
      %p151 = por %p149, %p150
      %p152 = scmp.ne.s32.totalorder %s143, %s144
      %p153 = scmp.eq.s32.totalorder %s33, 0
      %p154 = por %p152, %p153
      %p155 = scmp.ne.s32.totalorder %s143, %s144
      %p156 = scmp.eq.s32.totalorder %s34, 11
      %p157 = por %p155, %p156
      %p159 = scmp.ne.s32.totalorder %s144, %s158
      %p160 = scmp.eq.s32.totalorder %s34, 0
      %p161 = por %p159, %p160
      %s162 = ssub.s32 %s28, %s35
      %p163 = scmp.eq.s32.totalorder %s162, 0
      %s165 = sadd.s32 %s164, 1
      %s166 = scalar_select %p163, %s164, %s165
      %p169 = pneg %p163
      %p170 = scmp.eq.s32.totalorder %s28, 11
      %p171 = por %p169, %p170
      %p172 = scmp.ne.s32.totalorder %s164, %s167
      %p173 = scmp.eq.s32.totalorder %s28, 0
      %p174 = por %p172, %p173
      %p175 = scmp.ne.s32.totalorder %s164, %s167
      %p176 = scmp.eq.s32.totalorder %s33, 11
      %p177 = por %p175, %p176
      %p178 = scmp.ne.s32.totalorder %s167, %s168
      %p179 = scmp.eq.s32.totalorder %s33, 0
      %p180 = por %p178, %p179
      %p181 = scmp.ne.s32.totalorder %s167, %s168
      %p182 = scmp.eq.s32.totalorder %s34, 11
      %p183 = por %p181, %p182
      %p185 = scmp.ne.s32.totalorder %s168, %s184
      %p186 = scmp.eq.s32.totalorder %s34, 0
      %p187 = por %p185, %p186
      %s188 = ssub.s32 %s28, %s35
      %p189 = scmp.eq.s32.totalorder %s188, 0
      %s191 = sadd.s32 %s190, 1
      %s192 = scalar_select %p189, %s190, %s191
      %p195 = pneg %p189
      %p196 = scmp.eq.s32.totalorder %s28, 11
      %p197 = por %p195, %p196
      %p198 = scmp.ne.s32.totalorder %s190, %s193
      %p199 = scmp.eq.s32.totalorder %s28, 0
      %p200 = por %p198, %p199
      %p201 = scmp.ne.s32.totalorder %s190, %s193
      %p202 = scmp.eq.s32.totalorder %s33, 11
      %p203 = por %p201, %p202
      %p204 = scmp.ne.s32.totalorder %s193, %s194
      %p205 = scmp.eq.s32.totalorder %s33, 0
      %p206 = por %p204, %p205
      %p207 = scmp.ne.s32.totalorder %s193, %s194
      %p208 = scmp.eq.s32.totalorder %s34, 11
      %p209 = por %p207, %p208
      %p211 = scmp.ne.s32.totalorder %s194, %s210
      %p212 = scmp.eq.s32.totalorder %s34, 0
      %p213 = por %p211, %p212
      %s214 = ssub.s32 %s28, %s35
      %p215 = scmp.eq.s32.totalorder %s214, 0
      %s217 = sadd.s32 %s216, 1
      %s218 = scalar_select %p215, %s216, %s217
      %p221 = pneg %p215
      %p222 = scmp.eq.s32.totalorder %s28, 11
      %p223 = por %p221, %p222
      %p224 = scmp.ne.s32.totalorder %s216, %s219
      %p225 = scmp.eq.s32.totalorder %s28, 0
      %p226 = por %p224, %p225
      %p227 = scmp.ne.s32.totalorder %s216, %s219
      %p228 = scmp.eq.s32.totalorder %s33, 11
      %p229 = por %p227, %p228
      %p230 = scmp.ne.s32.totalorder %s219, %s220
      %p231 = scmp.eq.s32.totalorder %s33, 0
      %p232 = por %p230, %p231
      %p233 = scmp.ne.s32.totalorder %s219, %s220
      %p234 = scmp.eq.s32.totalorder %s34, 11
      %p235 = por %p233, %p234
      %p237 = scmp.ne.s32.totalorder %s220, %s236
      %p238 = scmp.eq.s32.totalorder %s34, 0
      %p239 = por %p237, %p238
      %s240 = ssub.s32 %s28, %s35
      %p241 = scmp.eq.s32.totalorder %s240, 0
      %s243 = sadd.s32 %s242, 1
      %s244 = scalar_select %p241, %s242, %s243
      %p247 = pneg %p241
      %p248 = scmp.eq.s32.totalorder %s28, 11
      %p249 = por %p247, %p248
      %p250 = scmp.ne.s32.totalorder %s242, %s245
      %p251 = scmp.eq.s32.totalorder %s28, 0
      %p252 = por %p250, %p251
      %p253 = scmp.ne.s32.totalorder %s242, %s245
      %p254 = scmp.eq.s32.totalorder %s33, 11
      %p255 = por %p253, %p254
      %p256 = scmp.ne.s32.totalorder %s245, %s246
      %p257 = scmp.eq.s32.totalorder %s33, 0
      %p258 = por %p256, %p257
      %p259 = scmp.ne.s32.totalorder %s245, %s246
      %p260 = scmp.eq.s32.totalorder %s34, 11
      %p261 = por %p259, %p260
      %p263 = scmp.ne.s32.totalorder %s246, %s262
      %p264 = scmp.eq.s32.totalorder %s34, 0
      %p265 = por %p263, %p264
      %s266 = ssub.s32 %s28, %s35
      %p267 = scmp.eq.s32.totalorder %s266, 0
      %s269 = sadd.s32 %s268, 1
      %s270 = scalar_select %p267, %s268, %s269
      %p273 = pneg %p267
      %p274 = scmp.eq.s32.totalorder %s28, 11
      %p275 = por %p273, %p274
      %p276 = scmp.ne.s32.totalorder %s268, %s271
      %p277 = scmp.eq.s32.totalorder %s28, 0
      %p278 = por %p276, %p277
      %p279 = scmp.ne.s32.totalorder %s268, %s271
      %p280 = scmp.eq.s32.totalorder %s33, 11
      %p281 = por %p279, %p280
      %p282 = scmp.ne.s32.totalorder %s271, %s272
      %p283 = scmp.eq.s32.totalorder %s33, 0
      %p284 = por %p282, %p283
      %p285 = scmp.ne.s32.totalorder %s271, %s272
      %p286 = scmp.eq.s32.totalorder %s34, 11
      %p287 = por %p285, %p286
      %p289 = scmp.ne.s32.totalorder %s272, %s288
      %p290 = scmp.eq.s32.totalorder %s34, 0
      %p291 = por %p289, %p290
      %s292 = ssub.s32 %s28, %s35
      %p293 = scmp.eq.s32.totalorder %s292, 0
      %s295 = sadd.s32 %s294, 1
      %s296 = scalar_select %p293, %s294, %s295
      %p299 = pneg %p293
      %p300 = scmp.eq.s32.totalorder %s28, 11
      %p301 = por %p299, %p300
      %p302 = scmp.ne.s32.totalorder %s294, %s297
      %p303 = scmp.eq.s32.totalorder %s28, 0
      %p304 = por %p302, %p303
      %p305 = scmp.ne.s32.totalorder %s294, %s297
      %p306 = scmp.eq.s32.totalorder %s33, 11
      %p307 = por %p305, %p306
      %p308 = scmp.ne.s32.totalorder %s297, %s298
      %p309 = scmp.eq.s32.totalorder %s33, 0
      %p310 = por %p308, %p309
      %p311 = scmp.ne.s32.totalorder %s297, %s298
      %p312 = scmp.eq.s32.totalorder %s34, 11
      %p313 = por %p311, %p312
      %p315 = scmp.ne.s32.totalorder %s298, %s314
      %p316 = scmp.eq.s32.totalorder %s34, 0
      %p317 = por %p315, %p316
      %s318 = ssub.s32 %s28, %s35
      %p319 = scmp.eq.s32.totalorder %s318, 0
      %s321 = sadd.s32 %s320, 1
      %s322 = scalar_select %p319, %s320, %s321
      %p325 = pneg %p319
      %p326 = scmp.eq.s32.totalorder %s28, 11
      %p327 = por %p325, %p326
      %p328 = scmp.ne.s32.totalorder %s320, %s323
      %p329 = scmp.eq.s32.totalorder %s28, 0
      %p330 = por %p328, %p329
      %p331 = scmp.ne.s32.totalorder %s320, %s323
      %p332 = scmp.eq.s32.totalorder %s33, 11
      %p333 = por %p331, %p332
      %p334 = scmp.ne.s32.totalorder %s323, %s324
      %p335 = scmp.eq.s32.totalorder %s33, 0
      %p336 = por %p334, %p335
      %p337 = scmp.ne.s32.totalorder %s323, %s324
      %p338 = scmp.eq.s32.totalorder %s34, 11
      %p339 = por %p337, %p338
      %p341 = scmp.ne.s32.totalorder %s324, %s340
      %p342 = scmp.eq.s32.totalorder %s34, 0
      %p343 = por %p341, %p342
      %s344 = ssub.s32 %s28, %s35
      %p345 = scmp.eq.s32.totalorder %s344, 0
      %s347 = sadd.s32 %s346, 1
      %s348 = scalar_select %p345, %s346, %s347
      %p351 = pneg %p345
      %p352 = scmp.eq.s32.totalorder %s28, 11
      %p353 = por %p351, %p352
      %p354 = scmp.ne.s32.totalorder %s346, %s349
      %p355 = scmp.eq.s32.totalorder %s28, 0
      %p356 = por %p354, %p355
      %p357 = scmp.ne.s32.totalorder %s346, %s349
      %p358 = scmp.eq.s32.totalorder %s33, 11
      %p359 = por %p357, %p358
      %p360 = scmp.ne.s32.totalorder %s349, %s350
      %p361 = scmp.eq.s32.totalorder %s33, 0
      %p362 = por %p360, %p361
      %p363 = scmp.ne.s32.totalorder %s349, %s350
      %p364 = scmp.eq.s32.totalorder %s34, 11
      %p365 = por %p363, %p364
      %p367 = scmp.ne.s32.totalorder %s350, %s366
      %p368 = scmp.eq.s32.totalorder %s34, 0
      %p369 = por %p367, %p368
      %s370 = ssub.s32 %s28, %s35
      %p371 = scmp.eq.s32.totalorder %s370, 0
      %s373 = sadd.s32 %s372, 1
      %s374 = scalar_select %p371, %s372, %s373
      %p377 = pneg %p371
      %p378 = scmp.eq.s32.totalorder %s28, 11
      %p379 = por %p377, %p378
      %p380 = scmp.ne.s32.totalorder %s372, %s375
      %p381 = scmp.eq.s32.totalorder %s28, 0
      %p382 = por %p380, %p381
      %p383 = scmp.ne.s32.totalorder %s372, %s375
      %p384 = scmp.eq.s32.totalorder %s33, 11
      %p385 = por %p383, %p384
      %p386 = scmp.ne.s32.totalorder %s375, %s376
      %p387 = scmp.eq.s32.totalorder %s33, 0
      %p388 = por %p386, %p387
      %p389 = scmp.ne.s32.totalorder %s375, %s376
      %p390 = scmp.eq.s32.totalorder %s34, 11
      %p391 = por %p389, %p390
      %p393 = scmp.ne.s32.totalorder %s376, %s392
      %p394 = scmp.eq.s32.totalorder %s34, 0
      %p395 = por %p393, %p394
      %s396 = ssub.s32 %s28, %s35
      %p397 = scmp.eq.s32.totalorder %s396, 0
      %s399 = sadd.s32 %s398, 1
      %s400 = scalar_select %p397, %s398, %s399
      %p403 = pneg %p397
      %p404 = scmp.eq.s32.totalorder %s28, 11
      %p405 = por %p403, %p404
      %p406 = scmp.ne.s32.totalorder %s398, %s401
      %p407 = scmp.eq.s32.totalorder %s28, 0
      %p408 = por %p406, %p407
      %p409 = scmp.ne.s32.totalorder %s398, %s401
      %p410 = scmp.eq.s32.totalorder %s33, 11
      %p411 = por %p409, %p410
      %p412 = scmp.ne.s32.totalorder %s401, %s402
      %p413 = scmp.eq.s32.totalorder %s33, 0
      %p414 = por %p412, %p413
      %p415 = scmp.ne.s32.totalorder %s401, %s402
      %p416 = scmp.eq.s32.totalorder %s34, 11
      %p417 = por %p415, %p416
      %p419 = scmp.ne.s32.totalorder %s402, %s418
      %p420 = scmp.eq.s32.totalorder %s34, 0
      %p421 = por %p419, %p420
      %s422 = ssub.s32 %s28, %s35
      %p423 = scmp.eq.s32.totalorder %s422, 0
      %s425 = sadd.s32 %s424, 1
      %s426 = scalar_select %p423, %s424, %s425
      %p429 = pneg %p423
      %p430 = scmp.eq.s32.totalorder %s28, 11
      %p431 = por %p429, %p430
      %p432 = scmp.ne.s32.totalorder %s424, %s427
      %p433 = scmp.eq.s32.totalorder %s28, 0
      %p434 = por %p432, %p433
      %p435 = scmp.ne.s32.totalorder %s424, %s427
      %p436 = scmp.eq.s32.totalorder %s33, 11
      %p437 = por %p435, %p436
      %p438 = scmp.ne.s32.totalorder %s427, %s428
      %p439 = scmp.eq.s32.totalorder %s33, 0
      %p440 = por %p438, %p439
      %p441 = scmp.ne.s32.totalorder %s427, %s428
      %p442 = scmp.eq.s32.totalorder %s34, 11
      %p443 = por %p441, %p442
      %p445 = scmp.ne.s32.totalorder %s428, %s444
      %p446 = scmp.eq.s32.totalorder %s34, 0
      %p447 = por %p445, %p446
      %s448 = ssub.s32 %s28, %s35
      %p449 = scmp.eq.s32.totalorder %s448, 0
      %s451 = sadd.s32 %s450, 1
      %s452 = scalar_select %p449, %s450, %s451
      %p455 = pneg %p449
      %p456 = scmp.eq.s32.totalorder %s28, 11
      %p457 = por %p455, %p456
      %p458 = scmp.ne.s32.totalorder %s450, %s453
      %p459 = scmp.eq.s32.totalorder %s28, 0
      %p460 = por %p458, %p459
      %p461 = scmp.ne.s32.totalorder %s450, %s453
      %p462 = scmp.eq.s32.totalorder %s33, 11
      %p463 = por %p461, %p462
      %p464 = scmp.ne.s32.totalorder %s453, %s454
      %p465 = scmp.eq.s32.totalorder %s33, 0
      %p466 = por %p464, %p465
      %p467 = scmp.ne.s32.totalorder %s453, %s454
      %p468 = scmp.eq.s32.totalorder %s34, 11
      %p469 = por %p467, %p468
      %p471 = scmp.ne.s32.totalorder %s454, %s470
      %p472 = scmp.eq.s32.totalorder %s34, 0
      %p473 = por %p471, %p472
      %s475 = sadd.s32 %s474, 1
      %p478 = scmp.eq.s32.totalorder %s28, 11
      %p479 = scmp.ne.s32.totalorder %s474, %s476
      %p480 = scmp.eq.s32.totalorder %s28, 0
      %p481 = por %p479, %p480
      %p482 = scmp.ne.s32.totalorder %s474, %s476
      %p483 = scmp.eq.s32.totalorder %s33, 11
      %p484 = por %p482, %p483
      %p485 = scmp.ne.s32.totalorder %s476, %s477
      %p486 = scmp.eq.s32.totalorder %s33, 0
      %p487 = por %p485, %p486
      %p488 = scmp.ne.s32.totalorder %s476, %s477
      %p489 = scmp.eq.s32.totalorder %s34, 11
      %p490 = por %p488, %p489
      %p492 = scmp.ne.s32.totalorder %s477, %s491
      %p493 = scmp.eq.s32.totalorder %s34, 0
      %p494 = por %p492, %p493
      %s496 = sadd.s32 %s495, 1
      %p499 = scmp.eq.s32.totalorder %s28, 11
      %p500 = scmp.ne.s32.totalorder %s495, %s497
      %p501 = scmp.eq.s32.totalorder %s28, 0
      %p502 = por %p500, %p501
      %p503 = scmp.ne.s32.totalorder %s495, %s497
      %p504 = scmp.eq.s32.totalorder %s33, 11
      %p505 = por %p503, %p504
      %p506 = scmp.ne.s32.totalorder %s497, %s498
      %p507 = scmp.eq.s32.totalorder %s33, 0
      %p508 = por %p506, %p507
      %p509 = scmp.ne.s32.totalorder %s497, %s498
      %p510 = scmp.eq.s32.totalorder %s34, 11
      %p511 = por %p509, %p510
      %p513 = scmp.ne.s32.totalorder %s498, %s512
      %p514 = scmp.eq.s32.totalorder %s34, 0
      %p515 = por %p513, %p514
      %s517 = sadd.s32 %s516, 1
      %p520 = scmp.eq.s32.totalorder %s28, 11
      %p521 = scmp.ne.s32.totalorder %s516, %s518
      %p522 = scmp.eq.s32.totalorder %s28, 0
      %p523 = por %p521, %p522
      %p524 = scmp.ne.s32.totalorder %s516, %s518
      %p525 = scmp.eq.s32.totalorder %s33, 11
      %p526 = por %p524, %p525
      %p527 = scmp.ne.s32.totalorder %s518, %s519
      %p528 = scmp.eq.s32.totalorder %s33, 0
      %p529 = por %p527, %p528
      %p530 = scmp.ne.s32.totalorder %s518, %s519
      %p531 = scmp.eq.s32.totalorder %s34, 11
      %p532 = por %p530, %p531
      %p534 = scmp.ne.s32.totalorder %s519, %s533
      %p535 = scmp.eq.s32.totalorder %s34, 0
      %p536 = por %p534, %p535
      %s538 = sadd.s32 %s537, 1
      %p541 = scmp.eq.s32.totalorder %s28, 11
      %p542 = scmp.ne.s32.totalorder %s537, %s539
      %p543 = scmp.eq.s32.totalorder %s28, 0
      %p544 = por %p542, %p543
      %p545 = scmp.ne.s32.totalorder %s537, %s539
      %p546 = scmp.eq.s32.totalorder %s33, 11
      %p547 = por %p545, %p546
      %p548 = scmp.ne.s32.totalorder %s539, %s540
      %p549 = scmp.eq.s32.totalorder %s33, 0
      %p550 = por %p548, %p549
      %p551 = scmp.ne.s32.totalorder %s539, %s540
      %p552 = scmp.eq.s32.totalorder %s34, 11
      %p553 = por %p551, %p552
      %p555 = scmp.ne.s32.totalorder %s540, %s554
      %p556 = scmp.eq.s32.totalorder %s34, 0
      %p557 = por %p555, %p556
      %p558 = scmp.le.s32.totalorder 1, %s28
      %p559 = scmp.lt.s32.totalorder %s28, 13
      %p560 = pnand %p558, %p559
      %p561 = pneg %p560
      // Predicated region
      $region9: #{encode_image.1} parent=5 // pred_check
        _
      $region10: #{encode_image.1} parent=5 // pred_check_branch
        %563 = sbr.rel (%p560) target = $region12
      $region11: #{encode_image.1} parent=5 // pred_region
        %s564 = ssub.s32 %s28, 1
        // Predicated region
        $region13: #{encode_image.1} parent=11 // pred_check
          %p565 = pneg %p49
        $region14: #{encode_image.1} parent=11 // pred_check_branch
          %567 = sbr.rel (%p565) target = $region16
        $region15: #{encode_image.1} parent=11 // pred_region
          _
        $region16: #{encode_image.1} parent=11 // pred_fallthru
          _
        // Predicated region
        $region17: #{encode_image.1} parent=11 // pred_check
          %p568 = pneg %p70
        $region18: #{encode_image.1} parent=11 // pred_check_branch
          %570 = sbr.rel (%p568) target = $region20
        $region19: #{encode_image.1} parent=11 // pred_region
          _
        $region20: #{encode_image.1} parent=11 // pred_fallthru
          _
        // Predicated region
        $region21: #{encode_image.1} parent=11 // pred_check
          %p571 = pneg %p91
        $region22: #{encode_image.1} parent=11 // pred_check_branch
          %573 = sbr.rel (%p571) target = $region24
        $region23: #{encode_image.1} parent=11 // pred_region
          _
        $region24: #{encode_image.1} parent=11 // pred_fallthru
          _
        // Predicated region
        $region25: #{encode_image.1} parent=11 // pred_check
          %p574 = pneg %p112
        $region26: #{encode_image.1} parent=11 // pred_check_branch
          %576 = sbr.rel (%p574) target = $region28
        $region27: #{encode_image.1} parent=11 // pred_region
          _
        $region28: #{encode_image.1} parent=11 // pred_fallthru
          _
        // Predicated region
        $region29: #{encode_image.1} parent=11 // pred_check
          %p577 = pneg %p133
        $region30: #{encode_image.1} parent=11 // pred_check_branch
          %579 = sbr.rel (%p577) target = $region32
        $region31: #{encode_image.1} parent=11 // pred_region
          _
        $region32: #{encode_image.1} parent=11 // pred_fallthru
          _
        // Predicated region
        $region33: #{encode_image.1} parent=11 // pred_check
          %p580 = pneg %p154
        $region34: #{encode_image.1} parent=11 // pred_check_branch
          %582 = sbr.rel (%p580) target = $region36
        $region35: #{encode_image.1} parent=11 // pred_region
          _
        $region36: #{encode_image.1} parent=11 // pred_fallthru
          _
        // Predicated region
        $region37: #{encode_image.1} parent=11 // pred_check
          %p583 = pneg %p487
        $region38: #{encode_image.1} parent=11 // pred_check_branch
          %585 = sbr.rel (%p583) target = $region40
        $region39: #{encode_image.1} parent=11 // pred_region
          _
        $region40: #{encode_image.1} parent=11 // pred_fallthru
          _
        // Predicated region
        $region41: #{encode_image.1} parent=11 // pred_check
          %p586 = pneg %p508
        $region42: #{encode_image.1} parent=11 // pred_check_branch
          %588 = sbr.rel (%p586) target = $region44
        $region43: #{encode_image.1} parent=11 // pred_region
          _
        $region44: #{encode_image.1} parent=11 // pred_fallthru
          _
        // Predicated region
        $region45: #{encode_image.1} parent=11 // pred_check
          %p589 = pneg %p529
        $region46: #{encode_image.1} parent=11 // pred_check_branch
          %591 = sbr.rel (%p589) target = $region48
        $region47: #{encode_image.1} parent=11 // pred_region
          _
        $region48: #{encode_image.1} parent=11 // pred_fallthru
          _
      $region12: #{encode_image.1} parent=5 // pred_fallthru
        _
      %p592 = scmp.lt.s32.totalorder %s28, 12
      // Predicated region
      $region49: #{encode_image.1} parent=5 // pred_check
        %p593 = pneg %p592
      $region50: #{encode_image.1} parent=5 // pred_check_branch
        %595 = sbr.rel (%p593) target = $region52
      $region51: #{encode_image.1} parent=5 // pred_region
        // Predicated region
        $region53: #{encode_image.1} parent=51 // pred_check
          %p596 = pneg %p174
        $region54: #{encode_image.1} parent=51 // pred_check_branch
          %598 = sbr.rel (%p596) target = $region56
        $region55: #{encode_image.1} parent=51 // pred_region
          %p599 = scmp.lt.s32.totalorder %s28, 11
          %s600 = scalar_select %p599, %s28, 11
          %s601 = scalar_lea.vmem %s6, %s600
        $region56: #{encode_image.1} parent=51 // pred_fallthru
          _
        // Predicated region
        $region57: #{encode_image.1} parent=51 // pred_check
          %p602 = pneg %p200
        $region58: #{encode_image.1} parent=51 // pred_check_branch
          %604 = sbr.rel (%p602) target = $region60
        $region59: #{encode_image.1} parent=51 // pred_region
          %p605 = scmp.lt.s32.totalorder %s28, 11
          %s606 = scalar_select %p605, %s28, 11
          %s607 = scalar_lea.vmem %s7, %s606
        $region60: #{encode_image.1} parent=51 // pred_fallthru
          _
        // Predicated region
        $region61: #{encode_image.1} parent=51 // pred_check
          %p608 = pneg %p226
        $region62: #{encode_image.1} parent=51 // pred_check_branch
          %610 = sbr.rel (%p608) target = $region64
        $region63: #{encode_image.1} parent=51 // pred_region
          %p611 = scmp.lt.s32.totalorder %s28, 11
          %s612 = scalar_select %p611, %s28, 11
          %s613 = smul.addr %s612, 4
          %s614 = smul.addr %s613, 8
          %s615 = scalar_lea.vmem %s8, %s614
        $region64: #{encode_image.1} parent=51 // pred_fallthru
          _
        // Predicated region
        $region65: #{encode_image.1} parent=51 // pred_check
          %p616 = pneg %p252
        $region66: #{encode_image.1} parent=51 // pred_check_branch
          %618 = sbr.rel (%p616) target = $region68
        $region67: #{encode_image.1} parent=51 // pred_region
          %p619 = scmp.lt.s32.totalorder %s28, 11
          %s620 = scalar_select %p619, %s28, 11
          %s621 = scalar_lea.vmem %s9, %s620
        $region68: #{encode_image.1} parent=51 // pred_fallthru
          _
        // Predicated region
        $region69: #{encode_image.1} parent=51 // pred_check
          %p622 = pneg %p278
        $region70: #{encode_image.1} parent=51 // pred_check_branch
          %624 = sbr.rel (%p622) target = $region72
        $region71: #{encode_image.1} parent=51 // pred_region
          %p625 = scmp.lt.s32.totalorder %s28, 11
          %s626 = scalar_select %p625, %s28, 11
          %s627 = smul.addr %s626, 4
          %s628 = smul.addr %s627, 8
          %s629 = scalar_lea.vmem %s10, %s628
        $region72: #{encode_image.1} parent=51 // pred_fallthru
          _
        // Predicated region
        $region73: #{encode_image.1} parent=51 // pred_check
          %p630 = pneg %p304
        $region74: #{encode_image.1} parent=51 // pred_check_branch
          %632 = sbr.rel (%p630) target = $region76
        $region75: #{encode_image.1} parent=51 // pred_region
          %p633 = scmp.lt.s32.totalorder %s28, 11
          %s634 = scalar_select %p633, %s28, 11
          %s635 = scalar_lea.vmem %s11, %s634
        $region76: #{encode_image.1} parent=51 // pred_fallthru
          _
        // Predicated region
        $region77: #{encode_image.1} parent=51 // pred_check
          %p636 = pneg %p330
        $region78: #{encode_image.1} parent=51 // pred_check_branch
          %638 = sbr.rel (%p636) target = $region80
        $region79: #{encode_image.1} parent=51 // pred_region
          %p639 = scmp.lt.s32.totalorder %s28, 11
          %s640 = scalar_select %p639, %s28, 11
          %s641 = scalar_lea.vmem %s12, %s640
        $region80: #{encode_image.1} parent=51 // pred_fallthru
          _
        // Predicated region
        $region81: #{encode_image.1} parent=51 // pred_check
          %p642 = pneg %p356
        $region82: #{encode_image.1} parent=51 // pred_check_branch
          %644 = sbr.rel (%p642) target = $region84
        $region83: #{encode_image.1} parent=51 // pred_region
          %p645 = scmp.lt.s32.totalorder %s28, 11
          %s646 = scalar_select %p645, %s28, 11
          %s647 = scalar_lea.vmem %s13, %s646
        $region84: #{encode_image.1} parent=51 // pred_fallthru
          _
        // Predicated region
        $region85: #{encode_image.1} parent=51 // pred_check
          %p648 = pneg %p382
        $region86: #{encode_image.1} parent=51 // pred_check_branch
          %650 = sbr.rel (%p648) target = $region88
        $region87: #{encode_image.1} parent=51 // pred_region
          %p651 = scmp.lt.s32.totalorder %s28, 11
          %s652 = scalar_select %p651, %s28, 11
          %s653 = smul.addr %s652, 4
          %s654 = smul.addr %s653, 8
          %s655 = scalar_lea.vmem %s14, %s654
        $region88: #{encode_image.1} parent=51 // pred_fallthru
          _
        // Predicated region
        $region89: #{encode_image.1} parent=51 // pred_check
          %p656 = pneg %p408
        $region90: #{encode_image.1} parent=51 // pred_check_branch
          %658 = sbr.rel (%p656) target = $region92
        $region91: #{encode_image.1} parent=51 // pred_region
          %p659 = scmp.lt.s32.totalorder %s28, 11
          %s660 = scalar_select %p659, %s28, 11
          %s661 = scalar_lea.vmem %s15, %s660
        $region92: #{encode_image.1} parent=51 // pred_fallthru
          _
        // Predicated region
        $region93: #{encode_image.1} parent=51 // pred_check
          %p662 = pneg %p434
        $region94: #{encode_image.1} parent=51 // pred_check_branch
          %664 = sbr.rel (%p662) target = $region96
        $region95: #{encode_image.1} parent=51 // pred_region
          %p665 = scmp.lt.s32.totalorder %s28, 11
          %s666 = scalar_select %p665, %s28, 11
          %s667 = smul.addr %s666, 16
          %s668 = smul.addr %s667, 8
          %s669 = scalar_lea.vmem %s16, %s668
        $region96: #{encode_image.1} parent=51 // pred_fallthru
          _
        // Predicated region
        $region97: #{encode_image.1} parent=51 // pred_check
          %p670 = pneg %p460
        $region98: #{encode_image.1} parent=51 // pred_check_branch
          %672 = sbr.rel (%p670) target = $region100
        $region99: #{encode_image.1} parent=51 // pred_region
          %p673 = scmp.lt.s32.totalorder %s28, 11
          %s674 = scalar_select %p673, %s28, 11
          %s675 = scalar_lea.vmem %s17, %s674
        $region100: #{encode_image.1} parent=51 // pred_fallthru
          _
      $region52: #{encode_image.1} parent=5 // pred_fallthru
        _
      %p676 = scmp.le.s32.totalorder 1, %s28
      %p677 = scmp.lt.s32.totalorder %s28, 13
      %p678 = pnand %p676, %p677
      %p679 = pneg %p678
      // Predicated region
      $region101: #{encode_image.1} parent=5 // pred_check
        _
      $region102: #{encode_image.1} parent=5 // pred_check_branch
        %681 = sbr.rel (%p678) target = $region104
      $region103: #{encode_image.1} parent=5 // pred_region
        %s682 = ssub.s32 %s28, 1
        %p683 = pneg %p49
        %p684 = pneg %p46
        %p685 = pneg %p70
        %p686 = pneg %p67
        %p687 = pneg %p91
        %p688 = pneg %p88
        %p689 = pneg %p112
        %p690 = pneg %p109
        %p691 = pneg %p133
        %p692 = pneg %p130
        %p693 = pneg %p154
        %p694 = pneg %p151
        %p695 = scmp.lt.s32.totalorder %s33, 11
        %s696 = scalar_select %p695, %s33, 11
        %s697 = scalar_lea.vmem %s6, %s696
        %p698 = pneg %p180
        %p699 = pneg %p177
        %p700 = scmp.lt.s32.totalorder %s33, 11
        %s701 = scalar_select %p700, %s33, 11
        %s702 = scalar_lea.vmem %s7, %s701
        %p703 = pneg %p206
        %p704 = pneg %p203
        %p705 = scmp.lt.s32.totalorder %s33, 11
        %s706 = scalar_select %p705, %s33, 11
        %s707 = smul.addr %s706, 4
        %s708 = smul.addr %s707, 8
        %s709 = scalar_lea.vmem %s8, %s708
        %p710 = pneg %p232
        %p711 = pneg %p229
        %p712 = scmp.lt.s32.totalorder %s33, 11
        %s713 = scalar_select %p712, %s33, 11
        %s714 = scalar_lea.vmem %s9, %s713
        %p715 = pneg %p258
        %p716 = pneg %p255
        %p717 = scmp.lt.s32.totalorder %s33, 11
        %s718 = scalar_select %p717, %s33, 11
        %s719 = smul.addr %s718, 4
        %s720 = smul.addr %s719, 8
        %s721 = scalar_lea.vmem %s10, %s720
        %p722 = pneg %p284
        %p723 = pneg %p281
        %p724 = scmp.lt.s32.totalorder %s33, 11
        %s725 = scalar_select %p724, %s33, 11
        %s726 = scalar_lea.vmem %s11, %s725
        %p727 = pneg %p310
        %p728 = pneg %p307
        %p729 = scmp.lt.s32.totalorder %s33, 11
        %s730 = scalar_select %p729, %s33, 11
        %s731 = scalar_lea.vmem %s12, %s730
        %p732 = pneg %p336
        %p733 = pneg %p333
        %p734 = scmp.lt.s32.totalorder %s33, 11
        %s735 = scalar_select %p734, %s33, 11
        %s736 = scalar_lea.vmem %s13, %s735
        %p737 = pneg %p362
        %p738 = pneg %p359
        %p739 = scmp.lt.s32.totalorder %s33, 11
        %s740 = scalar_select %p739, %s33, 11
        %s741 = smul.addr %s740, 4
        %s742 = smul.addr %s741, 8
        %s743 = scalar_lea.vmem %s14, %s742
        %p744 = pneg %p388
        %p745 = pneg %p385
        %p746 = scmp.lt.s32.totalorder %s33, 11
        %s747 = scalar_select %p746, %s33, 11
        %s748 = scalar_lea.vmem %s15, %s747
        %p749 = pneg %p414
        %p750 = pneg %p411
        %p751 = scmp.lt.s32.totalorder %s33, 11
        %s752 = scalar_select %p751, %s33, 11
        %s753 = smul.addr %s752, 16
        %s754 = smul.addr %s753, 8
        %s755 = scalar_lea.vmem %s16, %s754
        %p756 = pneg %p440
        %p757 = pneg %p437
        %p758 = scmp.lt.s32.totalorder %s33, 11
        %s759 = scalar_select %p758, %s33, 11
        %s760 = scalar_lea.vmem %s17, %s759
        %p761 = pneg %p466
        %p762 = pneg %p463
        %p763 = pneg %p487
        %p764 = pneg %p484
        %p765 = pneg %p508
        %p766 = pneg %p505
        %p767 = pneg %p529
        %p768 = pneg %p526
        %p769 = pneg %p550
        %p770 = pneg %p547
        %p771 = scmp.lt.s32.totalorder %s33, 11
        %s772 = scalar_select %p771, %s33, 11
        %s773 = scalar_lea.vmem %s6, %s772
        %p774 = scmp.lt.s32.totalorder %s33, 11
        %s775 = scalar_select %p774, %s33, 11
        %s776 = scalar_lea.vmem %s7, %s775
        %p777 = scmp.lt.s32.totalorder %s33, 11
        %s778 = scalar_select %p777, %s33, 11
        %s779 = smul.addr %s778, 4
        %s780 = smul.addr %s779, 8
        %s781 = scalar_lea.vmem %s8, %s780
        %p782 = scmp.lt.s32.totalorder %s33, 11
        %s783 = scalar_select %p782, %s33, 11
        %s784 = scalar_lea.vmem %s9, %s783
        %p785 = scmp.lt.s32.totalorder %s33, 11
        %s786 = scalar_select %p785, %s33, 11
        %s787 = smul.addr %s786, 4
        %s788 = smul.addr %s787, 8
        %s789 = scalar_lea.vmem %s10, %s788
        %p790 = scmp.lt.s32.totalorder %s33, 11
        %s791 = scalar_select %p790, %s33, 11
        %s792 = scalar_lea.vmem %s11, %s791
        %p793 = scmp.lt.s32.totalorder %s33, 11
        %s794 = scalar_select %p793, %s33, 11
        %s795 = scalar_lea.vmem %s12, %s794
        %p796 = scmp.lt.s32.totalorder %s33, 11
        %s797 = scalar_select %p796, %s33, 11
        %s798 = scalar_lea.vmem %s13, %s797
        %p799 = scmp.lt.s32.totalorder %s33, 11
        %s800 = scalar_select %p799, %s33, 11
        %s801 = smul.addr %s800, 4
        %s802 = smul.addr %s801, 8
        %s803 = scalar_lea.vmem %s14, %s802
        %p804 = scmp.lt.s32.totalorder %s33, 11
        %s805 = scalar_select %p804, %s33, 11
        %s806 = scalar_lea.vmem %s15, %s805
        %p807 = scmp.lt.s32.totalorder %s33, 11
        %s808 = scalar_select %p807, %s33, 11
        %s809 = smul.addr %s808, 16
        %s810 = smul.addr %s809, 8
        %s811 = scalar_lea.vmem %s16, %s810
        %p812 = scmp.lt.s32.totalorder %s33, 11
        %s813 = scalar_select %p812, %s33, 11
        %s814 = scalar_lea.vmem %s17, %s813
        %p815 = scmp.eq.s32.totalorder %s33, 0
        // Predicated region
        $region105: #{encode_image.1} parent=103 // pred_check
          %p816 = pneg %p815
        $region106: #{encode_image.1} parent=103 // pred_check_branch
          %818 = sbr.rel (%p816) target = $region108
        $region107: #{encode_image.1} parent=103 // pred_region
          %v819 = vld [vmem:[%s0] sm:$0xff]
          %v820 = vld [vmem:[%s0 + $0x8] sm:$0xff]
          %v821 = vld [vmem:[%s1] sm:$0xff]
          %v822 = vld [vmem:[%s1 + $0x8] sm:$0xff]
          %v823 = vld [vmem:[%s1 + $0x10] sm:$0xff]
          %v824 = vld [vmem:[%s1 + $0x18] sm:$0xff]
          %v825 = vld [vmem:[%s1 + $0x20] sm:$0xff]
          %v826 = vld [vmem:[%s1 + $0x28] sm:$0xff]
          %v827 = vld [vmem:[%s1 + $0x30] sm:$0xff]
          %v828 = vld [vmem:[%s1 + $0x38] sm:$0xff]
          %v829 = vld [vmem:[%s1 + $0x40] sm:$0xff]
          %v830 = vld [vmem:[%s1 + $0x48] sm:$0xff]
          %v831 = vld [vmem:[%s1 + $0x50] sm:$0xff]
          %v832 = vld [vmem:[%s1 + $0x58] sm:$0xff]
          %v833 = vld [vmem:[%s1 + $0x60] sm:$0xff]
          %v834 = vld [vmem:[%s1 + $0x68] sm:$0xff]
          %v835 = vld [vmem:[%s1 + $0x70] sm:$0xff]
          %v836 = vld [vmem:[%s1 + $0x78] sm:$0xff]
          %v837 = vld [vmem:[%s1 + $0x80] sm:$0xff]
          %v838 = vld [vmem:[%s1 + $0x88] sm:$0xff]
          %v839 = vld [vmem:[%s1 + $0x90] sm:$0xff]
          %v840 = vld [vmem:[%s1 + $0x98] sm:$0xff]
          %v841 = vld [vmem:[%s1 + $0xa0] sm:$0xff]
          %v842 = vld [vmem:[%s1 + $0xa8] sm:$0xff]
          %v843 = vld [vmem:[%s1 + $0xb0] sm:$0xff]
          %v844 = vld [vmem:[%s1 + $0xb8] sm:$0xff]
          %vm845 = vcmask 523264
          %v847 = vsel %vm845, %v820, 0
          %849 = vmatpush.msra.mxu0 %v836
          %850 = vmatpush.msra.mxu0 %v835
          %851 = vmatpush.msra.mxu0 %v834
          %852 = vmatpush.msra.mxu0 %v833
          %853 = vmatpush.msra.mxu0 %v832
          %854 = vmatpush.msra.mxu0 %v831
          %855 = vmatpush.msra.mxu0 %v830
          %856 = vmatpush.msra.mxu0 %v829
          %857 = vmatpush.msra.mxu0 %v828
          %858 = vmatpush.msra.mxu0 %v827
          %859 = vmatpush.msra.mxu0 %v826
          %860 = vmatpush.msra.mxu0 %v825
          %861 = vmatpush.msra.mxu0 %v824
          %862 = vmatpush.msra.mxu0 %v823
          %863 = vmatpush.msra.mxu0 %v822
          %864 = vmatpush.msra.mxu0 %v821
          %865 = vmatmul.f32.gmra.mxu0 %v819
          %v866 = vpop.f32.mrf.mxu0
          %v867 = vadd.f32 0.0, %v866
          %868 = vdwg.mxu0
          %869 = vmatpush.msra.mxu0 0.0
          %870 = vmatpush.msra.mxu0 0.0
          %871 = vmatpush.msra.mxu0 0.0
          %872 = vmatpush.msra.mxu0 0.0
          %873 = vmatpush.msra.mxu0 0.0
          %874 = vmatpush.msra.mxu0 0.0
          %875 = vmatpush.msra.mxu0 0.0
          %876 = vmatpush.msra.mxu0 0.0
          %877 = vmatpush.msra.mxu0 %v844
          %878 = vmatpush.msra.mxu0 %v843
          %879 = vmatpush.msra.mxu0 %v842
          %880 = vmatpush.msra.mxu0 %v841
          %881 = vmatpush.msra.mxu0 %v840
          %882 = vmatpush.msra.mxu0 %v839
          %883 = vmatpush.msra.mxu0 %v838
          %884 = vmatpush.msra.mxu0 %v837
          %885 = vmatmul.f32.gmra.mxu0 %v847
          %v886 = vpop.f32.mrf.mxu0
          %v887 = vadd.f32 %v867, %v886
          %888 = vdwg.mxu0
          %v889 = vld [vmem:[%s3] sm:$0x1f]
          %v890 = vld [vmem:[%s2] sm:$0x1]
          %v891 = vadd.f32 %v890, %v889
          %vm892 = vcmask 253952
          %893 = vst.msk [vmem:[#allocation2] sm:$0x1] %vm892, %v891
          %v895 = vrot.slane %v889, 1
          %v897 = vadd.f32 %v887, %v895
          %vm898 = vcmask 257024
          %899 = vst.msk [vmem:[#allocation2 + $0x1] sm:$0xf] %vm898, %v897
          %s900 = scalar_lea.vmem [#allocation2], 8
          %901 = vst.msk [vmem:[%s900] sm:$0x1] %vm892, %v891
          %v902 = vrot.slane %v889, 5
          %v904 = vadd.f32 %v887, %v902
          %vm905 = vcmask 261124
          %906 = vst.msk [vmem:[%s900 - $0x3] sm:$0xf0] %vm905, %v904
          %v907 = vld [vmem:[#allocation2] sm:$0x1f]
          %v908 = vld [vmem:[%s4] sm:$0x1]
          %v909 = vld [vmem:[%s5] sm:$0x1]
          %vm910 = vcmask 258048
          %v911 = vsel %vm910, %v907, 0.0
          %912 = vadd.xlane.f32.xlu0 %v911
          %v913 = vpop.xlane.xlu0 %912
          %v914 = vrcp.pop 32.0
          %v915 = vmul.f32 32.0, %v914
          %v916 = vsub.f32 1.0, %v915
          %v917 = vmul.f32 %v914, %v916
          %v918 = vadd.f32 %v914, %v917
          %vm919 = vweird.f32 %v914
          %v920 = vsel %vm919, %v914, %v918
          %v921 = vmul.f32 %v913, %v920
          %v922 = vsub.f32 %v907, %v921
          %v923 = vmul.f32 %v922, %v922
          %v924 = vsel %vm910, %v923, 0.0
          %925 = vadd.xlane.f32.xlu0 %v924
          %v926 = vpop.xlane.xlu0 %925
          %v927 = vmul.f32 %v926, %v920
          %v928 = vadd.f32 %v927, 1e-05
          %v929 = vrsqrt.pop %v928
          %v930 = vmul.f32 %v929, %v928
          %v931 = vmul.f32 %v930, %v929
          %v932 = vmul.f32 0.5, %v931
          %v933 = vsub.f32 1.5, %v932
          %v934 = vmul.f32 %v929, %v933
          %vm935 = vweird.f32 %v928
          %vm936 = vweird.f32 %v929
          %vm937 = vmor %vm935, %vm936
          %v938 = vsel %vm937, %v929, %v934
          %v939 = vmul.f32 %v922, %v938
          %v941 = vperm.slane %v908, 0
          %v943 = vmul.f32 %v939, %v941
          %v945 = vperm.slane %v909, 0
          %v947 = vadd.f32 %v943, %v945
          %948 = vst.msk [vmem:[#allocation2] sm:$0x1f] %vm910, %v947
          %v949 = vld [vmem:[%s900] sm:$0x1f]
          %v950 = vld [vmem:[%s4] sm:$0x1]
          %v951 = vld [vmem:[%s5] sm:$0x1]
          %v952 = vsel %vm910, %v949, 0.0
          %953 = vadd.xlane.f32.xlu0 %v952
          %v954 = vpop.xlane.xlu0 %953
          %v955 = vmul.f32 %v954, %v920
          %v956 = vsub.f32 %v949, %v955
          %v957 = vmul.f32 %v956, %v956
          %v958 = vsel %vm910, %v957, 0.0
          %959 = vadd.xlane.f32.xlu0 %v958
          %v960 = vpop.xlane.xlu0 %959
          %v961 = vmul.f32 %v960, %v920
          %v962 = vadd.f32 %v961, 1e-05
          %v963 = vrsqrt.pop %v962
          %v964 = vmul.f32 %v963, %v962
          %v965 = vmul.f32 %v964, %v963
          %v966 = vmul.f32 0.5, %v965
          %v967 = vsub.f32 1.5, %v966
          %v968 = vmul.f32 %v963, %v967
          %vm969 = vweird.f32 %v962
          %vm970 = vweird.f32 %v963
          %vm971 = vmor %vm969, %vm970
          %v972 = vsel %vm971, %v963, %v968
          %v973 = vmul.f32 %v956, %v972
          %v975 = vperm.slane %v950, 0
          %v977 = vmul.f32 %v973, %v975
          %v979 = vperm.slane %v951, 0
          %v981 = vadd.f32 %v977, %v979
          %982 = vst.msk [vmem:[%s900] sm:$0x1f] %vm910, %v981
        $region108: #{encode_image.1} parent=103 // pred_fallthru
          _
        %v983 = vld [vmem:[%s773] sm:$0x1]
        %v984 = vld [vmem:[%s776] sm:$0x1]
        %v985 = vld [vmem:[%s781] sm:$0xff]
        %v986 = vld [vmem:[%s781 + $0x8] sm:$0xff]
        %v987 = vld [vmem:[%s781 + $0x10] sm:$0xff]
        %v988 = vld [vmem:[%s781 + $0x18] sm:$0xff]
        %v989 = vld [vmem:[%s784] sm:$0x1]
        %v990 = vld [vmem:[%s789] sm:$0xff]
        %v991 = vld [vmem:[%s789 + $0x8] sm:$0xff]
        %v992 = vld [vmem:[%s789 + $0x10] sm:$0xff]
        %v993 = vld [vmem:[%s789 + $0x18] sm:$0xff]
        %v994 = vld [vmem:[%s792] sm:$0x1]
        %v995 = vld [vmem:[%s795] sm:$0x1]
        %v996 = vld [vmem:[%s798] sm:$0x1]
        %v997 = vld [vmem:[%s803] sm:$0xff]
        %v998 = vld [vmem:[%s803 + $0x8] sm:$0xff]
        %v999 = vld [vmem:[%s803 + $0x10] sm:$0xff]
        %v1000 = vld [vmem:[%s803 + $0x18] sm:$0xff]
        %v1001 = vld [vmem:[%s806] sm:$0x1]
        %v1002 = vld [vmem:[%s811] sm:$0xff]
        %v1003 = vld [vmem:[%s811 + $0x8] sm:$0xff]
        %v1004 = vld [vmem:[%s811 + $0x10] sm:$0xff]
        %v1005 = vld [vmem:[%s811 + $0x18] sm:$0xff]
        %v1006 = vld [vmem:[%s811 + $0x20] sm:$0xff]
        %v1007 = vld [vmem:[%s811 + $0x28] sm:$0xff]
        %v1008 = vld [vmem:[%s811 + $0x30] sm:$0xff]
        %v1009 = vld [vmem:[%s811 + $0x38] sm:$0xff]
        %v1010 = vld [vmem:[%s811 + $0x40] sm:$0xff]
        %v1011 = vld [vmem:[%s811 + $0x48] sm:$0xff]
        %v1012 = vld [vmem:[%s811 + $0x50] sm:$0xff]
        %v1013 = vld [vmem:[%s811 + $0x58] sm:$0xff]
        %v1014 = vld [vmem:[%s811 + $0x60] sm:$0xff]
        %v1015 = vld [vmem:[%s811 + $0x68] sm:$0xff]
        %v1016 = vld [vmem:[%s811 + $0x70] sm:$0xff]
        %v1017 = vld [vmem:[%s811 + $0x78] sm:$0xff]
        %v1018 = vld [vmem:[%s814] sm:$0x1]
        %v1019 = vld [vmem:[#allocation2] sm:$0x1f]
        %vm1020 = vcmask 258048
        %v1021 = vsel %vm1020, %v1019, 0.0
        %1022 = vadd.xlane.f32.xlu0 %v1021
        %v1023 = vpop.xlane.xlu0 %1022
        %v1024 = vrcp.pop 32.0
        %v1025 = vmul.f32 32.0, %v1024
        %v1026 = vsub.f32 1.0, %v1025
        %v1027 = vmul.f32 %v1024, %v1026
        %v1028 = vadd.f32 %v1024, %v1027
        %vm1029 = vweird.f32 %v1024
        %v1030 = vsel %vm1029, %v1024, %v1028
        %v1031 = vmul.f32 %v1023, %v1030
        %v1032 = vsub.f32 %v1019, %v1031
        %v1033 = vmul.f32 %v1032, %v1032
        %v1034 = vsel %vm1020, %v1033, 0.0
        %1035 = vadd.xlane.f32.xlu0 %v1034
        %v1036 = vpop.xlane.xlu0 %1035
        %v1037 = vmul.f32 %v1036, %v1030
        %v1038 = vadd.f32 %v1037, 1e-05
        %v1039 = vrsqrt.pop %v1038
        %v1040 = vmul.f32 %v1039, %v1038
        %v1041 = vmul.f32 %v1040, %v1039
        %v1042 = vmul.f32 0.5, %v1041
        %v1043 = vsub.f32 1.5, %v1042
        %v1044 = vmul.f32 %v1039, %v1043
        %vm1045 = vweird.f32 %v1038
        %vm1046 = vweird.f32 %v1039
        %vm1047 = vmor %vm1045, %vm1046
        %v1048 = vsel %vm1047, %v1039, %v1044
        %v1049 = vmul.f32 %v1032, %v1048
        %v1051 = vperm.slane %v983, 0
        %v1053 = vmul.f32 %v1049, %v1051
        %v1055 = vperm.slane %v984, 0
        %v1057 = vadd.f32 %v1053, %v1055
        %v1059 = vperm.slane %v989, 0
        %vm1061 = vcmask 261120
        %v1063 = vsel %vm1061, %v1057, 0
        %1065 = vmatpush.msra.mxu0 0.0
        %1066 = vmatpush.msra.mxu0 0.0
        %1067 = vmatpush.msra.mxu0 0.0
        %1068 = vmatpush.msra.mxu0 0.0
        %1069 = vmatpush.msra.mxu0 0.0
        %1070 = vmatpush.msra.mxu0 0.0
        %1071 = vmatpush.msra.mxu0 0.0
        %1072 = vmatpush.msra.mxu0 0.0
        %1073 = vmatpush.msra.mxu0 0.0
        %1074 = vmatpush.msra.mxu0 0.0
        %1075 = vmatpush.msra.mxu0 0.0
        %1076 = vmatpush.msra.mxu0 0.0
        %1077 = vmatpush.msra.mxu0 %v988
        %1078 = vmatpush.msra.mxu0 %v987
        %1079 = vmatpush.msra.mxu0 %v986
        %1080 = vmatpush.msra.mxu0 %v985
        %1081 = vmatmul.f32.gmra.mxu0 %v1063
        %v1082 = vpop.f32.mrf.mxu0
        %v1083 = vadd.f32 %v1059, %v1082
        %1084 = vdwg.mxu0
        %1086 = vrot.lane.b32.xlu0 %v1083, 96
        %v1087 = vpop.permute.xlu0 %1086
        %vm1088 = vcmask 64512
        %v1089 = vsel %vm1088, %v1083, 0
        %v1091 = vsel %vm1088, %v1087, 0
        %1093 = vmatpush.xpose.msra.mxu0 0.0
        %1094 = vmatpush.xpose.msra.mxu0 0.0
        %1095 = vmatpush.xpose.msra.mxu0 0.0
        %1096 = vmatpush.xpose.msra.mxu0 0.0
        %1097 = vmatpush.xpose.msra.mxu0 0.0
        %1098 = vmatpush.xpose.msra.mxu0 0.0
        %1099 = vmatpush.xpose.msra.mxu0 0.0
        %1100 = vmatpush.xpose.msra.mxu0 0.0
        %1101 = vmatpush.xpose.msra.mxu0 0.0
        %1102 = vmatpush.xpose.msra.mxu0 0.0
        %1103 = vmatpush.xpose.msra.mxu0 0.0
        %1104 = vmatpush.xpose.msra.mxu0 0.0
        %1105 = vmatpush.xpose.msra.mxu0 0.0
        %1106 = vmatpush.xpose.msra.mxu0 0.0
        %1107 = vmatpush.xpose.msra.mxu0 0.0
        %1108 = vmatpush.xpose.msra.mxu0 %v1091
        %1109 = vmatmul.f32.gmra.mxu0 %v1089
        %v1110 = vpop.f32.mrf.mxu0
        %v1111 = vadd.f32 0.0, %v1110
        %1112 = vdwg.mxu0
        %v1113 = vmul.f32 %v1111, 0.35355338
        %vm1114 = vcmask 36864
        %v1115 = vsel %vm1114, %v1113, -inf
        %1116 = vmax.xlane.f32.xlu0 %v1115
        %v1117 = vpop.xlane.xlu0 %1116
        %v1118 = vsub.f32 %v1113, %v1117
        %v1119 = vmul.f32 %v1118, 1.442695
        %v1120 = vpow.pop %v1119
        %v1121 = vsel %vm1114, %v1120, 0.0
        %1122 = vadd.xlane.f32.xlu0 %v1121
        %v1123 = vpop.xlane.xlu0 %1122
        %v1124 = vrcp.pop %v1123
        %v1125 = vmul.f32 %v1120, %v1124
        %1126 = vrot.lane.b32.xlu0 %v1083, 64
        %v1127 = vpop.permute.xlu0 %1126
        %vm1128 = vcmask 39936
        %v1130 = vsel %vm1128, %v1125, 0
        %vm1132 = vcmask 1044480
        %v1133 = vsel %vm1132, %v1127, 0
        %1135 = vmatpush.msra.mxu0 0.0
        %1136 = vmatpush.msra.mxu0 0.0
        %1137 = vmatpush.msra.mxu0 0.0
        %1138 = vmatpush.msra.mxu0 0.0
        %1139 = vmatpush.msra.mxu0 0.0
        %1140 = vmatpush.msra.mxu0 0.0
        %1141 = vmatpush.msra.mxu0 0.0
        %1142 = vmatpush.msra.mxu0 0.0
        %1143 = vmatpush.msra.mxu0 0.0
        %1144 = vmatpush.msra.mxu0 0.0
        %1145 = vmatpush.msra.mxu0 0.0
        %1146 = vmatpush.msra.mxu0 0.0
        %1147 = vmatpush.msra.mxu0 0.0
        %1148 = vmatpush.msra.mxu0 0.0
        %1149 = vmatpush.msra.mxu0 0.0
        %1150 = vmatpush.msra.mxu0 %v1133
        %1151 = vmatmul.f32.gmra.mxu0 %v1130
        %v1152 = vpop.f32.mrf.mxu0
        %v1153 = vadd.f32 0.0, %v1152
        %1154 = vdwg.mxu0
        %1155 = vrot.lane.b32.xlu0 %v1083, 120
        %v1156 = vpop.permute.xlu0 %1155
        %1157 = vrot.lane.b32.xlu0 %v1083, 88
        %v1158 = vpop.permute.xlu0 %1157
        %v1159 = vsel %vm1088, %v1156, 0
        %v1161 = vsel %vm1088, %v1158, 0
        %1163 = vmatpush.xpose.msra.mxu0 0.0
        %1164 = vmatpush.xpose.msra.mxu0 0.0
        %1165 = vmatpush.xpose.msra.mxu0 0.0
        %1166 = vmatpush.xpose.msra.mxu0 0.0
        %1167 = vmatpush.xpose.msra.mxu0 0.0
        %1168 = vmatpush.xpose.msra.mxu0 0.0
        %1169 = vmatpush.xpose.msra.mxu0 0.0
        %1170 = vmatpush.xpose.msra.mxu0 0.0
        %1171 = vmatpush.xpose.msra.mxu0 0.0
        %1172 = vmatpush.xpose.msra.mxu0 0.0
        %1173 = vmatpush.xpose.msra.mxu0 0.0
        %1174 = vmatpush.xpose.msra.mxu0 0.0
        %1175 = vmatpush.xpose.msra.mxu0 0.0
        %1176 = vmatpush.xpose.msra.mxu0 0.0
        %1177 = vmatpush.xpose.msra.mxu0 0.0
        %1178 = vmatpush.xpose.msra.mxu0 %v1161
        %1179 = vmatmul.f32.gmra.mxu0 %v1159
        %v1180 = vpop.f32.mrf.mxu0
        %v1181 = vadd.f32 0.0, %v1180
        %1182 = vdwg.mxu0
        %v1183 = vmul.f32 %v1181, 0.35355338
        %v1184 = vsel %vm1114, %v1183, -inf
        %1185 = vmax.xlane.f32.xlu0 %v1184
        %v1186 = vpop.xlane.xlu0 %1185
        %v1187 = vsub.f32 %v1183, %v1186
        %v1188 = vmul.f32 %v1187, 1.442695
        %v1189 = vpow.pop %v1188
        %v1190 = vsel %vm1114, %v1189, 0.0
        %1191 = vadd.xlane.f32.xlu0 %v1190
        %v1192 = vpop.xlane.xlu0 %1191
        %v1193 = vrcp.pop %v1192
        %v1194 = vmul.f32 %v1189, %v1193
        %1195 = vrot.lane.b32.xlu0 %v1083, 56
        %v1196 = vpop.permute.xlu0 %1195
        %v1198 = vsel %vm1128, %v1194, 0
        %v1200 = vsel %vm1132, %v1196, 0
        %1202 = vmatpush.msra.mxu0 0.0
        %1203 = vmatpush.msra.mxu0 0.0
        %1204 = vmatpush.msra.mxu0 0.0
        %1205 = vmatpush.msra.mxu0 0.0
        %1206 = vmatpush.msra.mxu0 0.0
        %1207 = vmatpush.msra.mxu0 0.0
        %1208 = vmatpush.msra.mxu0 0.0
        %1209 = vmatpush.msra.mxu0 0.0
        %1210 = vmatpush.msra.mxu0 0.0
        %1211 = vmatpush.msra.mxu0 0.0
        %1212 = vmatpush.msra.mxu0 0.0
        %1213 = vmatpush.msra.mxu0 0.0
        %1214 = vmatpush.msra.mxu0 0.0
        %1215 = vmatpush.msra.mxu0 0.0
        %1216 = vmatpush.msra.mxu0 0.0
        %1217 = vmatpush.msra.mxu0 %v1200
        %1218 = vmatmul.f32.gmra.mxu0 %v1198
        %v1219 = vpop.f32.mrf.mxu0
        %v1220 = vadd.f32 0.0, %v1219
        %1221 = vdwg.mxu0
        %1222 = vrot.lane.b32.xlu0 %v1083, 112
        %v1223 = vpop.permute.xlu0 %1222
        %1224 = vrot.lane.b32.xlu0 %v1083, 80
        %v1225 = vpop.permute.xlu0 %1224
        %v1226 = vsel %vm1088, %v1223, 0
        %v1228 = vsel %vm1088, %v1225, 0
        %1230 = vmatpush.xpose.msra.mxu0 0.0
        %1231 = vmatpush.xpose.msra.mxu0 0.0
        %1232 = vmatpush.xpose.msra.mxu0 0.0
        %1233 = vmatpush.xpose.msra.mxu0 0.0
        %1234 = vmatpush.xpose.msra.mxu0 0.0
        %1235 = vmatpush.xpose.msra.mxu0 0.0
        %1236 = vmatpush.xpose.msra.mxu0 0.0
        %1237 = vmatpush.xpose.msra.mxu0 0.0
        %1238 = vmatpush.xpose.msra.mxu0 0.0
        %1239 = vmatpush.xpose.msra.mxu0 0.0
        %1240 = vmatpush.xpose.msra.mxu0 0.0
        %1241 = vmatpush.xpose.msra.mxu0 0.0
        %1242 = vmatpush.xpose.msra.mxu0 0.0
        %1243 = vmatpush.xpose.msra.mxu0 0.0
        %1244 = vmatpush.xpose.msra.mxu0 0.0
        %1245 = vmatpush.xpose.msra.mxu0 %v1228
        %1246 = vmatmul.f32.gmra.mxu0 %v1226
        %v1247 = vpop.f32.mrf.mxu0
        %v1248 = vadd.f32 0.0, %v1247
        %1249 = vdwg.mxu0
        %v1250 = vmul.f32 %v1248, 0.35355338
        %v1251 = vsel %vm1114, %v1250, -inf
        %1252 = vmax.xlane.f32.xlu0 %v1251
        %v1253 = vpop.xlane.xlu0 %1252
        %v1254 = vsub.f32 %v1250, %v1253
        %v1255 = vmul.f32 %v1254, 1.442695
        %v1256 = vpow.pop %v1255
        %v1257 = vsel %vm1114, %v1256, 0.0
        %1258 = vadd.xlane.f32.xlu0 %v1257
        %v1259 = vpop.xlane.xlu0 %1258
        %v1260 = vrcp.pop %v1259
        %v1261 = vmul.f32 %v1256, %v1260
        %1262 = vrot.lane.b32.xlu0 %v1083, 48
        %v1263 = vpop.permute.xlu0 %1262
        %v1265 = vsel %vm1128, %v1261, 0
        %v1267 = vsel %vm1132, %v1263, 0
        %1269 = vmatpush.msra.mxu0 0.0
        %1270 = vmatpush.msra.mxu0 0.0
        %1271 = vmatpush.msra.mxu0 0.0
        %1272 = vmatpush.msra.mxu0 0.0
        %1273 = vmatpush.msra.mxu0 0.0
        %1274 = vmatpush.msra.mxu0 0.0
        %1275 = vmatpush.msra.mxu0 0.0
        %1276 = vmatpush.msra.mxu0 0.0
        %1277 = vmatpush.msra.mxu0 0.0
        %1278 = vmatpush.msra.mxu0 0.0
        %1279 = vmatpush.msra.mxu0 0.0
        %1280 = vmatpush.msra.mxu0 0.0
        %1281 = vmatpush.msra.mxu0 0.0
        %1282 = vmatpush.msra.mxu0 0.0
        %1283 = vmatpush.msra.mxu0 0.0
        %1284 = vmatpush.msra.mxu0 %v1267
        %1285 = vmatmul.f32.gmra.mxu0 %v1265
        %v1286 = vpop.f32.mrf.mxu0
        %v1287 = vadd.f32 0.0, %v1286
        %1288 = vdwg.mxu0
        %1289 = vrot.lane.b32.xlu0 %v1083, 104
        %v1290 = vpop.permute.xlu0 %1289
        %1291 = vrot.lane.b32.xlu0 %v1083, 72
        %v1292 = vpop.permute.xlu0 %1291
        %v1293 = vsel %vm1088, %v1290, 0
        %v1295 = vsel %vm1088, %v1292, 0
        %1297 = vmatpush.xpose.msra.mxu0 0.0
        %1298 = vmatpush.xpose.msra.mxu0 0.0
        %1299 = vmatpush.xpose.msra.mxu0 0.0
        %1300 = vmatpush.xpose.msra.mxu0 0.0
        %1301 = vmatpush.xpose.msra.mxu0 0.0
        %1302 = vmatpush.xpose.msra.mxu0 0.0
        %1303 = vmatpush.xpose.msra.mxu0 0.0
        %1304 = vmatpush.xpose.msra.mxu0 0.0
        %1305 = vmatpush.xpose.msra.mxu0 0.0
        %1306 = vmatpush.xpose.msra.mxu0 0.0
        %1307 = vmatpush.xpose.msra.mxu0 0.0
        %1308 = vmatpush.xpose.msra.mxu0 0.0
        %1309 = vmatpush.xpose.msra.mxu0 0.0
        %1310 = vmatpush.xpose.msra.mxu0 0.0
        %1311 = vmatpush.xpose.msra.mxu0 0.0
        %1312 = vmatpush.xpose.msra.mxu0 %v1295
        %1313 = vmatmul.f32.gmra.mxu0 %v1293
        %v1314 = vpop.f32.mrf.mxu0
        %v1315 = vadd.f32 0.0, %v1314
        %1316 = vdwg.mxu0
        %v1317 = vmul.f32 %v1315, 0.35355338
        %v1318 = vsel %vm1114, %v1317, -inf
        %1319 = vmax.xlane.f32.xlu0 %v1318
        %v1320 = vpop.xlane.xlu0 %1319
        %v1321 = vsub.f32 %v1317, %v1320
        %v1322 = vmul.f32 %v1321, 1.442695
        %v1323 = vpow.pop %v1322
        %v1324 = vsel %vm1114, %v1323, 0.0
        %1325 = vadd.xlane.f32.xlu0 %v1324
        %v1326 = vpop.xlane.xlu0 %1325
        %v1327 = vrcp.pop %v1326
        %v1328 = vmul.f32 %v1323, %v1327
        %1329 = vrot.lane.b32.xlu0 %v1083, 40
        %v1330 = vpop.permute.xlu0 %1329
        %v1332 = vsel %vm1128, %v1328, 0
        %v1334 = vsel %vm1132, %v1330, 0
        %1336 = vmatpush.msra.mxu0 0.0
        %1337 = vmatpush.msra.mxu0 0.0
        %1338 = vmatpush.msra.mxu0 0.0
        %1339 = vmatpush.msra.mxu0 0.0
        %1340 = vmatpush.msra.mxu0 0.0
        %1341 = vmatpush.msra.mxu0 0.0
        %1342 = vmatpush.msra.mxu0 0.0
        %1343 = vmatpush.msra.mxu0 0.0
        %1344 = vmatpush.msra.mxu0 0.0
        %1345 = vmatpush.msra.mxu0 0.0
        %1346 = vmatpush.msra.mxu0 0.0
        %1347 = vmatpush.msra.mxu0 0.0
        %1348 = vmatpush.msra.mxu0 0.0
        %1349 = vmatpush.msra.mxu0 0.0
        %1350 = vmatpush.msra.mxu0 0.0
        %1351 = vmatpush.msra.mxu0 %v1334
        %1352 = vmatmul.f32.gmra.mxu0 %v1332
        %v1353 = vpop.f32.mrf.mxu0
        %v1354 = vadd.f32 0.0, %v1353
        %1355 = vdwg.mxu0
        %1357 = vrot.lane.b32.xlu0 %v1220, 8
        %v1358 = vpop.permute.xlu0 %1357
        %1361 = vrot.lane.b32.xlu0 %v1287, 16
        %v1362 = vpop.permute.xlu0 %1361
        %1365 = vrot.lane.b32.xlu0 %v1354, 24
        %v1366 = vpop.permute.xlu0 %1365
        %v1368 = vsel %vm1088, %v1153, %v1358
        %vm1369 = vcmask 130048
        %v1370 = vsel %vm1369, %v1368, %v1362
        %vm1371 = vcmask 195584
        %v1372 = vsel %vm1371, %v1370, %v1366
        %v1374 = vsel %vm1061, %v1372, 0
        %1376 = vmatpush.msra.mxu0 0.0
        %1377 = vmatpush.msra.mxu0 0.0
        %1378 = vmatpush.msra.mxu0 0.0
        %1379 = vmatpush.msra.mxu0 0.0
        %1380 = vmatpush.msra.mxu0 0.0
        %1381 = vmatpush.msra.mxu0 0.0
        %1382 = vmatpush.msra.mxu0 0.0
        %1383 = vmatpush.msra.mxu0 0.0
        %1384 = vmatpush.msra.mxu0 0.0
        %1385 = vmatpush.msra.mxu0 0.0
        %1386 = vmatpush.msra.mxu0 0.0
        %1387 = vmatpush.msra.mxu0 0.0
        %1388 = vmatpush.msra.mxu0 %v993
        %1389 = vmatpush.msra.mxu0 %v992
        %1390 = vmatpush.msra.mxu0 %v991
        %1391 = vmatpush.msra.mxu0 %v990
        %1392 = vmatmul.f32.gmra.mxu0 %v1374
        %v1393 = vpop.f32.mrf.mxu0
        %v1394 = vadd.f32 0.0, %v1393
        %1395 = vdwg.mxu0
        %v1396 = vadd.f32 %v1019, %v1394
        %v1398 = vperm.slane %v994, 0
        %v1400 = vadd.f32 %v1396, %v1398
        %v1401 = vsel %vm1020, %v1400, 0.0
        %1402 = vadd.xlane.f32.xlu0 %v1401
        %v1403 = vpop.xlane.xlu0 %1402
        %v1404 = vmul.f32 %v1403, %v1030
        %v1405 = vsub.f32 %v1400, %v1404
        %v1406 = vmul.f32 %v1405, %v1405
        %v1407 = vsel %vm1020, %v1406, 0.0
        %1408 = vadd.xlane.f32.xlu0 %v1407
        %v1409 = vpop.xlane.xlu0 %1408
        %v1410 = vmul.f32 %v1409, %v1030
        %v1411 = vadd.f32 %v1410, 1e-05
        %v1412 = vrsqrt.pop %v1411
        %v1413 = vmul.f32 %v1412, %v1411
        %v1414 = vmul.f32 %v1413, %v1412
        %v1415 = vmul.f32 0.5, %v1414
        %v1416 = vsub.f32 1.5, %v1415
        %v1417 = vmul.f32 %v1412, %v1416
        %vm1418 = vweird.f32 %v1411
        %vm1419 = vweird.f32 %v1412
        %vm1420 = vmor %vm1418, %vm1419
        %v1421 = vsel %vm1420, %v1412, %v1417
        %v1422 = vmul.f32 %v1405, %v1421
        %v1424 = vperm.slane %v995, 0
        %v1426 = vmul.f32 %v1422, %v1424
        %v1428 = vperm.slane %v996, 0
        %v1430 = vadd.f32 %v1426, %v1428
        %v1432 = vperm.slane %v1001, 0
        %v1435 = vsel %vm1061, %v1430, 0
        %1437 = vmatpush.msra.mxu0 0.0
        %1438 = vmatpush.msra.mxu0 0.0
        %1439 = vmatpush.msra.mxu0 0.0
        %1440 = vmatpush.msra.mxu0 0.0
        %1441 = vmatpush.msra.mxu0 0.0
        %1442 = vmatpush.msra.mxu0 0.0
        %1443 = vmatpush.msra.mxu0 0.0
        %1444 = vmatpush.msra.mxu0 0.0
        %1445 = vmatpush.msra.mxu0 0.0
        %1446 = vmatpush.msra.mxu0 0.0
        %1447 = vmatpush.msra.mxu0 0.0
        %1448 = vmatpush.msra.mxu0 0.0
        %1449 = vmatpush.msra.mxu0 %v1000
        %1450 = vmatpush.msra.mxu0 %v999
        %1451 = vmatpush.msra.mxu0 %v998
        %1452 = vmatpush.msra.mxu0 %v997
        %1453 = vmatmul.f32.gmra.mxu0 %v1435
        %v1454 = vpop.f32.mrf.mxu0
        %v1455 = vadd.f32 %v1432, %v1454
        %1456 = vdwg.mxu0
        %v1457 = vmul.f32 %v1455, 1.702
        %v1458 = vxor.u32 %v1457, 2147483648
        %v1459 = vmul.f32 %v1458, 1.442695
        %v1460 = vpow.pop %v1459
        %v1461 = vadd.f32 %v1460, 1.0
        %v1462 = vrcp.pop %v1461
        %v1463 = vmul.f32 %v1461, %v1462
        %v1464 = vsub.f32 1.0, %v1463
        %v1465 = vmul.f32 %v1462, %v1464
        %v1466 = vadd.f32 %v1462, %v1465
        %vm1467 = vweird.f32 %v1461
        %vm1468 = vweird.f32 %v1462
        %vm1469 = vmor %vm1467, %vm1468
        %v1470 = vsel %vm1469, %v1462, %v1466
        %v1471 = vand.u32 2147483647, %v1461
        %vm1472 = vcmp.eq.f32.partialorder %v1471, 8.507059e+37
        %v1473 = vand.u32 %v1461, 2147483648
        %v1474 = vor.u32 1.1754944e-38, %v1473
        %v1475 = vsel %vm1472, %v1474, %v1470
        %v1476 = vmul.f32 1.0, %v1475
        %v1477 = vmul.f32 %v1455, %v1476
        %1478 = vmatpush.msra.mxu0 %v1017
        %1479 = vmatpush.msra.mxu0 %v1016
        %1480 = vmatpush.msra.mxu0 %v1015
        %1481 = vmatpush.msra.mxu0 %v1014
        %1482 = vmatpush.msra.mxu0 %v1013
        %1483 = vmatpush.msra.mxu0 %v1012
        %1484 = vmatpush.msra.mxu0 %v1011
        %1485 = vmatpush.msra.mxu0 %v1010
        %1486 = vmatpush.msra.mxu0 %v1009
        %1487 = vmatpush.msra.mxu0 %v1008
        %1488 = vmatpush.msra.mxu0 %v1007
        %1489 = vmatpush.msra.mxu0 %v1006
        %1490 = vmatpush.msra.mxu0 %v1005
        %1491 = vmatpush.msra.mxu0 %v1004
        %1492 = vmatpush.msra.mxu0 %v1003
        %1493 = vmatpush.msra.mxu0 %v1002
        %1494 = vmatmul.f32.gmra.mxu0 %v1477
        %v1495 = vpop.f32.mrf.mxu0
        %v1496 = vadd.f32 0.0, %v1495
        %1497 = vdwg.mxu0
        %v1498 = vadd.f32 %v1400, %v1496
        %v1500 = vperm.slane %v1018, 0
        %v1502 = vadd.f32 %v1498, %v1500
        %1503 = vst.msk [vmem:[#allocation2] sm:$0x1f] %vm1020, %v1502
        %s1504 = scalar_lea.vmem [#allocation2], 8
        %v1505 = vld [vmem:[%s1504] sm:$0x1f]
        %v1506 = vsel %vm1020, %v1505, 0.0
        %1507 = vadd.xlane.f32.xlu0 %v1506
        %v1508 = vpop.xlane.xlu0 %1507
        %v1509 = vmul.f32 %v1508, %v1030
        %v1510 = vsub.f32 %v1505, %v1509
        %v1511 = vmul.f32 %v1510, %v1510
        %v1512 = vsel %vm1020, %v1511, 0.0
        %1513 = vadd.xlane.f32.xlu0 %v1512
        %v1514 = vpop.xlane.xlu0 %1513
        %v1515 = vmul.f32 %v1514, %v1030
        %v1516 = vadd.f32 %v1515, 1e-05
        %v1517 = vrsqrt.pop %v1516
        %v1518 = vmul.f32 %v1517, %v1516
        %v1519 = vmul.f32 %v1518, %v1517
        %v1520 = vmul.f32 0.5, %v1519
        %v1521 = vsub.f32 1.5, %v1520
        %v1522 = vmul.f32 %v1517, %v1521
        %vm1523 = vweird.f32 %v1516
        %vm1524 = vweird.f32 %v1517
        %vm1525 = vmor %vm1523, %vm1524
        %v1526 = vsel %vm1525, %v1517, %v1522
        %v1527 = vmul.f32 %v1510, %v1526
        %v1528 = vmul.f32 %v1527, %v1051
        %v1529 = vadd.f32 %v1528, %v1055
        %v1531 = vsel %vm1061, %v1529, 0
        %1533 = vmatpush.msra.mxu0 0.0
        %1534 = vmatpush.msra.mxu0 0.0
        %1535 = vmatpush.msra.mxu0 0.0
        %1536 = vmatpush.msra.mxu0 0.0
        %1537 = vmatpush.msra.mxu0 0.0
        %1538 = vmatpush.msra.mxu0 0.0
        %1539 = vmatpush.msra.mxu0 0.0
        %1540 = vmatpush.msra.mxu0 0.0
        %1541 = vmatpush.msra.mxu0 0.0
        %1542 = vmatpush.msra.mxu0 0.0
        %1543 = vmatpush.msra.mxu0 0.0
        %1544 = vmatpush.msra.mxu0 0.0
        %1545 = vmatpush.msra.mxu0 %v988
        %1546 = vmatpush.msra.mxu0 %v987
        %1547 = vmatpush.msra.mxu0 %v986
        %1548 = vmatpush.msra.mxu0 %v985
        %1549 = vmatmul.f32.gmra.mxu0 %v1531
        %v1550 = vpop.f32.mrf.mxu0
        %v1551 = vadd.f32 %v1059, %v1550
        %1552 = vdwg.mxu0
        %1554 = vrot.lane.b32.xlu0 %v1551, 96
        %v1555 = vpop.permute.xlu0 %1554
        %v1556 = vsel %vm1088, %v1551, 0
        %v1558 = vsel %vm1088, %v1555, 0
        %1560 = vmatpush.xpose.msra.mxu0 0.0
        %1561 = vmatpush.xpose.msra.mxu0 0.0
        %1562 = vmatpush.xpose.msra.mxu0 0.0
        %1563 = vmatpush.xpose.msra.mxu0 0.0
        %1564 = vmatpush.xpose.msra.mxu0 0.0
        %1565 = vmatpush.xpose.msra.mxu0 0.0
        %1566 = vmatpush.xpose.msra.mxu0 0.0
        %1567 = vmatpush.xpose.msra.mxu0 0.0
        %1568 = vmatpush.xpose.msra.mxu0 0.0
        %1569 = vmatpush.xpose.msra.mxu0 0.0
        %1570 = vmatpush.xpose.msra.mxu0 0.0
        %1571 = vmatpush.xpose.msra.mxu0 0.0
        %1572 = vmatpush.xpose.msra.mxu0 0.0
        %1573 = vmatpush.xpose.msra.mxu0 0.0
        %1574 = vmatpush.xpose.msra.mxu0 0.0
        %1575 = vmatpush.xpose.msra.mxu0 %v1558
        %1576 = vmatmul.f32.gmra.mxu0 %v1556
        %v1577 = vpop.f32.mrf.mxu0
        %v1578 = vadd.f32 0.0, %v1577
        %1579 = vdwg.mxu0
        %v1580 = vmul.f32 %v1578, 0.35355338
        %v1581 = vsel %vm1114, %v1580, -inf
        %1582 = vmax.xlane.f32.xlu0 %v1581
        %v1583 = vpop.xlane.xlu0 %1582
        %v1584 = vsub.f32 %v1580, %v1583
        %v1585 = vmul.f32 %v1584, 1.442695
        %v1586 = vpow.pop %v1585
        %v1587 = vsel %vm1114, %v1586, 0.0
        %1588 = vadd.xlane.f32.xlu0 %v1587
        %v1589 = vpop.xlane.xlu0 %1588
        %v1590 = vrcp.pop %v1589
        %v1591 = vmul.f32 %v1586, %v1590
        %1592 = vrot.lane.b32.xlu0 %v1551, 64
        %v1593 = vpop.permute.xlu0 %1592
        %v1595 = vsel %vm1128, %v1591, 0
        %v1597 = vsel %vm1132, %v1593, 0
        %1599 = vmatpush.msra.mxu0 0.0
        %1600 = vmatpush.msra.mxu0 0.0
        %1601 = vmatpush.msra.mxu0 0.0
        %1602 = vmatpush.msra.mxu0 0.0
        %1603 = vmatpush.msra.mxu0 0.0
        %1604 = vmatpush.msra.mxu0 0.0
        %1605 = vmatpush.msra.mxu0 0.0
        %1606 = vmatpush.msra.mxu0 0.0
        %1607 = vmatpush.msra.mxu0 0.0
        %1608 = vmatpush.msra.mxu0 0.0
        %1609 = vmatpush.msra.mxu0 0.0
        %1610 = vmatpush.msra.mxu0 0.0
        %1611 = vmatpush.msra.mxu0 0.0
        %1612 = vmatpush.msra.mxu0 0.0
        %1613 = vmatpush.msra.mxu0 0.0
        %1614 = vmatpush.msra.mxu0 %v1597
        %1615 = vmatmul.f32.gmra.mxu0 %v1595
        %v1616 = vpop.f32.mrf.mxu0
        %v1617 = vadd.f32 0.0, %v1616
        %1618 = vdwg.mxu0
        %1619 = vrot.lane.b32.xlu0 %v1551, 120
        %v1620 = vpop.permute.xlu0 %1619
        %1621 = vrot.lane.b32.xlu0 %v1551, 88
        %v1622 = vpop.permute.xlu0 %1621
        %v1623 = vsel %vm1088, %v1620, 0
        %v1625 = vsel %vm1088, %v1622, 0
        %1627 = vmatpush.xpose.msra.mxu0 0.0
        %1628 = vmatpush.xpose.msra.mxu0 0.0
        %1629 = vmatpush.xpose.msra.mxu0 0.0
        %1630 = vmatpush.xpose.msra.mxu0 0.0
        %1631 = vmatpush.xpose.msra.mxu0 0.0
        %1632 = vmatpush.xpose.msra.mxu0 0.0
        %1633 = vmatpush.xpose.msra.mxu0 0.0
        %1634 = vmatpush.xpose.msra.mxu0 0.0
        %1635 = vmatpush.xpose.msra.mxu0 0.0
        %1636 = vmatpush.xpose.msra.mxu0 0.0
        %1637 = vmatpush.xpose.msra.mxu0 0.0
        %1638 = vmatpush.xpose.msra.mxu0 0.0
        %1639 = vmatpush.xpose.msra.mxu0 0.0
        %1640 = vmatpush.xpose.msra.mxu0 0.0
        %1641 = vmatpush.xpose.msra.mxu0 0.0
        %1642 = vmatpush.xpose.msra.mxu0 %v1625
        %1643 = vmatmul.f32.gmra.mxu0 %v1623
        %v1644 = vpop.f32.mrf.mxu0
        %v1645 = vadd.f32 0.0, %v1644
        %1646 = vdwg.mxu0
        %v1647 = vmul.f32 %v1645, 0.35355338
        %v1648 = vsel %vm1114, %v1647, -inf
        %1649 = vmax.xlane.f32.xlu0 %v1648
        %v1650 = vpop.xlane.xlu0 %1649
        %v1651 = vsub.f32 %v1647, %v1650
        %v1652 = vmul.f32 %v1651, 1.442695
        %v1653 = vpow.pop %v1652
        %v1654 = vsel %vm1114, %v1653, 0.0
        %1655 = vadd.xlane.f32.xlu0 %v1654
        %v1656 = vpop.xlane.xlu0 %1655
        %v1657 = vrcp.pop %v1656
        %v1658 = vmul.f32 %v1653, %v1657
        %1659 = vrot.lane.b32.xlu0 %v1551, 56
        %v1660 = vpop.permute.xlu0 %1659
        %v1662 = vsel %vm1128, %v1658, 0
        %v1664 = vsel %vm1132, %v1660, 0
        %1666 = vmatpush.msra.mxu0 0.0
        %1667 = vmatpush.msra.mxu0 0.0
        %1668 = vmatpush.msra.mxu0 0.0
        %1669 = vmatpush.msra.mxu0 0.0
        %1670 = vmatpush.msra.mxu0 0.0
        %1671 = vmatpush.msra.mxu0 0.0
        %1672 = vmatpush.msra.mxu0 0.0
        %1673 = vmatpush.msra.mxu0 0.0
        %1674 = vmatpush.msra.mxu0 0.0
        %1675 = vmatpush.msra.mxu0 0.0
        %1676 = vmatpush.msra.mxu0 0.0
        %1677 = vmatpush.msra.mxu0 0.0
        %1678 = vmatpush.msra.mxu0 0.0
        %1679 = vmatpush.msra.mxu0 0.0
        %1680 = vmatpush.msra.mxu0 0.0
        %1681 = vmatpush.msra.mxu0 %v1664
        %1682 = vmatmul.f32.gmra.mxu0 %v1662
        %v1683 = vpop.f32.mrf.mxu0
        %v1684 = vadd.f32 0.0, %v1683
        %1685 = vdwg.mxu0
        %1686 = vrot.lane.b32.xlu0 %v1551, 112
        %v1687 = vpop.permute.xlu0 %1686
        %1688 = vrot.lane.b32.xlu0 %v1551, 80
        %v1689 = vpop.permute.xlu0 %1688
        %v1690 = vsel %vm1088, %v1687, 0
        %v1692 = vsel %vm1088, %v1689, 0
        %1694 = vmatpush.xpose.msra.mxu0 0.0
        %1695 = vmatpush.xpose.msra.mxu0 0.0
        %1696 = vmatpush.xpose.msra.mxu0 0.0
        %1697 = vmatpush.xpose.msra.mxu0 0.0
        %1698 = vmatpush.xpose.msra.mxu0 0.0
        %1699 = vmatpush.xpose.msra.mxu0 0.0
        %1700 = vmatpush.xpose.msra.mxu0 0.0
        %1701 = vmatpush.xpose.msra.mxu0 0.0
        %1702 = vmatpush.xpose.msra.mxu0 0.0
        %1703 = vmatpush.xpose.msra.mxu0 0.0
        %1704 = vmatpush.xpose.msra.mxu0 0.0
        %1705 = vmatpush.xpose.msra.mxu0 0.0
        %1706 = vmatpush.xpose.msra.mxu0 0.0
        %1707 = vmatpush.xpose.msra.mxu0 0.0
        %1708 = vmatpush.xpose.msra.mxu0 0.0
        %1709 = vmatpush.xpose.msra.mxu0 %v1692
        %1710 = vmatmul.f32.gmra.mxu0 %v1690
        %v1711 = vpop.f32.mrf.mxu0
        %v1712 = vadd.f32 0.0, %v1711
        %1713 = vdwg.mxu0
        %v1714 = vmul.f32 %v1712, 0.35355338
        %v1715 = vsel %vm1114, %v1714, -inf
        %1716 = vmax.xlane.f32.xlu0 %v1715
        %v1717 = vpop.xlane.xlu0 %1716
        %v1718 = vsub.f32 %v1714, %v1717
        %v1719 = vmul.f32 %v1718, 1.442695
        %v1720 = vpow.pop %v1719
        %v1721 = vsel %vm1114, %v1720, 0.0
        %1722 = vadd.xlane.f32.xlu0 %v1721
        %v1723 = vpop.xlane.xlu0 %1722
        %v1724 = vrcp.pop %v1723
        %v1725 = vmul.f32 %v1720, %v1724
        %1726 = vrot.lane.b32.xlu0 %v1551, 48
        %v1727 = vpop.permute.xlu0 %1726
        %v1729 = vsel %vm1128, %v1725, 0
        %v1731 = vsel %vm1132, %v1727, 0
        %1733 = vmatpush.msra.mxu0 0.0
        %1734 = vmatpush.msra.mxu0 0.0
        %1735 = vmatpush.msra.mxu0 0.0
        %1736 = vmatpush.msra.mxu0 0.0
        %1737 = vmatpush.msra.mxu0 0.0
        %1738 = vmatpush.msra.mxu0 0.0
        %1739 = vmatpush.msra.mxu0 0.0
        %1740 = vmatpush.msra.mxu0 0.0
        %1741 = vmatpush.msra.mxu0 0.0
        %1742 = vmatpush.msra.mxu0 0.0
        %1743 = vmatpush.msra.mxu0 0.0
        %1744 = vmatpush.msra.mxu0 0.0
        %1745 = vmatpush.msra.mxu0 0.0
        %1746 = vmatpush.msra.mxu0 0.0
        %1747 = vmatpush.msra.mxu0 0.0
        %1748 = vmatpush.msra.mxu0 %v1731
        %1749 = vmatmul.f32.gmra.mxu0 %v1729
        %v1750 = vpop.f32.mrf.mxu0
        %v1751 = vadd.f32 0.0, %v1750
        %1752 = vdwg.mxu0
        %1753 = vrot.lane.b32.xlu0 %v1551, 104
        %v1754 = vpop.permute.xlu0 %1753
        %1755 = vrot.lane.b32.xlu0 %v1551, 72
        %v1756 = vpop.permute.xlu0 %1755
        %v1757 = vsel %vm1088, %v1754, 0
        %v1759 = vsel %vm1088, %v1756, 0
        %1761 = vmatpush.xpose.msra.mxu0 0.0
        %1762 = vmatpush.xpose.msra.mxu0 0.0
        %1763 = vmatpush.xpose.msra.mxu0 0.0
        %1764 = vmatpush.xpose.msra.mxu0 0.0
        %1765 = vmatpush.xpose.msra.mxu0 0.0
        %1766 = vmatpush.xpose.msra.mxu0 0.0
        %1767 = vmatpush.xpose.msra.mxu0 0.0
        %1768 = vmatpush.xpose.msra.mxu0 0.0
        %1769 = vmatpush.xpose.msra.mxu0 0.0
        %1770 = vmatpush.xpose.msra.mxu0 0.0
        %1771 = vmatpush.xpose.msra.mxu0 0.0
        %1772 = vmatpush.xpose.msra.mxu0 0.0
        %1773 = vmatpush.xpose.msra.mxu0 0.0
        %1774 = vmatpush.xpose.msra.mxu0 0.0
        %1775 = vmatpush.xpose.msra.mxu0 0.0
        %1776 = vmatpush.xpose.msra.mxu0 %v1759
        %1777 = vmatmul.f32.gmra.mxu0 %v1757
        %v1778 = vpop.f32.mrf.mxu0
        %v1779 = vadd.f32 0.0, %v1778
        %1780 = vdwg.mxu0
        %v1781 = vmul.f32 %v1779, 0.35355338
        %v1782 = vsel %vm1114, %v1781, -inf
        %1783 = vmax.xlane.f32.xlu0 %v1782
        %v1784 = vpop.xlane.xlu0 %1783
        %v1785 = vsub.f32 %v1781, %v1784
        %v1786 = vmul.f32 %v1785, 1.442695
        %v1787 = vpow.pop %v1786
        %v1788 = vsel %vm1114, %v1787, 0.0
        %1789 = vadd.xlane.f32.xlu0 %v1788
        %v1790 = vpop.xlane.xlu0 %1789
        %v1791 = vrcp.pop %v1790
        %v1792 = vmul.f32 %v1787, %v1791
        %1793 = vrot.lane.b32.xlu0 %v1551, 40
        %v1794 = vpop.permute.xlu0 %1793
        %v1796 = vsel %vm1128, %v1792, 0
        %v1798 = vsel %vm1132, %v1794, 0
        %1800 = vmatpush.msra.mxu0 0.0
        %1801 = vmatpush.msra.mxu0 0.0
        %1802 = vmatpush.msra.mxu0 0.0
        %1803 = vmatpush.msra.mxu0 0.0
        %1804 = vmatpush.msra.mxu0 0.0
        %1805 = vmatpush.msra.mxu0 0.0
        %1806 = vmatpush.msra.mxu0 0.0
        %1807 = vmatpush.msra.mxu0 0.0
        %1808 = vmatpush.msra.mxu0 0.0
        %1809 = vmatpush.msra.mxu0 0.0
        %1810 = vmatpush.msra.mxu0 0.0
        %1811 = vmatpush.msra.mxu0 0.0
        %1812 = vmatpush.msra.mxu0 0.0
        %1813 = vmatpush.msra.mxu0 0.0
        %1814 = vmatpush.msra.mxu0 0.0
        %1815 = vmatpush.msra.mxu0 %v1798
        %1816 = vmatmul.f32.gmra.mxu0 %v1796
        %v1817 = vpop.f32.mrf.mxu0
        %v1818 = vadd.f32 0.0, %v1817
        %1819 = vdwg.mxu0
        %1821 = vrot.lane.b32.xlu0 %v1684, 8
        %v1822 = vpop.permute.xlu0 %1821
        %1825 = vrot.lane.b32.xlu0 %v1751, 16
        %v1826 = vpop.permute.xlu0 %1825
        %1829 = vrot.lane.b32.xlu0 %v1818, 24
        %v1830 = vpop.permute.xlu0 %1829
        %v1832 = vsel %vm1088, %v1617, %v1822
        %v1833 = vsel %vm1369, %v1832, %v1826
        %v1834 = vsel %vm1371, %v1833, %v1830
        %v1836 = vsel %vm1061, %v1834, 0
        %1838 = vmatpush.msra.mxu0 0.0
        %1839 = vmatpush.msra.mxu0 0.0
        %1840 = vmatpush.msra.mxu0 0.0
        %1841 = vmatpush.msra.mxu0 0.0
        %1842 = vmatpush.msra.mxu0 0.0
        %1843 = vmatpush.msra.mxu0 0.0
        %1844 = vmatpush.msra.mxu0 0.0
        %1845 = vmatpush.msra.mxu0 0.0
        %1846 = vmatpush.msra.mxu0 0.0
        %1847 = vmatpush.msra.mxu0 0.0
        %1848 = vmatpush.msra.mxu0 0.0
        %1849 = vmatpush.msra.mxu0 0.0
        %1850 = vmatpush.msra.mxu0 %v993
        %1851 = vmatpush.msra.mxu0 %v992
        %1852 = vmatpush.msra.mxu0 %v991
        %1853 = vmatpush.msra.mxu0 %v990
        %1854 = vmatmul.f32.gmra.mxu0 %v1836
        %v1855 = vpop.f32.mrf.mxu0
        %v1856 = vadd.f32 0.0, %v1855
        %1857 = vdwg.mxu0
        %v1858 = vadd.f32 %v1505, %v1856
        %v1859 = vadd.f32 %v1858, %v1398
        %v1860 = vsel %vm1020, %v1859, 0.0
        %1861 = vadd.xlane.f32.xlu0 %v1860
        %v1862 = vpop.xlane.xlu0 %1861
        %v1863 = vmul.f32 %v1862, %v1030
        %v1864 = vsub.f32 %v1859, %v1863
        %v1865 = vmul.f32 %v1864, %v1864
        %v1866 = vsel %vm1020, %v1865, 0.0
        %1867 = vadd.xlane.f32.xlu0 %v1866
        %v1868 = vpop.xlane.xlu0 %1867
        %v1869 = vmul.f32 %v1868, %v1030
        %v1870 = vadd.f32 %v1869, 1e-05
        %v1871 = vrsqrt.pop %v1870
        %v1872 = vmul.f32 %v1871, %v1870
        %v1873 = vmul.f32 %v1872, %v1871
        %v1874 = vmul.f32 0.5, %v1873
        %v1875 = vsub.f32 1.5, %v1874
        %v1876 = vmul.f32 %v1871, %v1875
        %vm1877 = vweird.f32 %v1870
        %vm1878 = vweird.f32 %v1871
        %vm1879 = vmor %vm1877, %vm1878
        %v1880 = vsel %vm1879, %v1871, %v1876
        %v1881 = vmul.f32 %v1864, %v1880
        %v1882 = vmul.f32 %v1881, %v1424
        %v1883 = vadd.f32 %v1882, %v1428
        %v1885 = vsel %vm1061, %v1883, 0
        %1887 = vmatpush.msra.mxu0 0.0
        %1888 = vmatpush.msra.mxu0 0.0
        %1889 = vmatpush.msra.mxu0 0.0
        %1890 = vmatpush.msra.mxu0 0.0
        %1891 = vmatpush.msra.mxu0 0.0
        %1892 = vmatpush.msra.mxu0 0.0
        %1893 = vmatpush.msra.mxu0 0.0
        %1894 = vmatpush.msra.mxu0 0.0
        %1895 = vmatpush.msra.mxu0 0.0
        %1896 = vmatpush.msra.mxu0 0.0
        %1897 = vmatpush.msra.mxu0 0.0
        %1898 = vmatpush.msra.mxu0 0.0
        %1899 = vmatpush.msra.mxu0 %v1000
        %1900 = vmatpush.msra.mxu0 %v999
        %1901 = vmatpush.msra.mxu0 %v998
        %1902 = vmatpush.msra.mxu0 %v997
        %1903 = vmatmul.f32.gmra.mxu0 %v1885
        %v1904 = vpop.f32.mrf.mxu0
        %v1905 = vadd.f32 %v1432, %v1904
        %1906 = vdwg.mxu0
        %v1907 = vmul.f32 %v1905, 1.702
        %v1908 = vxor.u32 %v1907, 2147483648
        %v1909 = vmul.f32 %v1908, 1.442695
        %v1910 = vpow.pop %v1909
        %v1911 = vadd.f32 %v1910, 1.0
        %v1912 = vrcp.pop %v1911
        %v1913 = vmul.f32 %v1911, %v1912
        %v1914 = vsub.f32 1.0, %v1913
        %v1915 = vmul.f32 %v1912, %v1914
        %v1916 = vadd.f32 %v1912, %v1915
        %vm1917 = vweird.f32 %v1911
        %vm1918 = vweird.f32 %v1912
        %vm1919 = vmor %vm1917, %vm1918
        %v1920 = vsel %vm1919, %v1912, %v1916
        %v1921 = vand.u32 2147483647, %v1911
        %vm1922 = vcmp.eq.f32.partialorder %v1921, 8.507059e+37
        %v1923 = vand.u32 %v1911, 2147483648
        %v1924 = vor.u32 1.1754944e-38, %v1923
        %v1925 = vsel %vm1922, %v1924, %v1920
        %v1926 = vmul.f32 1.0, %v1925
        %v1927 = vmul.f32 %v1905, %v1926
        %1928 = vmatpush.msra.mxu0 %v1017
        %1929 = vmatpush.msra.mxu0 %v1016
        %1930 = vmatpush.msra.mxu0 %v1015
        %1931 = vmatpush.msra.mxu0 %v1014
        %1932 = vmatpush.msra.mxu0 %v1013
        %1933 = vmatpush.msra.mxu0 %v1012
        %1934 = vmatpush.msra.mxu0 %v1011
        %1935 = vmatpush.msra.mxu0 %v1010
        %1936 = vmatpush.msra.mxu0 %v1009
        %1937 = vmatpush.msra.mxu0 %v1008
        %1938 = vmatpush.msra.mxu0 %v1007
        %1939 = vmatpush.msra.mxu0 %v1006
        %1940 = vmatpush.msra.mxu0 %v1005
        %1941 = vmatpush.msra.mxu0 %v1004
        %1942 = vmatpush.msra.mxu0 %v1003
        %1943 = vmatpush.msra.mxu0 %v1002
        %1944 = vmatmul.f32.gmra.mxu0 %v1927
        %v1945 = vpop.f32.mrf.mxu0
        %v1946 = vadd.f32 0.0, %v1945
        %1947 = vdwg.mxu0
        %v1948 = vadd.f32 %v1859, %v1946
        %v1949 = vadd.f32 %v1948, %v1500
        %1950 = vst.msk [vmem:[%s1504] sm:$0x1f] %vm1020, %v1949
        %p1951 = scmp.eq.s32.totalorder %s33, 11
        // Predicated region
        $region109: #{encode_image.1} parent=103 // pred_check
          %p1952 = pneg %p1951
        $region110: #{encode_image.1} parent=103 // pred_check_branch
          %1954 = sbr.rel (%p1952) target = $region112
        $region111: #{encode_image.1} parent=103 // pred_region
          %v1955 = vld [vmem:[%s18] sm:$0x1]
          %v1956 = vld [vmem:[%s19] sm:$0x1]
          %vm1957 = vcmask 253952
          %v1958 = vsel %vm1957, %v1502, 0.0
          %1959 = vadd.xlane.f32.xlu0 %v1958
          %v1960 = vpop.xlane.xlu0 %1959
          %v1961 = vmul.f32 %v1960, %v1030
          %v1962 = vsub.f32 %v1502, %v1961
          %v1963 = vmul.f32 %v1962, %v1962
          %v1964 = vsel %vm1957, %v1963, 0.0
          %1965 = vadd.xlane.f32.xlu0 %v1964
          %v1966 = vpop.xlane.xlu0 %1965
          %v1967 = vmul.f32 %v1966, %v1030
          %v1968 = vadd.f32 %v1967, 1e-05
          %v1969 = vrsqrt.pop %v1968
          %v1970 = vmul.f32 %v1969, %v1968
          %v1971 = vmul.f32 %v1970, %v1969
          %v1972 = vmul.f32 0.5, %v1971
          %v1973 = vsub.f32 1.5, %v1972
          %v1974 = vmul.f32 %v1969, %v1973
          %vm1975 = vweird.f32 %v1968
          %vm1976 = vweird.f32 %v1969
          %vm1977 = vmor %vm1975, %vm1976
          %v1978 = vsel %vm1977, %v1969, %v1974
          %v1979 = vmul.f32 %v1962, %v1978
          %v1980 = vmul.f32 %v1979, %v1955
          %v1981 = vadd.f32 %v1980, %v1956
          %v1982 = vld [vmem:[%s20] sm:$0xff]
          %v1983 = vld [vmem:[%s20 + $0x8] sm:$0xff]
          %v1984 = vld [vmem:[%s20 + $0x10] sm:$0xff]
          %v1985 = vld [vmem:[%s20 + $0x18] sm:$0xff]
          %v1987 = vsel %vm1061, %v1981, 0
          %1989 = vmatpush.msra.mxu0 0.0
          %1990 = vmatpush.msra.mxu0 0.0
          %1991 = vmatpush.msra.mxu0 0.0
          %1992 = vmatpush.msra.mxu0 0.0
          %1993 = vmatpush.msra.mxu0 0.0
          %1994 = vmatpush.msra.mxu0 0.0
          %1995 = vmatpush.msra.mxu0 0.0
          %1996 = vmatpush.msra.mxu0 0.0
          %1997 = vmatpush.msra.mxu0 0.0
          %1998 = vmatpush.msra.mxu0 0.0
          %1999 = vmatpush.msra.mxu0 0.0
          %2000 = vmatpush.msra.mxu0 0.0
          %2001 = vmatpush.msra.mxu0 %v1985
          %2002 = vmatpush.msra.mxu0 %v1984
          %2003 = vmatpush.msra.mxu0 %v1983
          %2004 = vmatpush.msra.mxu0 %v1982
          %2005 = vmatmul.f32.gmra.mxu0 %v1987
          %v2006 = vpop.f32.mrf.mxu0
          %v2007 = vadd.f32 0.0, %v2006
          %2008 = vdwg.mxu0
          %vm2009 = vcmask 122880
          %2010 = vst.msk [vmem:[#allocation3] sm:$0x1] %vm2009, %v2007
          %v2011 = vsel %vm1957, %v1949, 0.0
          %2012 = vadd.xlane.f32.xlu0 %v2011
          %v2013 = vpop.xlane.xlu0 %2012
          %v2014 = vmul.f32 %v2013, %v1030
          %v2015 = vsub.f32 %v1949, %v2014
          %v2016 = vmul.f32 %v2015, %v2015
          %v2017 = vsel %vm1957, %v2016, 0.0
          %2018 = vadd.xlane.f32.xlu0 %v2017
          %v2019 = vpop.xlane.xlu0 %2018
          %v2020 = vmul.f32 %v2019, %v1030
          %v2021 = vadd.f32 %v2020, 1e-05
          %v2022 = vrsqrt.pop %v2021
          %v2023 = vmul.f32 %v2022, %v2021
          %v2024 = vmul.f32 %v2023, %v2022
          %v2025 = vmul.f32 0.5, %v2024
          %v2026 = vsub.f32 1.5, %v2025
          %v2027 = vmul.f32 %v2022, %v2026
          %vm2028 = vweird.f32 %v2021
          %vm2029 = vweird.f32 %v2022
          %vm2030 = vmor %vm2028, %vm2029
          %v2031 = vsel %vm2030, %v2022, %v2027
          %v2032 = vmul.f32 %v2015, %v2031
          %v2033 = vmul.f32 %v2032, %v1955
          %v2034 = vadd.f32 %v2033, %v1956
          %v2035 = vld [vmem:[%s20] sm:$0xff]
          %v2036 = vld [vmem:[%s20 + $0x8] sm:$0xff]
          %v2037 = vld [vmem:[%s20 + $0x10] sm:$0xff]
          %v2038 = vld [vmem:[%s20 + $0x18] sm:$0xff]
          %v2040 = vsel %vm1061, %v2034, 0
          %2042 = vmatpush.msra.mxu0 0.0
          %2043 = vmatpush.msra.mxu0 0.0
          %2044 = vmatpush.msra.mxu0 0.0
          %2045 = vmatpush.msra.mxu0 0.0
          %2046 = vmatpush.msra.mxu0 0.0
          %2047 = vmatpush.msra.mxu0 0.0
          %2048 = vmatpush.msra.mxu0 0.0
          %2049 = vmatpush.msra.mxu0 0.0
          %2050 = vmatpush.msra.mxu0 0.0
          %2051 = vmatpush.msra.mxu0 0.0
          %2052 = vmatpush.msra.mxu0 0.0
          %2053 = vmatpush.msra.mxu0 0.0
          %2054 = vmatpush.msra.mxu0 %v2038
          %2055 = vmatpush.msra.mxu0 %v2037
          %2056 = vmatpush.msra.mxu0 %v2036
          %2057 = vmatpush.msra.mxu0 %v2035
          %2058 = vmatmul.f32.gmra.mxu0 %v2040
          %v2059 = vpop.f32.mrf.mxu0
          %v2060 = vadd.f32 0.0, %v2059
          %2061 = vdwg.mxu0
          %2062 = vst.msk [vmem:[#allocation3 + $0x1] sm:$0x1] %vm2009, %v2060
        $region112: #{encode_image.1} parent=103 // pred_fallthru
          _
        // Predicated region
        $region113: #{encode_image.1} parent=103 // pred_check
          %p2063 = pneg %p547
        $region114: #{encode_image.1} parent=103 // pred_check_branch
          %2065 = sbr.rel (%p2063) target = $region116
        $region115: #{encode_image.1} parent=103 // pred_region
          %2067 = vsyncadd [#allocation4], 0
          %s2069 = sshll.u32 [#allocation3], 4
          %s2070 = int_to_ptr.vmem [resolvable:$true] %s2069
          %s2071 = sshll.u32 %s21, 4
          %s2072 = int_to_ptr.hbm [resolvable:$true] %s2071
          %2074 = dma.vmem_to_hbm [thread:$0]  %s2070, 32, %s2072, [#allocation4]
        $region116: #{encode_image.1} parent=103 // pred_fallthru
          _
        // Predicated region
        $region117: #{encode_image.1} parent=103 // pred_check
          %p2075 = pneg %p547
        $region118: #{encode_image.1} parent=103 // pred_check_branch
          %2077 = sbr.rel (%p2075) target = $region120
        $region119: #{encode_image.1} parent=103 // pred_region
          %2079 = dma.done [#allocation4], 32
        $region120: #{encode_image.1} parent=103 // pred_fallthru
          _
      $region104: #{encode_image.1} parent=5 // pred_fallthru
        _
      %p2080 = scmp.le.s32.totalorder 2, %s28
      // Predicated region
      $region121: #{encode_image.1} parent=5 // pred_check
        %p2081 = pneg %p2080
      $region122: #{encode_image.1} parent=5 // pred_check_branch
        %2083 = sbr.rel (%p2081) target = $region124
      $region123: #{encode_image.1} parent=5 // pred_region
        %s2084 = ssub.s32 %s28, 2
      $region124: #{encode_image.1} parent=5 // pred_fallthru
        _
    $region6: #{encode_image.1} parent=1 // loop_footer
      %s32 = sadd.s32 1, %s28
    $region7: #{encode_image.1} parent=1 // loop_footer_branch
      %27 = sbr.rel target = $region3
    $region8: #{encode_image.1} parent=1 // loop_exit
      _
    %2085 = vsyncpa [#allocation4], 1
    %s2086 = scalar_lea.sflag [#allocation4], 1
    %2087 = vsyncpa %s2086, 1

</llo_original>
